<compile_context>
chip_gen: v7x
topology: tpu7x:2x2x1
jax: 0.10.0
libtpu: 0.0.40
codegen_flags: <defaults>
</compile_context>

<pallas_src>
import functools

import numpy as np
import jax
import jax.numpy as jnp
from jax.experimental import pallas as pl
from jax.experimental.pallas import tpu as pltpu


def _round_up_128(n):
    return ((n + 127) // 128) * 128


# ----------------------------------------------------------------------------
# Fused per-stream kernel: embedding -> L encoder layers -> attention pooling
# ----------------------------------------------------------------------------
def _stream_kernel(x_ref, mask_ref, wemb_ref, scale_ref, add_ref,
                   wqkv_ref, bqkv_ref, wout_ref, bout_ref,
                   ln1g_ref, ln1b_ref,
                   wff1_ref, bff1_ref, wff2_ref, bff2_ref,
                   ln2g_ref, ln2b_ref, wpool_ref,
                   o_ref, *, nhead, dh, d_true, n_layers, eps):
    D_pad = wemb_ref.shape[1]
    H = nhead * dh                       # == d_true
    inv_sqrt_dh = 1.0 / float(np.sqrt(dh))
    inv_d = 1.0 / float(d_true)

    # Lane mask: 1.0 on the true model-dim lanes, 0.0 on zero-pad lanes.
    lane = jax.lax.broadcasted_iota(jnp.int32, (1, D_pad), 1)
    dmask = (lane < d_true).astype(jnp.float32)

    def layer_norm(r, g, b):
        # Pad lanes of r are exactly zero, so sum over all lanes == sum over
        # the true lanes; divide by the true D and mask pad lanes for the var.
        mu = jnp.sum(r, axis=-1, keepdims=True) * inv_d
        c = (r - mu) * dmask
        var = jnp.sum(c * c, axis=-1, keepdims=True) * inv_d
        return c * jax.lax.rsqrt(var + eps) * g + b      # pad lanes stay 0

    mask = mask_ref[0]                   # (1, S) additive key-padding mask
    x = x_ref[0]                         # (S, Din_pad) f32

    # Embedding + folded (Linear bias, eval BatchNorm1d, positional encoding).
    h = jnp.dot(x.astype(jnp.bfloat16), wemb_ref[...],
                preferred_element_type=jnp.float32)
    h = h * scale_ref[...] + add_ref[...]                 # (S, D_pad)

    for l in range(n_layers):            # static unroll over layers
        # ---- self-attention: fused QKV projection ----
        hb = h.astype(jnp.bfloat16)
        qkv = jnp.dot(hb, wqkv_ref[l],
                      preferred_element_type=jnp.float32) + bqkv_ref[l]
        outs = []
        for hd in range(nhead):          # static unroll over heads
            q = qkv[:, hd * dh:(hd + 1) * dh].astype(jnp.bfloat16)
            k = qkv[:, H + hd * dh:H + (hd + 1) * dh].astype(jnp.bfloat16)
            v = qkv[:, 2 * H + hd * dh:2 * H + (hd + 1) * dh].astype(jnp.bfloat16)
            # scores = q @ k^T without materialising a transpose.
            s = jax.lax.dot_general(q, k, (((1,), (1,)), ((), ())),
                                    preferred_element_type=jnp.float32)
            s = s * inv_sqrt_dh + mask
            m = jnp.max(s, axis=-1, keepdims=True)
            p = jnp.exp(s - m)                            # f32 statistics
            denom = jnp.sum(p, axis=-1, keepdims=True)
            a = p * pl.reciprocal(denom, approx=True)
            outs.append(jnp.dot(a.astype(jnp.bfloat16), v,
                                preferred_element_type=jnp.float32))  # (S, dh)
        o_cat = jnp.concatenate(outs, axis=-1)            # (S, H)
        attn = jnp.dot(o_cat.astype(jnp.bfloat16), wout_ref[l],
                       preferred_element_type=jnp.float32) + bout_ref[l]
        h = layer_norm(h + attn, ln1g_ref[l], ln1b_ref[l])

        # ---- feed-forward ----
        f = jnp.dot(h.astype(jnp.bfloat16), wff1_ref[l],
                    preferred_element_type=jnp.float32) + bff1_ref[l]
        f = jnp.maximum(f, 0.0)
        y = jnp.dot(f.astype(jnp.bfloat16), wff2_ref[l],
                    preferred_element_type=jnp.float32) + bff2_ref[l]
        h = layer_norm(h + y, ln2g_ref[l], ln2b_ref[l])

    # ---- attention pooling (Linear(D->1) as a VPU reduction; its bias is
    # constant along the softmax axis and cancels; PyTorch pools over all
    # positions including key-padded ones, so no mask here). ----
    scores = jnp.sum(h * wpool_ref[...], axis=-1, keepdims=True)   # (S, 1)
    m = jnp.max(scores, axis=0, keepdims=True)
    p = jnp.exp(scores - m)
    denom = jnp.sum(p, axis=0, keepdims=True)
    w = p * pl.reciprocal(denom, approx=True)
    o_ref[0] = jnp.sum(h * w, axis=0, keepdims=True).astype(o_ref.dtype)


def fused_stream(x_pad, mask_add, add, sp):
    """x_pad: (B, S, Din_pad) f32; mask_add: (B, 1, S) f32; add: (S, D_pad)."""
    B, S, Din_pad = x_pad.shape
    D_pad = sp["wemb"].shape[1]
    L = sp["wqkv"].shape[0]
    d_true = sp["d_true"]
    nhead = sp["nhead"]
    dh = d_true // nhead
    H = d_true
    Dff_pad = sp["wff1"].shape[2]

    kernel = functools.partial(_stream_kernel, nhead=nhead, dh=dh,
                               d_true=d_true, n_layers=L, eps=1e-5)

    args = (x_pad, mask_add, sp["wemb"], sp["scale"], add,
            sp["wqkv"], sp["bqkv"], sp["wout"], sp["bout"],
            sp["ln1_g"], sp["ln1_b"],
            sp["wff1"], sp["bff1"], sp["wff2"], sp["bff2"],
            sp["ln2_g"], sp["ln2_b"], sp["wpool"])

    flops = 2 * B * S * (Din_pad * D_pad
                         + L * (D_pad * 3 * H + H * D_pad + 2 * S * H
                                + 2 * D_pad * Dff_pad))
    bytes_accessed = int(sum(int(a.size) * a.dtype.itemsize for a in args)
                         + B * D_pad * 4)
    cost = pl.CostEstimate(flops=int(flops),
                           transcendentals=int(B * L * nhead * S * S + B * S),
                           bytes_accessed=bytes_accessed)

    out = pl.pallas_call(
        kernel,
        out_shape=jax.ShapeDtypeStruct((B, 1, D_pad), jnp.float32),
        grid=(B,),
        in_specs=[
            pl.BlockSpec((1, S, Din_pad), lambda b: (b, 0, 0)),
            pl.BlockSpec((1, 1, S), lambda b: (b, 0, 0)),
            pl.BlockSpec((Din_pad, D_pad), lambda b: (0, 0)),
            pl.BlockSpec((1, D_pad), lambda b: (0, 0)),
            pl.BlockSpec((S, D_pad), lambda b: (0, 0)),
            pl.BlockSpec((L, D_pad, 3 * H), lambda b: (0, 0, 0)),
            pl.BlockSpec((L, 1, 3 * H), lambda b: (0, 0, 0)),
            pl.BlockSpec((L, H, D_pad), lambda b: (0, 0, 0)),
            pl.BlockSpec((L, 1, D_pad), lambda b: (0, 0, 0)),
            pl.BlockSpec((L, 1, D_pad), lambda b: (0, 0, 0)),
            pl.BlockSpec((L, 1, D_pad), lambda b: (0, 0, 0)),
            pl.BlockSpec((L, D_pad, Dff_pad), lambda b: (0, 0, 0)),
            pl.BlockSpec((L, 1, Dff_pad), lambda b: (0, 0, 0)),
            pl.BlockSpec((L, Dff_pad, D_pad), lambda b: (0, 0, 0)),
            pl.BlockSpec((L, 1, D_pad), lambda b: (0, 0, 0)),
            pl.BlockSpec((L, 1, D_pad), lambda b: (0, 0, 0)),
            pl.BlockSpec((L, 1, D_pad), lambda b: (0, 0, 0)),
            pl.BlockSpec((1, D_pad), lambda b: (0, 0)),
        ],
        out_specs=pl.BlockSpec((1, 1, D_pad), lambda b: (b, 0, 0)),
        compiler_params=pltpu.CompilerParams(
            dimension_semantics=("parallel",)),   # 2x on v7x's 2 TCs
        cost_estimate=cost,
    )(*args)
    return out.reshape(B, D_pad)


# ----------------------------------------------------------------------------
# Model glue (plain JAX only for tiny padding / mask / final-fc reductions)
# ----------------------------------------------------------------------------
def stream_forward(x, key_padding_mask, sp):
    B, S, Din = x.shape
    Din_pad, D_pad = sp["wemb"].shape
    if Din_pad > Din:
        x = jnp.pad(x, ((0, 0), (0, 0), (0, Din_pad - Din)))
    # Additive key padding mask (True == padded). -1e30 keeps a fully-masked
    # row finite (uniform attention instead of PyTorch's NaN; inference-OK).
    mask_add = jnp.where(key_padding_mask, -1e30, 0.0).astype(
        jnp.float32).reshape(B, 1, S)
    add = sp["shift"] + sp["pe"][:S]                   # (S, D_pad), tiny
    return fused_stream(x, mask_add, add, sp)          # (B, D_pad)


def transformer_classifier_forward(params, src, notes, src_mask, notes_mask):
    src_pooled = stream_forward(src, src_mask, params["src_stream"])
    note_pooled = stream_forward(notes, notes_mask, params["note_stream"])
    cat = jnp.concatenate([src_pooled, note_pooled], axis=1)
    # Final Linear(D1+D2 -> 1): lane-width-1 matmul is pure overhead; plain
    # reduction left to XLA (pad lanes of `cat` and fc_w are zero).
    return jnp.sum(cat * params["fc_w"][None, :], axis=-1) + params["fc_b"]


# ----------------------------------------------------------------------------
# Deterministic parameter construction (padded, lane-dense layouts)
# ----------------------------------------------------------------------------
def positional_encoding(d_model, max_len):
    position = np.arange(max_len, dtype=np.float32)[:, None]
    div_term = np.exp(np.arange(0, d_model, 2, dtype=np.float32)
                      * (-np.log(10000.0) / d_model))
    pe = np.zeros((max_len, d_model), np.float32)
    pe[:, 0::2] = np.sin(position * div_term)
    if d_model % 2 == 0:
        pe[:, 1::2] = np.cos(position * div_term)
    else:
        pe[:, 1::2] = np.cos(position * div_term[:-1])
    return jnp.asarray(pe)


def _uniform(key, shape, bound):
    return jax.random.uniform(key, shape, jnp.float32, -bound, bound)


def _pad2(a, rows, cols):
    return jnp.zeros((rows, cols), a.dtype).at[:a.shape[0], :a.shape[1]].set(a)


def init_stream_params(key, din, d, nhead, n_layers, max_len):
    d_pad = _round_up_128(d)
    din_pad = _round_up_128(din)
    dff = 4 * d
    dff_pad = _round_up_128(dff)
    keys = iter(jax.random.split(key, 4 + 8 * n_layers))

    bd_in = 1.0 / np.sqrt(din)
    emb_w = _uniform(next(keys), (din, d), bd_in)
    emb_b = _uniform(next(keys), (d,), bd_in)

    # eval-mode BatchNorm1d (running stats) folded with the Linear bias into a
    # per-feature scale/shift applied after PE is added to the shift.
    bn_gamma = jnp.ones((d,), jnp.float32)
    bn_beta = jnp.zeros((d,), jnp.float32)
    bn_mean = jnp.zeros((d,), jnp.float32)
    bn_var = jnp.ones((d,), jnp.float32)
    inv_std = jax.lax.rsqrt(bn_var + 1e-5)
    scale_t = bn_gamma * inv_std
    shift_t = (emb_b - bn_mean) * scale_t + bn_beta

    scale = jnp.zeros((1, d_pad), jnp.float32).at[0, :d].set(scale_t)
    shift = jnp.zeros((1, d_pad), jnp.float32).at[0, :d].set(shift_t)
    pe = jnp.zeros((max_len, d_pad), jnp.float32).at[:, :d].set(
        positional_encoding(d, max_len))

    bd = 1.0 / np.sqrt(d)
    bff = 1.0 / np.sqrt(dff)
    stacks = {k: [] for k in ("wqkv", "bqkv", "wout", "bout", "ln1_g", "ln1_b",
                              "wff1", "bff1", "wff2", "bff2", "ln2_g", "ln2_b")}
    ones_d = jnp.zeros((1, d_pad), jnp.float32).at[0, :d].set(1.0)
    zeros_d = jnp.zeros((1, d_pad), jnp.float32)
    for _ in range(n_layers):
        # Fused QKV weight, columns ordered [Q heads | K heads | V heads].
        stacks["wqkv"].append(_pad2(_uniform(next(keys), (d, 3 * d), bd),
                                    d_pad, 3 * d).astype(jnp.bfloat16))
        stacks["bqkv"].append(_uniform(next(keys), (1, 3 * d), bd))
        stacks["wout"].append(_pad2(_uniform(next(keys), (d, d), bd),
                                    d, d_pad).astype(jnp.bfloat16))
        stacks["bout"].append(_pad2(_uniform(next(keys), (1, d), bd), 1, d_pad))
        stacks["wff1"].append(_pad2(_uniform(next(keys), (d, dff), bd),
                                    d_pad, dff_pad).astype(jnp.bfloat16))
        stacks["bff1"].append(_pad2(_uniform(next(keys), (1, dff), bd),
                                    1, dff_pad))
        stacks["wff2"].append(_pad2(_uniform(next(keys), (dff, d), bff),
                                    dff_pad, d_pad).astype(jnp.bfloat16))
        stacks["bff2"].append(_pad2(_uniform(next(keys), (1, d), bff), 1, d_pad))
        stacks["ln1_g"].append(ones_d)
        stacks["ln1_b"].append(zeros_d)
        stacks["ln2_g"].append(ones_d)
        stacks["ln2_b"].append(zeros_d)
    stacked = {k: jnp.stack(v) for k, v in stacks.items()}

    wpool = jnp.zeros((1, d_pad), jnp.float32).at[0, :d].set(
        _uniform(next(keys), (d,), 1.0 / np.sqrt(d)))
    # pooling Linear bias is dropped: it cancels inside the softmax.

    return dict(wemb=_pad2(emb_w, din_pad, d_pad).astype(jnp.bfloat16),
                scale=scale, shift=shift, pe=pe, wpool=wpool,
                d_true=d, nhead=nhead, **stacked)


def init_params(key, input_dim, note_dim, src_d, note_d,
                src_nhead, note_nhead, src_layers, note_layers, max_len):
    k_src, k_note, k_fcw, k_fcb = jax.random.split(key, 4)
    src_stream = init_stream_params(k_src, input_dim, src_d, src_nhead,
                                    src_layers, max_len)
    note_stream = init_stream_params(k_note, note_dim, note_d, note_nhead,
                                     note_layers, max_len)
    src_dpad = _round_up_128(src_d)
    note_dpad = _round_up_128(note_d)
    bound = 1.0 / np.sqrt(src_d + note_d)
    fc_w_t = _uniform(k_fcw, (src_d + note_d,), bound)
    fc_w = (jnp.zeros((src_dpad + note_dpad,), jnp.float32)
            .at[:src_d].set(fc_w_t[:src_d])
            .at[src_dpad:src_dpad + note_d].set(fc_w_t[src_d:]))
    fc_b = _uniform(k_fcb, (), bound)
    return dict(src_stream=src_stream, note_stream=note_stream,
                fc_w=fc_w, fc_b=fc_b)


# ----------------------------------------------------------------------------
if __name__ == "__main__":
    # Small shapes consistent with the module defaults.
    B, S_SRC, S_NOTE = 2, 8, 6
    INPUT_DIM, NOTE_DIM = 100, 1024
    SRC_D, NOTE_D = 48, 96
    SRC_NHEAD = NOTE_NHEAD = 3
    SRC_LAYERS, NOTE_LAYERS = 2, 3
    MAX_LEN = 64   # only the first S rows of the PE table are used

    root = jax.random.PRNGKey(0)
    kp, k_src, k_notes = jax.random.split(root, 3)

    params = init_params(kp, INPUT_DIM, NOTE_DIM, SRC_D, NOTE_D,
                         SRC_NHEAD, NOTE_NHEAD, SRC_LAYERS, NOTE_LAYERS,
                         MAX_LEN)

    src = jax.random.normal(k_src, (B, S_SRC, INPUT_DIM), jnp.float32)
    notes = jax.random.normal(k_notes, (B, S_NOTE, NOTE_DIM), jnp.float32)
    # key padding masks: True == padded position (ignored by attention)
    src_key_padding_mask = jnp.zeros((B, S_SRC), bool).at[1, -2:].set(True)
    notes_key_padding_mask = jnp.zeros((B, S_NOTE), bool).at[1, -1:].set(True)

    logits = transformer_classifier_forward(params, src, notes,
                                            src_key_padding_mask,
                                            notes_key_padding_mask)
    logits = jax.block_until_ready(logits)

    assert logits.shape == (B,), logits.shape
    assert bool(jnp.all(jnp.isfinite(logits)))
    print("KERNEL_OK")
</pallas_src>

<mosaic_0001>
module attributes {stable_mosaic.version = 11 : i64} {
  func.func @_stream_kernel(%arg0: i32, %arg1: memref<1x8x128xf32, #tpu.memory_space<vmem>>, %arg2: memref<1x1x8xf32, #tpu.memory_space<vmem>>, %arg3: memref<128x128xbf16, #tpu.memory_space<vmem>>, %arg4: memref<1x128xf32, #tpu.memory_space<vmem>>, %arg5: memref<8x128xf32, #tpu.memory_space<vmem>>, %arg6: memref<2x128x144xbf16, #tpu.memory_space<vmem>>, %arg7: memref<2x1x144xf32, #tpu.memory_space<vmem>>, %arg8: memref<2x48x128xbf16, #tpu.memory_space<vmem>>, %arg9: memref<2x1x128xf32, #tpu.memory_space<vmem>>, %arg10: memref<2x1x128xf32, #tpu.memory_space<vmem>>, %arg11: memref<2x1x128xf32, #tpu.memory_space<vmem>>, %arg12: memref<2x128x256xbf16, #tpu.memory_space<vmem>>, %arg13: memref<2x1x256xf32, #tpu.memory_space<vmem>>, %arg14: memref<2x256x128xbf16, #tpu.memory_space<vmem>>, %arg15: memref<2x1x128xf32, #tpu.memory_space<vmem>>, %arg16: memref<2x1x128xf32, #tpu.memory_space<vmem>>, %arg17: memref<2x1x128xf32, #tpu.memory_space<vmem>>, %arg18: memref<1x128xf32, #tpu.memory_space<vmem>>, %arg19: memref<1x1x128xf32, #tpu.memory_space<vmem>>) attributes {dimension_semantics = [#tpu.dimension_semantics<parallel>], iteration_bounds = array<i64: 2>, scalar_prefetch = 0 : i64, scratch_operands = 0 : i64, tpu.core_type = #tpu.core_type<tc>, window_params = [{transform_indices = @transform_0, window_bounds = array<i64: 1, 8, 128>}, {transform_indices = @transform_1, window_bounds = array<i64: 1, 1, 8>}, {pipeline_mode = #tpu.pipeline_mode<synchronous>, transform_indices = @transform_2, window_bounds = array<i64: 128, 128>}, {pipeline_mode = #tpu.pipeline_mode<synchronous>, transform_indices = @transform_3, window_bounds = array<i64: 1, 128>}, {pipeline_mode = #tpu.pipeline_mode<synchronous>, transform_indices = @transform_4, window_bounds = array<i64: 8, 128>}, {pipeline_mode = #tpu.pipeline_mode<synchronous>, transform_indices = @transform_5, window_bounds = array<i64: 2, 128, 144>}, {pipeline_mode = #tpu.pipeline_mode<synchronous>, transform_indices = @transform_6, window_bounds = array<i64: 2, 1, 144>}, {pipeline_mode = #tpu.pipeline_mode<synchronous>, transform_indices = @transform_7, window_bounds = array<i64: 2, 48, 128>}, {pipeline_mode = #tpu.pipeline_mode<synchronous>, transform_indices = @transform_8, window_bounds = array<i64: 2, 1, 128>}, {pipeline_mode = #tpu.pipeline_mode<synchronous>, transform_indices = @transform_9, window_bounds = array<i64: 2, 1, 128>}, {pipeline_mode = #tpu.pipeline_mode<synchronous>, transform_indices = @transform_10, window_bounds = array<i64: 2, 1, 128>}, {pipeline_mode = #tpu.pipeline_mode<synchronous>, transform_indices = @transform_11, window_bounds = array<i64: 2, 128, 256>}, {pipeline_mode = #tpu.pipeline_mode<synchronous>, transform_indices = @transform_12, window_bounds = array<i64: 2, 1, 256>}, {pipeline_mode = #tpu.pipeline_mode<synchronous>, transform_indices = @transform_13, window_bounds = array<i64: 2, 256, 128>}, {pipeline_mode = #tpu.pipeline_mode<synchronous>, transform_indices = @transform_14, window_bounds = array<i64: 2, 1, 128>}, {pipeline_mode = #tpu.pipeline_mode<synchronous>, transform_indices = @transform_15, window_bounds = array<i64: 2, 1, 128>}, {pipeline_mode = #tpu.pipeline_mode<synchronous>, transform_indices = @transform_16, window_bounds = array<i64: 2, 1, 128>}, {pipeline_mode = #tpu.pipeline_mode<synchronous>, transform_indices = @transform_17, window_bounds = array<i64: 1, 128>}, {transform_indices = @transform_18, window_bounds = array<i64: 1, 1, 128>}]} {
    %0 = tpu.iota {dimensions = array<i32: 1>} : vector<1x128xi32>
    %c48_i32 = arith.constant 48 : i32
    %1 = vector.broadcast %c48_i32 : i32 to vector<1x128xi32>
    %2 = arith.cmpi slt, %0, %1 : vector<1x128xi32>
    %3 = arith.extui %2 : vector<1x128xi1> to vector<1x128xi32>
    %4 = arith.sitofp %3 : vector<1x128xi32> to vector<1x128xf32>
    %c0 = arith.constant 0 : index
    %c0_0 = arith.constant 0 : index
    %c0_1 = arith.constant 0 : index
    %5 = vector.load %arg2[%c0, %c0_0, %c0_1] : memref<1x1x8xf32, #tpu.memory_space<vmem>>, vector<1x1x8xf32>
    %6 = vector.shape_cast %5 : vector<1x1x8xf32> to vector<1x8xf32>
    %c0_2 = arith.constant 0 : index
    %c0_3 = arith.constant 0 : index
    %c0_4 = arith.constant 0 : index
    %7 = vector.load %arg1[%c0_2, %c0_3, %c0_4] : memref<1x8x128xf32, #tpu.memory_space<vmem>>, vector<1x8x128xf32>
    %8 = vector.shape_cast %7 : vector<1x8x128xf32> to vector<8x128xf32>
    %9 = arith.truncf %8 : vector<8x128xf32> to vector<8x128xbf16>
    %c0_5 = arith.constant 0 : index
    %c0_6 = arith.constant 0 : index
    %10 = vector.load %arg3[%c0_5, %c0_6] : memref<128x128xbf16, #tpu.memory_space<vmem>>, vector<128x128xbf16>
    %cst = arith.constant dense<0.000000e+00> : vector<8x128xf32>
    %11 = tpu.matmul %9, %10, %cst {dimension_numbers = #tpu.dot_dimension_numbers<[1], [0], [0], [1], [0, 0, 1, 1], [], []>} : vector<8x128xbf16>, vector<128x128xbf16>, vector<8x128xf32> -> vector<8x128xf32>
    %c0_7 = arith.constant 0 : index
    %c0_8 = arith.constant 0 : index
    %12 = vector.load %arg4[%c0_7, %c0_8] : memref<1x128xf32, #tpu.memory_space<vmem>>, vector<1x128xf32>
    %13 = vector.broadcast %12 : vector<1x128xf32> to vector<8x128xf32>
    %14 = arith.mulf %11, %13 : vector<8x128xf32>
    %c0_9 = arith.constant 0 : index
    %c0_10 = arith.constant 0 : index
    %15 = vector.load %arg5[%c0_9, %c0_10] : memref<8x128xf32, #tpu.memory_space<vmem>>, vector<8x128xf32>
    %16 = arith.addf %14, %15 : vector<8x128xf32>
    %17 = arith.truncf %16 : vector<8x128xf32> to vector<8x128xbf16>
    %c0_11 = arith.constant 0 : index
    %c0_12 = arith.constant 0 : index
    %c0_13 = arith.constant 0 : index
    %18 = vector.load %arg6[%c0_11, %c0_12, %c0_13] : memref<2x128x144xbf16, #tpu.memory_space<vmem>>, vector<1x128x144xbf16>
    %19 = vector.shape_cast %18 : vector<1x128x144xbf16> to vector<128x144xbf16>
    %cst_14 = arith.constant dense<0.000000e+00> : vector<8x144xf32>
    %20 = tpu.matmul %17, %19, %cst_14 {dimension_numbers = #tpu.dot_dimension_numbers<[1], [0], [0], [1], [0, 0, 1, 1], [], []>} : vector<8x128xbf16>, vector<128x144xbf16>, vector<8x144xf32> -> vector<8x144xf32>
    %c0_15 = arith.constant 0 : index
    %c0_16 = arith.constant 0 : index
    %c0_17 = arith.constant 0 : index
    %21 = vector.load %arg7[%c0_15, %c0_16, %c0_17] : memref<2x1x144xf32, #tpu.memory_space<vmem>>, vector<1x1x144xf32>
    %22 = vector.shape_cast %21 : vector<1x1x144xf32> to vector<1x144xf32>
    %23 = vector.broadcast %22 : vector<1x144xf32> to vector<8x144xf32>
    %24 = arith.addf %20, %23 : vector<8x144xf32>
    %25 = vector.extract_strided_slice %24 {offsets = [0, 0], sizes = [8, 16], strides = [1, 1]} : vector<8x144xf32> to vector<8x16xf32>
    %26 = arith.truncf %25 : vector<8x16xf32> to vector<8x16xbf16>
    %27 = vector.extract_strided_slice %24 {offsets = [0, 48], sizes = [8, 16], strides = [1, 1]} : vector<8x144xf32> to vector<8x16xf32>
    %28 = arith.truncf %27 : vector<8x16xf32> to vector<8x16xbf16>
    %29 = vector.extract_strided_slice %24 {offsets = [0, 96], sizes = [8, 16], strides = [1, 1]} : vector<8x144xf32> to vector<8x16xf32>
    %30 = arith.truncf %29 : vector<8x16xf32> to vector<8x16xbf16>
    %cst_18 = arith.constant dense<0.000000e+00> : vector<8x8xf32>
    %31 = tpu.matmul %26, %28, %cst_18 {dimension_numbers = #tpu.dot_dimension_numbers<[1], [1], [0], [0], [0, 0, 1, 0], [], []>} : vector<8x16xbf16>, vector<8x16xbf16>, vector<8x8xf32> -> vector<8x8xf32>
    %cst_19 = arith.constant 2.500000e-01 : f32
    %32 = vector.broadcast %cst_19 : f32 to vector<8x8xf32>
    %33 = arith.mulf %31, %32 : vector<8x8xf32>
    %34 = vector.broadcast %6 : vector<1x8xf32> to vector<8x8xf32>
    %35 = arith.addf %33, %34 : vector<8x8xf32>
    %cst_20 = arith.constant dense<0xFF800000> : vector<8xf32>
    %36 = vector.multi_reduction <maximumf>, %35, %cst_20 [1] : vector<8x8xf32> to vector<8xf32>
    %37 = vector.shape_cast %36 : vector<8xf32> to vector<8x1xf32>
    %38 = vector.broadcast %37 : vector<8x1xf32> to vector<8x8xf32>
    %39 = arith.subf %35, %38 : vector<8x8xf32>
    %40 = math.exp %39 : vector<8x8xf32>
    %cst_21 = arith.constant dense<0.000000e+00> : vector<8xf32>
    %41 = vector.multi_reduction <add>, %40, %cst_21 [1] : vector<8x8xf32> to vector<8xf32>
    %42 = vector.shape_cast %41 : vector<8xf32> to vector<8x1xf32>
    %43 = tpu.reciprocal %42 {approx = true} : vector<8x1xf32> -> vector<8x1xf32>
    %44 = vector.broadcast %43 : vector<8x1xf32> to vector<8x8xf32>
    %45 = arith.mulf %40, %44 : vector<8x8xf32>
    %46 = arith.truncf %45 : vector<8x8xf32> to vector<8x8xbf16>
    %cst_22 = arith.constant dense<0.000000e+00> : vector<8x16xf32>
    %47 = tpu.matmul %46, %30, %cst_22 {dimension_numbers = #tpu.dot_dimension_numbers<[1], [0], [0], [1], [0, 0, 1, 1], [], []>} : vector<8x8xbf16>, vector<8x16xbf16>, vector<8x16xf32> -> vector<8x16xf32>
    %48 = vector.extract_strided_slice %24 {offsets = [0, 16], sizes = [8, 16], strides = [1, 1]} : vector<8x144xf32> to vector<8x16xf32>
    %49 = arith.truncf %48 : vector<8x16xf32> to vector<8x16xbf16>
    %50 = vector.extract_strided_slice %24 {offsets = [0, 64], sizes = [8, 16], strides = [1, 1]} : vector<8x144xf32> to vector<8x16xf32>
    %51 = arith.truncf %50 : vector<8x16xf32> to vector<8x16xbf16>
    %52 = vector.extract_strided_slice %24 {offsets = [0, 112], sizes = [8, 16], strides = [1, 1]} : vector<8x144xf32> to vector<8x16xf32>
    %53 = arith.truncf %52 : vector<8x16xf32> to vector<8x16xbf16>
    %cst_23 = arith.constant dense<0.000000e+00> : vector<8x8xf32>
    %54 = tpu.matmul %49, %51, %cst_23 {dimension_numbers = #tpu.dot_dimension_numbers<[1], [1], [0], [0], [0, 0, 1, 0], [], []>} : vector<8x16xbf16>, vector<8x16xbf16>, vector<8x8xf32> -> vector<8x8xf32>
    %cst_24 = arith.constant 2.500000e-01 : f32
    %55 = vector.broadcast %cst_24 : f32 to vector<8x8xf32>
    %56 = arith.mulf %54, %55 : vector<8x8xf32>
    %57 = vector.broadcast %6 : vector<1x8xf32> to vector<8x8xf32>
    %58 = arith.addf %56, %57 : vector<8x8xf32>
    %cst_25 = arith.constant dense<0xFF800000> : vector<8xf32>
    %59 = vector.multi_reduction <maximumf>, %58, %cst_25 [1] : vector<8x8xf32> to vector<8xf32>
    %60 = vector.shape_cast %59 : vector<8xf32> to vector<8x1xf32>
    %61 = vector.broadcast %60 : vector<8x1xf32> to vector<8x8xf32>
    %62 = arith.subf %58, %61 : vector<8x8xf32>
    %63 = math.exp %62 : vector<8x8xf32>
    %cst_26 = arith.constant dense<0.000000e+00> : vector<8xf32>
    %64 = vector.multi_reduction <add>, %63, %cst_26 [1] : vector<8x8xf32> to vector<8xf32>
    %65 = vector.shape_cast %64 : vector<8xf32> to vector<8x1xf32>
    %66 = tpu.reciprocal %65 {approx = true} : vector<8x1xf32> -> vector<8x1xf32>
    %67 = vector.broadcast %66 : vector<8x1xf32> to vector<8x8xf32>
    %68 = arith.mulf %63, %67 : vector<8x8xf32>
    %69 = arith.truncf %68 : vector<8x8xf32> to vector<8x8xbf16>
    %cst_27 = arith.constant dense<0.000000e+00> : vector<8x16xf32>
    %70 = tpu.matmul %69, %53, %cst_27 {dimension_numbers = #tpu.dot_dimension_numbers<[1], [0], [0], [1], [0, 0, 1, 1], [], []>} : vector<8x8xbf16>, vector<8x16xbf16>, vector<8x16xf32> -> vector<8x16xf32>
    %71 = vector.extract_strided_slice %24 {offsets = [0, 32], sizes = [8, 16], strides = [1, 1]} : vector<8x144xf32> to vector<8x16xf32>
    %72 = arith.truncf %71 : vector<8x16xf32> to vector<8x16xbf16>
    %73 = vector.extract_strided_slice %24 {offsets = [0, 80], sizes = [8, 16], strides = [1, 1]} : vector<8x144xf32> to vector<8x16xf32>
    %74 = arith.truncf %73 : vector<8x16xf32> to vector<8x16xbf16>
    %75 = vector.extract_strided_slice %24 {offsets = [0, 128], sizes = [8, 16], strides = [1, 1]} : vector<8x144xf32> to vector<8x16xf32>
    %76 = arith.truncf %75 : vector<8x16xf32> to vector<8x16xbf16>
    %cst_28 = arith.constant dense<0.000000e+00> : vector<8x8xf32>
    %77 = tpu.matmul %72, %74, %cst_28 {dimension_numbers = #tpu.dot_dimension_numbers<[1], [1], [0], [0], [0, 0, 1, 0], [], []>} : vector<8x16xbf16>, vector<8x16xbf16>, vector<8x8xf32> -> vector<8x8xf32>
    %cst_29 = arith.constant 2.500000e-01 : f32
    %78 = vector.broadcast %cst_29 : f32 to vector<8x8xf32>
    %79 = arith.mulf %77, %78 : vector<8x8xf32>
    %80 = vector.broadcast %6 : vector<1x8xf32> to vector<8x8xf32>
    %81 = arith.addf %79, %80 : vector<8x8xf32>
    %cst_30 = arith.constant dense<0xFF800000> : vector<8xf32>
    %82 = vector.multi_reduction <maximumf>, %81, %cst_30 [1] : vector<8x8xf32> to vector<8xf32>
    %83 = vector.shape_cast %82 : vector<8xf32> to vector<8x1xf32>
    %84 = vector.broadcast %83 : vector<8x1xf32> to vector<8x8xf32>
    %85 = arith.subf %81, %84 : vector<8x8xf32>
    %86 = math.exp %85 : vector<8x8xf32>
    %cst_31 = arith.constant dense<0.000000e+00> : vector<8xf32>
    %87 = vector.multi_reduction <add>, %86, %cst_31 [1] : vector<8x8xf32> to vector<8xf32>
    %88 = vector.shape_cast %87 : vector<8xf32> to vector<8x1xf32>
    %89 = tpu.reciprocal %88 {approx = true} : vector<8x1xf32> -> vector<8x1xf32>
    %90 = vector.broadcast %89 : vector<8x1xf32> to vector<8x8xf32>
    %91 = arith.mulf %86, %90 : vector<8x8xf32>
    %92 = arith.truncf %91 : vector<8x8xf32> to vector<8x8xbf16>
    %cst_32 = arith.constant dense<0.000000e+00> : vector<8x16xf32>
    %93 = tpu.matmul %92, %76, %cst_32 {dimension_numbers = #tpu.dot_dimension_numbers<[1], [0], [0], [1], [0, 0, 1, 1], [], []>} : vector<8x8xbf16>, vector<8x16xbf16>, vector<8x16xf32> -> vector<8x16xf32>
    %94 = tpu.concatenate %47, %70, %93 in 1 : vector<8x16xf32>, vector<8x16xf32>, vector<8x16xf32> -> vector<8x48xf32>
    %95 = arith.truncf %94 : vector<8x48xf32> to vector<8x48xbf16>
    %c0_33 = arith.constant 0 : index
    %c0_34 = arith.constant 0 : index
    %c0_35 = arith.constant 0 : index
    %96 = vector.load %arg8[%c0_33, %c0_34, %c0_35] : memref<2x48x128xbf16, #tpu.memory_space<vmem>>, vector<1x48x128xbf16>
    %97 = vector.shape_cast %96 : vector<1x48x128xbf16> to vector<48x128xbf16>
    %cst_36 = arith.constant dense<0.000000e+00> : vector<8x128xf32>
    %98 = tpu.matmul %95, %97, %cst_36 {dimension_numbers = #tpu.dot_dimension_numbers<[1], [0], [0], [1], [0, 0, 1, 1], [], []>} : vector<8x48xbf16>, vector<48x128xbf16>, vector<8x128xf32> -> vector<8x128xf32>
    %c0_37 = arith.constant 0 : index
    %c0_38 = arith.constant 0 : index
    %c0_39 = arith.constant 0 : index
    %99 = vector.load %arg9[%c0_37, %c0_38, %c0_39] : memref<2x1x128xf32, #tpu.memory_space<vmem>>, vector<1x1x128xf32>
    %100 = vector.shape_cast %99 : vector<1x1x128xf32> to vector<1x128xf32>
    %101 = vector.broadcast %100 : vector<1x128xf32> to vector<8x128xf32>
    %102 = arith.addf %98, %101 : vector<8x128xf32>
    %103 = arith.addf %16, %102 : vector<8x128xf32>
    %c0_40 = arith.constant 0 : index
    %c0_41 = arith.constant 0 : index
    %c0_42 = arith.constant 0 : index
    %104 = vector.load %arg10[%c0_40, %c0_41, %c0_42] : memref<2x1x128xf32, #tpu.memory_space<vmem>>, vector<1x1x128xf32>
    %105 = vector.shape_cast %104 : vector<1x1x128xf32> to vector<1x128xf32>
    %c0_43 = arith.constant 0 : index
    %c0_44 = arith.constant 0 : index
    %c0_45 = arith.constant 0 : index
    %106 = vector.load %arg11[%c0_43, %c0_44, %c0_45] : memref<2x1x128xf32, #tpu.memory_space<vmem>>, vector<1x1x128xf32>
    %107 = vector.shape_cast %106 : vector<1x1x128xf32> to vector<1x128xf32>
    %cst_46 = arith.constant dense<0.000000e+00> : vector<8xf32>
    %108 = vector.multi_reduction <add>, %103, %cst_46 [1] : vector<8x128xf32> to vector<8xf32>
    %109 = vector.shape_cast %108 : vector<8xf32> to vector<8x1xf32>
    %cst_47 = arith.constant 0.020833334 : f32
    %110 = vector.broadcast %cst_47 : f32 to vector<8x1xf32>
    %111 = arith.mulf %109, %110 : vector<8x1xf32>
    %112 = vector.broadcast %111 : vector<8x1xf32> to vector<8x128xf32>
    %113 = arith.subf %103, %112 : vector<8x128xf32>
    %114 = vector.broadcast %4 : vector<1x128xf32> to vector<8x128xf32>
    %115 = arith.mulf %113, %114 : vector<8x128xf32>
    %116 = arith.mulf %115, %115 : vector<8x128xf32>
    %cst_48 = arith.constant dense<0.000000e+00> : vector<8xf32>
    %117 = vector.multi_reduction <add>, %116, %cst_48 [1] : vector<8x128xf32> to vector<8xf32>
    %118 = vector.shape_cast %117 : vector<8xf32> to vector<8x1xf32>
    %cst_49 = arith.constant 0.020833334 : f32
    %119 = vector.broadcast %cst_49 : f32 to vector<8x1xf32>
    %120 = arith.mulf %118, %119 : vector<8x1xf32>
    %cst_50 = arith.constant 9.99999974E-6 : f32
    %121 = vector.broadcast %cst_50 : f32 to vector<8x1xf32>
    %122 = arith.addf %120, %121 : vector<8x1xf32>
    %123 = math.rsqrt %122 : vector<8x1xf32>
    %124 = vector.broadcast %123 : vector<8x1xf32> to vector<8x128xf32>
    %125 = arith.mulf %115, %124 : vector<8x128xf32>
    %126 = vector.broadcast %105 : vector<1x128xf32> to vector<8x128xf32>
    %127 = arith.mulf %125, %126 : vector<8x128xf32>
    %128 = vector.broadcast %107 : vector<1x128xf32> to vector<8x128xf32>
    %129 = arith.addf %127, %128 : vector<8x128xf32>
    %130 = arith.truncf %129 : vector<8x128xf32> to vector<8x128xbf16>
    %c0_51 = arith.constant 0 : index
    %c0_52 = arith.constant 0 : index
    %c0_53 = arith.constant 0 : index
    %131 = vector.load %arg12[%c0_51, %c0_52, %c0_53] : memref<2x128x256xbf16, #tpu.memory_space<vmem>>, vector<1x128x256xbf16>
    %132 = vector.shape_cast %131 : vector<1x128x256xbf16> to vector<128x256xbf16>
    %cst_54 = arith.constant dense<0.000000e+00> : vector<8x256xf32>
    %133 = tpu.matmul %130, %132, %cst_54 {dimension_numbers = #tpu.dot_dimension_numbers<[1], [0], [0], [1], [0, 0, 1, 1], [], []>} : vector<8x128xbf16>, vector<128x256xbf16>, vector<8x256xf32> -> vector<8x256xf32>
    %c0_55 = arith.constant 0 : index
    %c0_56 = arith.constant 0 : index
    %c0_57 = arith.constant 0 : index
    %134 = vector.load %arg13[%c0_55, %c0_56, %c0_57] : memref<2x1x256xf32, #tpu.memory_space<vmem>>, vector<1x1x256xf32>
    %135 = vector.shape_cast %134 : vector<1x1x256xf32> to vector<1x256xf32>
    %136 = vector.broadcast %135 : vector<1x256xf32> to vector<8x256xf32>
    %137 = arith.addf %133, %136 : vector<8x256xf32>
    %cst_58 = arith.constant 0.000000e+00 : f32
    %138 = vector.broadcast %cst_58 : f32 to vector<8x256xf32>
    %139 = arith.maximumf %137, %138 : vector<8x256xf32>
    %140 = arith.truncf %139 : vector<8x256xf32> to vector<8x256xbf16>
    %c0_59 = arith.constant 0 : index
    %c0_60 = arith.constant 0 : index
    %c0_61 = arith.constant 0 : index
    %141 = vector.load %arg14[%c0_59, %c0_60, %c0_61] : memref<2x256x128xbf16, #tpu.memory_space<vmem>>, vector<1x256x128xbf16>
    %142 = vector.shape_cast %141 : vector<1x256x128xbf16> to vector<256x128xbf16>
    %cst_62 = arith.constant dense<0.000000e+00> : vector<8x128xf32>
    %143 = tpu.matmul %140, %142, %cst_62 {dimension_numbers = #tpu.dot_dimension_numbers<[1], [0], [0], [1], [0, 0, 1, 1], [], []>} : vector<8x256xbf16>, vector<256x128xbf16>, vector<8x128xf32> -> vector<8x128xf32>
    %c0_63 = arith.constant 0 : index
    %c0_64 = arith.constant 0 : index
    %c0_65 = arith.constant 0 : index
    %144 = vector.load %arg15[%c0_63, %c0_64, %c0_65] : memref<2x1x128xf32, #tpu.memory_space<vmem>>, vector<1x1x128xf32>
    %145 = vector.shape_cast %144 : vector<1x1x128xf32> to vector<1x128xf32>
    %146 = vector.broadcast %145 : vector<1x128xf32> to vector<8x128xf32>
    %147 = arith.addf %143, %146 : vector<8x128xf32>
    %148 = arith.addf %129, %147 : vector<8x128xf32>
    %c0_66 = arith.constant 0 : index
    %c0_67 = arith.constant 0 : index
    %c0_68 = arith.constant 0 : index
    %149 = vector.load %arg16[%c0_66, %c0_67, %c0_68] : memref<2x1x128xf32, #tpu.memory_space<vmem>>, vector<1x1x128xf32>
    %150 = vector.shape_cast %149 : vector<1x1x128xf32> to vector<1x128xf32>
    %c0_69 = arith.constant 0 : index
    %c0_70 = arith.constant 0 : index
    %c0_71 = arith.constant 0 : index
    %151 = vector.load %arg17[%c0_69, %c0_70, %c0_71] : memref<2x1x128xf32, #tpu.memory_space<vmem>>, vector<1x1x128xf32>
    %152 = vector.shape_cast %151 : vector<1x1x128xf32> to vector<1x128xf32>
    %cst_72 = arith.constant dense<0.000000e+00> : vector<8xf32>
    %153 = vector.multi_reduction <add>, %148, %cst_72 [1] : vector<8x128xf32> to vector<8xf32>
    %154 = vector.shape_cast %153 : vector<8xf32> to vector<8x1xf32>
    %cst_73 = arith.constant 0.020833334 : f32
    %155 = vector.broadcast %cst_73 : f32 to vector<8x1xf32>
    %156 = arith.mulf %154, %155 : vector<8x1xf32>
    %157 = vector.broadcast %156 : vector<8x1xf32> to vector<8x128xf32>
    %158 = arith.subf %148, %157 : vector<8x128xf32>
    %159 = vector.broadcast %4 : vector<1x128xf32> to vector<8x128xf32>
    %160 = arith.mulf %158, %159 : vector<8x128xf32>
    %161 = arith.mulf %160, %160 : vector<8x128xf32>
    %cst_74 = arith.constant dense<0.000000e+00> : vector<8xf32>
    %162 = vector.multi_reduction <add>, %161, %cst_74 [1] : vector<8x128xf32> to vector<8xf32>
    %163 = vector.shape_cast %162 : vector<8xf32> to vector<8x1xf32>
    %cst_75 = arith.constant 0.020833334 : f32
    %164 = vector.broadcast %cst_75 : f32 to vector<8x1xf32>
    %165 = arith.mulf %163, %164 : vector<8x1xf32>
    %cst_76 = arith.constant 9.99999974E-6 : f32
    %166 = vector.broadcast %cst_76 : f32 to vector<8x1xf32>
    %167 = arith.addf %165, %166 : vector<8x1xf32>
    %168 = math.rsqrt %167 : vector<8x1xf32>
    %169 = vector.broadcast %168 : vector<8x1xf32> to vector<8x128xf32>
    %170 = arith.mulf %160, %169 : vector<8x128xf32>
    %171 = vector.broadcast %150 : vector<1x128xf32> to vector<8x128xf32>
    %172 = arith.mulf %170, %171 : vector<8x128xf32>
    %173 = vector.broadcast %152 : vector<1x128xf32> to vector<8x128xf32>
    %174 = arith.addf %172, %173 : vector<8x128xf32>
    %175 = arith.truncf %174 : vector<8x128xf32> to vector<8x128xbf16>
    %c1 = arith.constant 1 : index
    %c0_77 = arith.constant 0 : index
    %c0_78 = arith.constant 0 : index
    %176 = vector.load %arg6[%c1, %c0_77, %c0_78] : memref<2x128x144xbf16, #tpu.memory_space<vmem>>, vector<1x128x144xbf16>
    %177 = vector.shape_cast %176 : vector<1x128x144xbf16> to vector<128x144xbf16>
    %cst_79 = arith.constant dense<0.000000e+00> : vector<8x144xf32>
    %178 = tpu.matmul %175, %177, %cst_79 {dimension_numbers = #tpu.dot_dimension_numbers<[1], [0], [0], [1], [0, 0, 1, 1], [], []>} : vector<8x128xbf16>, vector<128x144xbf16>, vector<8x144xf32> -> vector<8x144xf32>
    %c1_80 = arith.constant 1 : index
    %c0_81 = arith.constant 0 : index
    %c0_82 = arith.constant 0 : index
    %179 = vector.load %arg7[%c1_80, %c0_81, %c0_82] : memref<2x1x144xf32, #tpu.memory_space<vmem>>, vector<1x1x144xf32>
    %180 = vector.shape_cast %179 : vector<1x1x144xf32> to vector<1x144xf32>
    %181 = vector.broadcast %180 : vector<1x144xf32> to vector<8x144xf32>
    %182 = arith.addf %178, %181 : vector<8x144xf32>
    %183 = vector.extract_strided_slice %182 {offsets = [0, 0], sizes = [8, 16], strides = [1, 1]} : vector<8x144xf32> to vector<8x16xf32>
    %184 = arith.truncf %183 : vector<8x16xf32> to vector<8x16xbf16>
    %185 = vector.extract_strided_slice %182 {offsets = [0, 48], sizes = [8, 16], strides = [1, 1]} : vector<8x144xf32> to vector<8x16xf32>
    %186 = arith.truncf %185 : vector<8x16xf32> to vector<8x16xbf16>
    %187 = vector.extract_strided_slice %182 {offsets = [0, 96], sizes = [8, 16], strides = [1, 1]} : vector<8x144xf32> to vector<8x16xf32>
    %188 = arith.truncf %187 : vector<8x16xf32> to vector<8x16xbf16>
    %cst_83 = arith.constant dense<0.000000e+00> : vector<8x8xf32>
    %189 = tpu.matmul %184, %186, %cst_83 {dimension_numbers = #tpu.dot_dimension_numbers<[1], [1], [0], [0], [0, 0, 1, 0], [], []>} : vector<8x16xbf16>, vector<8x16xbf16>, vector<8x8xf32> -> vector<8x8xf32>
    %cst_84 = arith.constant 2.500000e-01 : f32
    %190 = vector.broadcast %cst_84 : f32 to vector<8x8xf32>
    %191 = arith.mulf %189, %190 : vector<8x8xf32>
    %192 = vector.broadcast %6 : vector<1x8xf32> to vector<8x8xf32>
    %193 = arith.addf %191, %192 : vector<8x8xf32>
    %cst_85 = arith.constant dense<0xFF800000> : vector<8xf32>
    %194 = vector.multi_reduction <maximumf>, %193, %cst_85 [1] : vector<8x8xf32> to vector<8xf32>
    %195 = vector.shape_cast %194 : vector<8xf32> to vector<8x1xf32>
    %196 = vector.broadcast %195 : vector<8x1xf32> to vector<8x8xf32>
    %197 = arith.subf %193, %196 : vector<8x8xf32>
    %198 = math.exp %197 : vector<8x8xf32>
    %cst_86 = arith.constant dense<0.000000e+00> : vector<8xf32>
    %199 = vector.multi_reduction <add>, %198, %cst_86 [1] : vector<8x8xf32> to vector<8xf32>
    %200 = vector.shape_cast %199 : vector<8xf32> to vector<8x1xf32>
    %201 = tpu.reciprocal %200 {approx = true} : vector<8x1xf32> -> vector<8x1xf32>
    %202 = vector.broadcast %201 : vector<8x1xf32> to vector<8x8xf32>
    %203 = arith.mulf %198, %202 : vector<8x8xf32>
    %204 = arith.truncf %203 : vector<8x8xf32> to vector<8x8xbf16>
    %cst_87 = arith.constant dense<0.000000e+00> : vector<8x16xf32>
    %205 = tpu.matmul %204, %188, %cst_87 {dimension_numbers = #tpu.dot_dimension_numbers<[1], [0], [0], [1], [0, 0, 1, 1], [], []>} : vector<8x8xbf16>, vector<8x16xbf16>, vector<8x16xf32> -> vector<8x16xf32>
    %206 = vector.extract_strided_slice %182 {offsets = [0, 16], sizes = [8, 16], strides = [1, 1]} : vector<8x144xf32> to vector<8x16xf32>
    %207 = arith.truncf %206 : vector<8x16xf32> to vector<8x16xbf16>
    %208 = vector.extract_strided_slice %182 {offsets = [0, 64], sizes = [8, 16], strides = [1, 1]} : vector<8x144xf32> to vector<8x16xf32>
    %209 = arith.truncf %208 : vector<8x16xf32> to vector<8x16xbf16>
    %210 = vector.extract_strided_slice %182 {offsets = [0, 112], sizes = [8, 16], strides = [1, 1]} : vector<8x144xf32> to vector<8x16xf32>
    %211 = arith.truncf %210 : vector<8x16xf32> to vector<8x16xbf16>
    %cst_88 = arith.constant dense<0.000000e+00> : vector<8x8xf32>
    %212 = tpu.matmul %207, %209, %cst_88 {dimension_numbers = #tpu.dot_dimension_numbers<[1], [1], [0], [0], [0, 0, 1, 0], [], []>} : vector<8x16xbf16>, vector<8x16xbf16>, vector<8x8xf32> -> vector<8x8xf32>
    %cst_89 = arith.constant 2.500000e-01 : f32
    %213 = vector.broadcast %cst_89 : f32 to vector<8x8xf32>
    %214 = arith.mulf %212, %213 : vector<8x8xf32>
    %215 = vector.broadcast %6 : vector<1x8xf32> to vector<8x8xf32>
    %216 = arith.addf %214, %215 : vector<8x8xf32>
    %cst_90 = arith.constant dense<0xFF800000> : vector<8xf32>
    %217 = vector.multi_reduction <maximumf>, %216, %cst_90 [1] : vector<8x8xf32> to vector<8xf32>
    %218 = vector.shape_cast %217 : vector<8xf32> to vector<8x1xf32>
    %219 = vector.broadcast %218 : vector<8x1xf32> to vector<8x8xf32>
    %220 = arith.subf %216, %219 : vector<8x8xf32>
    %221 = math.exp %220 : vector<8x8xf32>
    %cst_91 = arith.constant dense<0.000000e+00> : vector<8xf32>
    %222 = vector.multi_reduction <add>, %221, %cst_91 [1] : vector<8x8xf32> to vector<8xf32>
    %223 = vector.shape_cast %222 : vector<8xf32> to vector<8x1xf32>
    %224 = tpu.reciprocal %223 {approx = true} : vector<8x1xf32> -> vector<8x1xf32>
    %225 = vector.broadcast %224 : vector<8x1xf32> to vector<8x8xf32>
    %226 = arith.mulf %221, %225 : vector<8x8xf32>
    %227 = arith.truncf %226 : vector<8x8xf32> to vector<8x8xbf16>
    %cst_92 = arith.constant dense<0.000000e+00> : vector<8x16xf32>
    %228 = tpu.matmul %227, %211, %cst_92 {dimension_numbers = #tpu.dot_dimension_numbers<[1], [0], [0], [1], [0, 0, 1, 1], [], []>} : vector<8x8xbf16>, vector<8x16xbf16>, vector<8x16xf32> -> vector<8x16xf32>
    %229 = vector.extract_strided_slice %182 {offsets = [0, 32], sizes = [8, 16], strides = [1, 1]} : vector<8x144xf32> to vector<8x16xf32>
    %230 = arith.truncf %229 : vector<8x16xf32> to vector<8x16xbf16>
    %231 = vector.extract_strided_slice %182 {offsets = [0, 80], sizes = [8, 16], strides = [1, 1]} : vector<8x144xf32> to vector<8x16xf32>
    %232 = arith.truncf %231 : vector<8x16xf32> to vector<8x16xbf16>
    %233 = vector.extract_strided_slice %182 {offsets = [0, 128], sizes = [8, 16], strides = [1, 1]} : vector<8x144xf32> to vector<8x16xf32>
    %234 = arith.truncf %233 : vector<8x16xf32> to vector<8x16xbf16>
    %cst_93 = arith.constant dense<0.000000e+00> : vector<8x8xf32>
    %235 = tpu.matmul %230, %232, %cst_93 {dimension_numbers = #tpu.dot_dimension_numbers<[1], [1], [0], [0], [0, 0, 1, 0], [], []>} : vector<8x16xbf16>, vector<8x16xbf16>, vector<8x8xf32> -> vector<8x8xf32>
    %cst_94 = arith.constant 2.500000e-01 : f32
    %236 = vector.broadcast %cst_94 : f32 to vector<8x8xf32>
    %237 = arith.mulf %235, %236 : vector<8x8xf32>
    %238 = vector.broadcast %6 : vector<1x8xf32> to vector<8x8xf32>
    %239 = arith.addf %237, %238 : vector<8x8xf32>
    %cst_95 = arith.constant dense<0xFF800000> : vector<8xf32>
    %240 = vector.multi_reduction <maximumf>, %239, %cst_95 [1] : vector<8x8xf32> to vector<8xf32>
    %241 = vector.shape_cast %240 : vector<8xf32> to vector<8x1xf32>
    %242 = vector.broadcast %241 : vector<8x1xf32> to vector<8x8xf32>
    %243 = arith.subf %239, %242 : vector<8x8xf32>
    %244 = math.exp %243 : vector<8x8xf32>
    %cst_96 = arith.constant dense<0.000000e+00> : vector<8xf32>
    %245 = vector.multi_reduction <add>, %244, %cst_96 [1] : vector<8x8xf32> to vector<8xf32>
    %246 = vector.shape_cast %245 : vector<8xf32> to vector<8x1xf32>
    %247 = tpu.reciprocal %246 {approx = true} : vector<8x1xf32> -> vector<8x1xf32>
    %248 = vector.broadcast %247 : vector<8x1xf32> to vector<8x8xf32>
    %249 = arith.mulf %244, %248 : vector<8x8xf32>
    %250 = arith.truncf %249 : vector<8x8xf32> to vector<8x8xbf16>
    %cst_97 = arith.constant dense<0.000000e+00> : vector<8x16xf32>
    %251 = tpu.matmul %250, %234, %cst_97 {dimension_numbers = #tpu.dot_dimension_numbers<[1], [0], [0], [1], [0, 0, 1, 1], [], []>} : vector<8x8xbf16>, vector<8x16xbf16>, vector<8x16xf32> -> vector<8x16xf32>
    %252 = tpu.concatenate %205, %228, %251 in 1 : vector<8x16xf32>, vector<8x16xf32>, vector<8x16xf32> -> vector<8x48xf32>
    %253 = arith.truncf %252 : vector<8x48xf32> to vector<8x48xbf16>
    %c1_98 = arith.constant 1 : index
    %c0_99 = arith.constant 0 : index
    %c0_100 = arith.constant 0 : index
    %254 = vector.load %arg8[%c1_98, %c0_99, %c0_100] : memref<2x48x128xbf16, #tpu.memory_space<vmem>>, vector<1x48x128xbf16>
    %255 = vector.shape_cast %254 : vector<1x48x128xbf16> to vector<48x128xbf16>
    %cst_101 = arith.constant dense<0.000000e+00> : vector<8x128xf32>
    %256 = tpu.matmul %253, %255, %cst_101 {dimension_numbers = #tpu.dot_dimension_numbers<[1], [0], [0], [1], [0, 0, 1, 1], [], []>} : vector<8x48xbf16>, vector<48x128xbf16>, vector<8x128xf32> -> vector<8x128xf32>
    %c1_102 = arith.constant 1 : index
    %c0_103 = arith.constant 0 : index
    %c0_104 = arith.constant 0 : index
    %257 = vector.load %arg9[%c1_102, %c0_103, %c0_104] : memref<2x1x128xf32, #tpu.memory_space<vmem>>, vector<1x1x128xf32>
    %258 = vector.shape_cast %257 : vector<1x1x128xf32> to vector<1x128xf32>
    %259 = vector.broadcast %258 : vector<1x128xf32> to vector<8x128xf32>
    %260 = arith.addf %256, %259 : vector<8x128xf32>
    %261 = arith.addf %174, %260 : vector<8x128xf32>
    %c1_105 = arith.constant 1 : index
    %c0_106 = arith.constant 0 : index
    %c0_107 = arith.constant 0 : index
    %262 = vector.load %arg10[%c1_105, %c0_106, %c0_107] : memref<2x1x128xf32, #tpu.memory_space<vmem>>, vector<1x1x128xf32>
    %263 = vector.shape_cast %262 : vector<1x1x128xf32> to vector<1x128xf32>
    %c1_108 = arith.constant 1 : index
    %c0_109 = arith.constant 0 : index
    %c0_110 = arith.constant 0 : index
    %264 = vector.load %arg11[%c1_108, %c0_109, %c0_110] : memref<2x1x128xf32, #tpu.memory_space<vmem>>, vector<1x1x128xf32>
    %265 = vector.shape_cast %264 : vector<1x1x128xf32> to vector<1x128xf32>
    %cst_111 = arith.constant dense<0.000000e+00> : vector<8xf32>
    %266 = vector.multi_reduction <add>, %261, %cst_111 [1] : vector<8x128xf32> to vector<8xf32>
    %267 = vector.shape_cast %266 : vector<8xf32> to vector<8x1xf32>
    %cst_112 = arith.constant 0.020833334 : f32
    %268 = vector.broadcast %cst_112 : f32 to vector<8x1xf32>
    %269 = arith.mulf %267, %268 : vector<8x1xf32>
    %270 = vector.broadcast %269 : vector<8x1xf32> to vector<8x128xf32>
    %271 = arith.subf %261, %270 : vector<8x128xf32>
    %272 = vector.broadcast %4 : vector<1x128xf32> to vector<8x128xf32>
    %273 = arith.mulf %271, %272 : vector<8x128xf32>
    %274 = arith.mulf %273, %273 : vector<8x128xf32>
    %cst_113 = arith.constant dense<0.000000e+00> : vector<8xf32>
    %275 = vector.multi_reduction <add>, %274, %cst_113 [1] : vector<8x128xf32> to vector<8xf32>
    %276 = vector.shape_cast %275 : vector<8xf32> to vector<8x1xf32>
    %cst_114 = arith.constant 0.020833334 : f32
    %277 = vector.broadcast %cst_114 : f32 to vector<8x1xf32>
    %278 = arith.mulf %276, %277 : vector<8x1xf32>
    %cst_115 = arith.constant 9.99999974E-6 : f32
    %279 = vector.broadcast %cst_115 : f32 to vector<8x1xf32>
    %280 = arith.addf %278, %279 : vector<8x1xf32>
    %281 = math.rsqrt %280 : vector<8x1xf32>
    %282 = vector.broadcast %281 : vector<8x1xf32> to vector<8x128xf32>
    %283 = arith.mulf %273, %282 : vector<8x128xf32>
    %284 = vector.broadcast %263 : vector<1x128xf32> to vector<8x128xf32>
    %285 = arith.mulf %283, %284 : vector<8x128xf32>
    %286 = vector.broadcast %265 : vector<1x128xf32> to vector<8x128xf32>
    %287 = arith.addf %285, %286 : vector<8x128xf32>
    %288 = arith.truncf %287 : vector<8x128xf32> to vector<8x128xbf16>
    %c1_116 = arith.constant 1 : index
    %c0_117 = arith.constant 0 : index
    %c0_118 = arith.constant 0 : index
    %289 = vector.load %arg12[%c1_116, %c0_117, %c0_118] : memref<2x128x256xbf16, #tpu.memory_space<vmem>>, vector<1x128x256xbf16>
    %290 = vector.shape_cast %289 : vector<1x128x256xbf16> to vector<128x256xbf16>
    %cst_119 = arith.constant dense<0.000000e+00> : vector<8x256xf32>
    %291 = tpu.matmul %288, %290, %cst_119 {dimension_numbers = #tpu.dot_dimension_numbers<[1], [0], [0], [1], [0, 0, 1, 1], [], []>} : vector<8x128xbf16>, vector<128x256xbf16>, vector<8x256xf32> -> vector<8x256xf32>
    %c1_120 = arith.constant 1 : index
    %c0_121 = arith.constant 0 : index
    %c0_122 = arith.constant 0 : index
    %292 = vector.load %arg13[%c1_120, %c0_121, %c0_122] : memref<2x1x256xf32, #tpu.memory_space<vmem>>, vector<1x1x256xf32>
    %293 = vector.shape_cast %292 : vector<1x1x256xf32> to vector<1x256xf32>
    %294 = vector.broadcast %293 : vector<1x256xf32> to vector<8x256xf32>
    %295 = arith.addf %291, %294 : vector<8x256xf32>
    %cst_123 = arith.constant 0.000000e+00 : f32
    %296 = vector.broadcast %cst_123 : f32 to vector<8x256xf32>
    %297 = arith.maximumf %295, %296 : vector<8x256xf32>
    %298 = arith.truncf %297 : vector<8x256xf32> to vector<8x256xbf16>
    %c1_124 = arith.constant 1 : index
    %c0_125 = arith.constant 0 : index
    %c0_126 = arith.constant 0 : index
    %299 = vector.load %arg14[%c1_124, %c0_125, %c0_126] : memref<2x256x128xbf16, #tpu.memory_space<vmem>>, vector<1x256x128xbf16>
    %300 = vector.shape_cast %299 : vector<1x256x128xbf16> to vector<256x128xbf16>
    %cst_127 = arith.constant dense<0.000000e+00> : vector<8x128xf32>
    %301 = tpu.matmul %298, %300, %cst_127 {dimension_numbers = #tpu.dot_dimension_numbers<[1], [0], [0], [1], [0, 0, 1, 1], [], []>} : vector<8x256xbf16>, vector<256x128xbf16>, vector<8x128xf32> -> vector<8x128xf32>
    %c1_128 = arith.constant 1 : index
    %c0_129 = arith.constant 0 : index
    %c0_130 = arith.constant 0 : index
    %302 = vector.load %arg15[%c1_128, %c0_129, %c0_130] : memref<2x1x128xf32, #tpu.memory_space<vmem>>, vector<1x1x128xf32>
    %303 = vector.shape_cast %302 : vector<1x1x128xf32> to vector<1x128xf32>
    %304 = vector.broadcast %303 : vector<1x128xf32> to vector<8x128xf32>
    %305 = arith.addf %301, %304 : vector<8x128xf32>
    %306 = arith.addf %287, %305 : vector<8x128xf32>
    %c1_131 = arith.constant 1 : index
    %c0_132 = arith.constant 0 : index
    %c0_133 = arith.constant 0 : index
    %307 = vector.load %arg16[%c1_131, %c0_132, %c0_133] : memref<2x1x128xf32, #tpu.memory_space<vmem>>, vector<1x1x128xf32>
    %308 = vector.shape_cast %307 : vector<1x1x128xf32> to vector<1x128xf32>
    %c1_134 = arith.constant 1 : index
    %c0_135 = arith.constant 0 : index
    %c0_136 = arith.constant 0 : index
    %309 = vector.load %arg17[%c1_134, %c0_135, %c0_136] : memref<2x1x128xf32, #tpu.memory_space<vmem>>, vector<1x1x128xf32>
    %310 = vector.shape_cast %309 : vector<1x1x128xf32> to vector<1x128xf32>
    %cst_137 = arith.constant dense<0.000000e+00> : vector<8xf32>
    %311 = vector.multi_reduction <add>, %306, %cst_137 [1] : vector<8x128xf32> to vector<8xf32>
    %312 = vector.shape_cast %311 : vector<8xf32> to vector<8x1xf32>
    %cst_138 = arith.constant 0.020833334 : f32
    %313 = vector.broadcast %cst_138 : f32 to vector<8x1xf32>
    %314 = arith.mulf %312, %313 : vector<8x1xf32>
    %315 = vector.broadcast %314 : vector<8x1xf32> to vector<8x128xf32>
    %316 = arith.subf %306, %315 : vector<8x128xf32>
    %317 = vector.broadcast %4 : vector<1x128xf32> to vector<8x128xf32>
    %318 = arith.mulf %316, %317 : vector<8x128xf32>
    %319 = arith.mulf %318, %318 : vector<8x128xf32>
    %cst_139 = arith.constant dense<0.000000e+00> : vector<8xf32>
    %320 = vector.multi_reduction <add>, %319, %cst_139 [1] : vector<8x128xf32> to vector<8xf32>
    %321 = vector.shape_cast %320 : vector<8xf32> to vector<8x1xf32>
    %cst_140 = arith.constant 0.020833334 : f32
    %322 = vector.broadcast %cst_140 : f32 to vector<8x1xf32>
    %323 = arith.mulf %321, %322 : vector<8x1xf32>
    %cst_141 = arith.constant 9.99999974E-6 : f32
    %324 = vector.broadcast %cst_141 : f32 to vector<8x1xf32>
    %325 = arith.addf %323, %324 : vector<8x1xf32>
    %326 = math.rsqrt %325 : vector<8x1xf32>
    %327 = vector.broadcast %326 : vector<8x1xf32> to vector<8x128xf32>
    %328 = arith.mulf %318, %327 : vector<8x128xf32>
    %329 = vector.broadcast %308 : vector<1x128xf32> to vector<8x128xf32>
    %330 = arith.mulf %328, %329 : vector<8x128xf32>
    %331 = vector.broadcast %310 : vector<1x128xf32> to vector<8x128xf32>
    %332 = arith.addf %330, %331 : vector<8x128xf32>
    %c0_142 = arith.constant 0 : index
    %c0_143 = arith.constant 0 : index
    %333 = vector.load %arg18[%c0_142, %c0_143] : memref<1x128xf32, #tpu.memory_space<vmem>>, vector<1x128xf32>
    %334 = vector.broadcast %333 : vector<1x128xf32> to vector<8x128xf32>
    %335 = arith.mulf %332, %334 : vector<8x128xf32>
    %cst_144 = arith.constant dense<0.000000e+00> : vector<8xf32>
    %336 = vector.multi_reduction <add>, %335, %cst_144 [1] : vector<8x128xf32> to vector<8xf32>
    %337 = vector.shape_cast %336 : vector<8xf32> to vector<8x1xf32>
    %cst_145 = arith.constant dense<0xFF800000> : vector<1xf32>
    %338 = vector.multi_reduction <maximumf>, %337, %cst_145 [0] : vector<8x1xf32> to vector<1xf32>
    %339 = vector.shape_cast %338 : vector<1xf32> to vector<1x1xf32>
    %340 = vector.broadcast %339 : vector<1x1xf32> to vector<8x1xf32>
    %341 = arith.subf %337, %340 : vector<8x1xf32>
    %342 = math.exp %341 : vector<8x1xf32>
    %cst_146 = arith.constant dense<0.000000e+00> : vector<1xf32>
    %343 = vector.multi_reduction <add>, %342, %cst_146 [0] : vector<8x1xf32> to vector<1xf32>
    %344 = vector.shape_cast %343 : vector<1xf32> to vector<1x1xf32>
    %345 = tpu.reciprocal %344 {approx = true} : vector<1x1xf32> -> vector<1x1xf32>
    %346 = vector.broadcast %345 : vector<1x1xf32> to vector<8x1xf32>
    %347 = arith.mulf %342, %346 : vector<8x1xf32>
    %348 = vector.broadcast %347 : vector<8x1xf32> to vector<8x128xf32>
    %349 = arith.mulf %332, %348 : vector<8x128xf32>
    %cst_147 = arith.constant dense<0.000000e+00> : vector<128xf32>
    %350 = vector.multi_reduction <add>, %349, %cst_147 [0] : vector<8x128xf32> to vector<128xf32>
    %351 = vector.shape_cast %350 : vector<128xf32> to vector<1x128xf32>
    %c0_148 = arith.constant 0 : index
    %c0_149 = arith.constant 0 : index
    %c0_150 = arith.constant 0 : index
    %352 = vector.load %arg19[%c0_148, %c0_149, %c0_150] : memref<1x1x128xf32, #tpu.memory_space<vmem>>, vector<1x1x128xf32>
    %353 = vector.shape_cast %352 : vector<1x1x128xf32> to vector<1x128xf32>
    %354 = vector.shape_cast %351 : vector<1x128xf32> to vector<1x1x128xf32>
    tpu.vector_store %arg19[%c0_148, %c0_149, %c0_150], %354 {strides = array<i32>} : memref<1x1x128xf32, #tpu.memory_space<vmem>>, vector<1x1x128xf32>,
    return
  }
  func.func @transform_0(%arg0: i32) -> (i32, i32, i32) {
    %c0_i32 = arith.constant 0 : i32
    %c0_i32_0 = arith.constant 0 : i32
    %c0_i32_1 = arith.constant 0 : i32
    return %arg0, %c0_i32, %c0_i32_0 : i32, i32, i32
  }
  func.func @transform_1(%arg0: i32) -> (i32, i32, i32) {
    %c0_i32 = arith.constant 0 : i32
    %c0_i32_0 = arith.constant 0 : i32
    %c0_i32_1 = arith.constant 0 : i32
    return %arg0, %c0_i32, %c0_i32_0 : i32, i32, i32
  }
  func.func @transform_2(%arg0: i32) -> (i32, i32) {
    %c0_i32 = arith.constant 0 : i32
    %c0_i32_0 = arith.constant 0 : i32
    %c0_i32_1 = arith.constant 0 : i32
    return %c0_i32, %c0_i32_0 : i32, i32
  }
  func.func @transform_3(%arg0: i32) -> (i32, i32) {
    %c0_i32 = arith.constant 0 : i32
    %c0_i32_0 = arith.constant 0 : i32
    %c0_i32_1 = arith.constant 0 : i32
    return %c0_i32, %c0_i32_0 : i32, i32
  }
  func.func @transform_4(%arg0: i32) -> (i32, i32) {
    %c0_i32 = arith.constant 0 : i32
    %c0_i32_0 = arith.constant 0 : i32
    %c0_i32_1 = arith.constant 0 : i32
    return %c0_i32, %c0_i32_0 : i32, i32
  }
  func.func @transform_5(%arg0: i32) -> (i32, i32, i32) {
    %c0_i32 = arith.constant 0 : i32
    %c0_i32_0 = arith.constant 0 : i32
    %c0_i32_1 = arith.constant 0 : i32
    %c0_i32_2 = arith.constant 0 : i32
    return %c0_i32, %c0_i32_0, %c0_i32_1 : i32, i32, i32
  }
  func.func @transform_6(%arg0: i32) -> (i32, i32, i32) {
    %c0_i32 = arith.constant 0 : i32
    %c0_i32_0 = arith.constant 0 : i32
    %c0_i32_1 = arith.constant 0 : i32
    %c0_i32_2 = arith.constant 0 : i32
    return %c0_i32, %c0_i32_0, %c0_i32_1 : i32, i32, i32
  }
  func.func @transform_7(%arg0: i32) -> (i32, i32, i32) {
    %c0_i32 = arith.constant 0 : i32
    %c0_i32_0 = arith.constant 0 : i32
    %c0_i32_1 = arith.constant 0 : i32
    %c0_i32_2 = arith.constant 0 : i32
    return %c0_i32, %c0_i32_0, %c0_i32_1 : i32, i32, i32
  }
  func.func @transform_8(%arg0: i32) -> (i32, i32, i32) {
    %c0_i32 = arith.constant 0 : i32
    %c0_i32_0 = arith.constant 0 : i32
    %c0_i32_1 = arith.constant 0 : i32
    %c0_i32_2 = arith.constant 0 : i32
    return %c0_i32, %c0_i32_0, %c0_i32_1 : i32, i32, i32
  }
  func.func @transform_9(%arg0: i32) -> (i32, i32, i32) {
    %c0_i32 = arith.constant 0 : i32
    %c0_i32_0 = arith.constant 0 : i32
    %c0_i32_1 = arith.constant 0 : i32
    %c0_i32_2 = arith.constant 0 : i32
    return %c0_i32, %c0_i32_0, %c0_i32_1 : i32, i32, i32
  }
  func.func @transform_10(%arg0: i32) -> (i32, i32, i32) {
    %c0_i32 = arith.constant 0 : i32
    %c0_i32_0 = arith.constant 0 : i32
    %c0_i32_1 = arith.constant 0 : i32
    %c0_i32_2 = arith.constant 0 : i32
    return %c0_i32, %c0_i32_0, %c0_i32_1 : i32, i32, i32
  }
  func.func @transform_11(%arg0: i32) -> (i32, i32, i32) {
    %c0_i32 = arith.constant 0 : i32
    %c0_i32_0 = arith.constant 0 : i32
    %c0_i32_1 = arith.constant 0 : i32
    %c0_i32_2 = arith.constant 0 : i32
    return %c0_i32, %c0_i32_0, %c0_i32_1 : i32, i32, i32
  }
  func.func @transform_12(%arg0: i32) -> (i32, i32, i32) {
    %c0_i32 = arith.constant 0 : i32
    %c0_i32_0 = arith.constant 0 : i32
    %c0_i32_1 = arith.constant 0 : i32
    %c0_i32_2 = arith.constant 0 : i32
    return %c0_i32, %c0_i32_0, %c0_i32_1 : i32, i32, i32
  }
  func.func @transform_13(%arg0: i32) -> (i32, i32, i32) {
    %c0_i32 = arith.constant 0 : i32
    %c0_i32_0 = arith.constant 0 : i32
    %c0_i32_1 = arith.constant 0 : i32
    %c0_i32_2 = arith.constant 0 : i32
    return %c0_i32, %c0_i32_0, %c0_i32_1 : i32, i32, i32
  }
  func.func @transform_14(%arg0: i32) -> (i32, i32, i32) {
    %c0_i32 = arith.constant 0 : i32
    %c0_i32_0 = arith.constant 0 : i32
    %c0_i32_1 = arith.constant 0 : i32
    %c0_i32_2 = arith.constant 0 : i32
    return %c0_i32, %c0_i32_0, %c0_i32_1 : i32, i32, i32
  }
  func.func @transform_15(%arg0: i32) -> (i32, i32, i32) {
    %c0_i32 = arith.constant 0 : i32
    %c0_i32_0 = arith.constant 0 : i32
    %c0_i32_1 = arith.constant 0 : i32
    %c0_i32_2 = arith.constant 0 : i32
    return %c0_i32, %c0_i32_0, %c0_i32_1 : i32, i32, i32
  }
  func.func @transform_16(%arg0: i32) -> (i32, i32, i32) {
    %c0_i32 = arith.constant 0 : i32
    %c0_i32_0 = arith.constant 0 : i32
    %c0_i32_1 = arith.constant 0 : i32
    %c0_i32_2 = arith.constant 0 : i32
    return %c0_i32, %c0_i32_0, %c0_i32_1 : i32, i32, i32
  }
  func.func @transform_17(%arg0: i32) -> (i32, i32) {
    %c0_i32 = arith.constant 0 : i32
    %c0_i32_0 = arith.constant 0 : i32
    %c0_i32_1 = arith.constant 0 : i32
    return %c0_i32, %c0_i32_0 : i32, i32
  }
  func.func @transform_18(%arg0: i32) -> (i32, i32, i32) {
    %c0_i32 = arith.constant 0 : i32
    %c0_i32_0 = arith.constant 0 : i32
    %c0_i32_1 = arith.constant 0 : i32
    return %arg0, %c0_i32, %c0_i32_0 : i32, i32, i32
  }
}

</mosaic_0001>

<llo_original>
// kernel: tpu_custom_call.1
$region0: #{tpu_custom_call.1}
  #allocation0 [shape = 'u32[]', space=smem, size = 0x4, offset = 0x4, fixed_abs, tag = 'smem constant byte address 0x4 - core index']
  #allocation1 [shape = 'u32[144,128]{1,0:T(1,128)}', space=vmem, size = 0x12000, scoped, tag = 'internal scratch']
  %s0 = inlined_call_operand.vmem [shape: f32[2,8,128], index: 0, kind: input, shape index: {}]
  %s1 = inlined_call_operand.vmem [shape: f32[2,1,8], index: 1, kind: input, shape index: {}]
  %s2 = inlined_call_operand.vmem [shape: bf16[128,128], index: 2, kind: input, shape index: {}]
  %s3 = inlined_call_operand.vmem [shape: f32[1,128], index: 3, kind: input, shape index: {}]
  %s4 = inlined_call_operand.vmem [shape: f32[8,128], index: 4, kind: input, shape index: {}]
  %s5 = inlined_call_operand.vmem [shape: bf16[2,128,144], index: 5, kind: input, shape index: {}]
  %s6 = inlined_call_operand.vmem [shape: f32[2,1,144], index: 6, kind: input, shape index: {}]
  %s7 = inlined_call_operand.vmem [shape: bf16[2,48,128], index: 7, kind: input, shape index: {}]
  %s8 = inlined_call_operand.vmem [shape: f32[2,1,128], index: 8, kind: input, shape index: {}]
  %s9 = inlined_call_operand.vmem [shape: f32[2,1,128], index: 9, kind: input, shape index: {}]
  %s10 = inlined_call_operand.vmem [shape: f32[2,1,128], index: 10, kind: input, shape index: {}]
  %s11 = inlined_call_operand.vmem [shape: bf16[2,128,256], index: 11, kind: input, shape index: {}]
  %s12 = inlined_call_operand.vmem [shape: f32[2,1,256], index: 12, kind: input, shape index: {}]
  %s13 = inlined_call_operand.hbm [shape: bf16[2,256,128], index: 13, kind: input, shape index: {}]
  %s14 = inlined_call_operand.vmem [shape: f32[2,1,128], index: 14, kind: input, shape index: {}]
  %s15 = inlined_call_operand.vmem [shape: f32[2,1,128], index: 15, kind: input, shape index: {}]
  %s16 = inlined_call_operand.vmem [shape: f32[2,1,128], index: 16, kind: input, shape index: {}]
  %s17 = inlined_call_operand.vmem [shape: f32[1,128], index: 17, kind: input, shape index: {}]
  %s18 = inlined_call_operand.hbm [shape: f32[2,1,128], index: 18, kind: output, shape index: {}]
  %s19 = sld [smem:[#allocation0]]
  $region109: #{tpu_custom_call.1} parent=0
    _
  %s21 = ssub.s32 1, %s19
  %s22 = scalar_select 0, %s21, %s19
  $region1: #{tpu_custom_call.1} parent=0
    #allocation2 [shape = 'u8[131072]{0}', space=vmem, size = 0x20000, scoped, tag = 'input window, operand 13, single buffered']
    #allocation3 [shape = 's32[2]{0}', space=sflag, size = 0x8, scoped, tag = 'scoped memory for tpu_custom_call.1']
    #allocation4 [shape = 's32[2]{0}', space=sflag, size = 0x8, scoped, tag = 'scoped memory for tpu_custom_call.1']
    #allocation5 [shape = 'u8[1024]{0}', space=vmem, size = 0x400, scoped, tag = 'output window, operand 0']
    %23 = vsyncpa [#allocation3], 0
    %24 = vsyncpa [#allocation4], 0
    %s25 = scalar_lea.sflag [#allocation4], 1
    %26 = vsyncpa %s25, 0
    loop: start=0, step=1, limit=4
    $region2: #{tpu_custom_call.1} parent=1 // loop_pre_header
      _
    $region3: #{tpu_custom_call.1} parent=1 // loop_header
      %s28 = sphi 0, %s32
      %p29 = scmp.ge.s32.totalorder %s28, 4
      %s38 = sphi 0, %s40
      %s41 = sphi 0, %s38
      %s42 = sphi 0, %s41
      %s58 = sphi 0, %s42
      %s64 = sphi 0, %s66
      %s67 = sphi 0, %s64
      %s68 = sphi 0, %s67
      %s84 = sphi 0, %s68
      %s88 = sphi 0, %s88
      %s90 = sphi 0, %s88
      %s91 = sphi 0, %s90
      %s105 = sphi 0, %s91
      %s109 = sphi 0, %s109
      %s111 = sphi 0, %s109
      %s112 = sphi 0, %s111
      %s126 = sphi 0, %s112
      %s130 = sphi 0, %s130
      %s132 = sphi 0, %s130
      %s133 = sphi 0, %s132
      %s147 = sphi 0, %s133
      %s151 = sphi 0, %s151
      %s153 = sphi 0, %s151
      %s154 = sphi 0, %s153
      %s168 = sphi 0, %s154
      %s172 = sphi 0, %s172
      %s174 = sphi 0, %s172
      %s175 = sphi 0, %s174
      %s189 = sphi 0, %s175
      %s193 = sphi 0, %s193
      %s195 = sphi 0, %s193
      %s196 = sphi 0, %s195
      %s210 = sphi 0, %s196
      %s214 = sphi 0, %s214
      %s216 = sphi 0, %s214
      %s217 = sphi 0, %s216
      %s231 = sphi 0, %s217
      %s235 = sphi 0, %s235
      %s237 = sphi 0, %s235
      %s238 = sphi 0, %s237
      %s252 = sphi 0, %s238
      %s256 = sphi 0, %s256
      %s258 = sphi 0, %s256
      %s259 = sphi 0, %s258
      %s273 = sphi 0, %s259
      %s277 = sphi 0, %s277
      %s279 = sphi 0, %s277
      %s280 = sphi 0, %s279
      %s294 = sphi 0, %s280
      %s298 = sphi 0, %s298
      %s300 = sphi 0, %s298
      %s301 = sphi 0, %s300
      %s315 = sphi 0, %s301
      %s319 = sphi 0, %s319
      %s321 = sphi 0, %s319
      %s322 = sphi 0, %s321
      %s336 = sphi 0, %s322
      %s340 = sphi 0, %s340
      %s342 = sphi 0, %s340
      %s343 = sphi 0, %s342
      %s357 = sphi 0, %s343
      %s361 = sphi 0, %s361
      %s363 = sphi 0, %s361
      %s364 = sphi 0, %s363
      %s378 = sphi 0, %s364
      %s382 = sphi 0, %s382
      %s384 = sphi 0, %s382
      %s385 = sphi 0, %s384
      %s399 = sphi 0, %s385
      %s403 = sphi 0, %s403
      %s405 = sphi 0, %s403
      %s406 = sphi 0, %s405
      %s420 = sphi 0, %s406
      %s426 = sphi 0, %s428
      %s429 = sphi 0, %s426
      %s430 = sphi 0, %s429
      %s446 = sphi 0, %s430
    $region4: #{tpu_custom_call.1} parent=1 // loop_header_branch
      %31 = sbr.rel (%p29) target = $region8
    $region5: #{tpu_custom_call.1} parent=1 // loop_body
      %s33 = ssub.s32 %s28, 1
      %s34 = ssub.s32 %s28, 2
      %s35 = sadd.s32 %s28, 1
      %s36 = ssub.s32 %s28, %s35
      %p37 = scmp.eq.s32.totalorder %s36, 0
      %s39 = sadd.s32 %s38, 1
      %s40 = scalar_select %p37, %s38, %s39
      %p43 = pneg %p37
      %p44 = scmp.eq.s32.totalorder %s28, 1
      %p45 = por %p43, %p44
      %p46 = scmp.ne.s32.totalorder %s38, %s41
      %p47 = scmp.eq.s32.totalorder %s28, 0
      %p48 = por %p46, %p47
      %p49 = scmp.ne.s32.totalorder %s38, %s41
      %p50 = scmp.eq.s32.totalorder %s33, 1
      %p51 = por %p49, %p50
      %p52 = scmp.ne.s32.totalorder %s41, %s42
      %p53 = scmp.eq.s32.totalorder %s33, 0
      %p54 = por %p52, %p53
      %p55 = scmp.ne.s32.totalorder %s41, %s42
      %p56 = scmp.eq.s32.totalorder %s34, 1
      %p57 = por %p55, %p56
      %p59 = scmp.ne.s32.totalorder %s42, %s58
      %p60 = scmp.eq.s32.totalorder %s34, 0
      %p61 = por %p59, %p60
      %s62 = ssub.s32 %s28, %s35
      %p63 = scmp.eq.s32.totalorder %s62, 0
      %s65 = sadd.s32 %s64, 1
      %s66 = scalar_select %p63, %s64, %s65
      %p69 = pneg %p63
      %p70 = scmp.eq.s32.totalorder %s28, 1
      %p71 = por %p69, %p70
      %p72 = scmp.ne.s32.totalorder %s64, %s67
      %p73 = scmp.eq.s32.totalorder %s28, 0
      %p74 = por %p72, %p73
      %p75 = scmp.ne.s32.totalorder %s64, %s67
      %p76 = scmp.eq.s32.totalorder %s33, 1
      %p77 = por %p75, %p76
      %p78 = scmp.ne.s32.totalorder %s67, %s68
      %p79 = scmp.eq.s32.totalorder %s33, 0
      %p80 = por %p78, %p79
      %p81 = scmp.ne.s32.totalorder %s67, %s68
      %p82 = scmp.eq.s32.totalorder %s34, 1
      %p83 = por %p81, %p82
      %p85 = scmp.ne.s32.totalorder %s68, %s84
      %p86 = scmp.eq.s32.totalorder %s34, 0
      %p87 = por %p85, %p86
      %s89 = sadd.s32 %s88, 1
      %p92 = scmp.eq.s32.totalorder %s28, 1
      %p93 = scmp.ne.s32.totalorder %s88, %s90
      %p94 = scmp.eq.s32.totalorder %s28, 0
      %p95 = por %p93, %p94
      %p96 = scmp.ne.s32.totalorder %s88, %s90
      %p97 = scmp.eq.s32.totalorder %s33, 1
      %p98 = por %p96, %p97
      %p99 = scmp.ne.s32.totalorder %s90, %s91
      %p100 = scmp.eq.s32.totalorder %s33, 0
      %p101 = por %p99, %p100
      %p102 = scmp.ne.s32.totalorder %s90, %s91
      %p103 = scmp.eq.s32.totalorder %s34, 1
      %p104 = por %p102, %p103
      %p106 = scmp.ne.s32.totalorder %s91, %s105
      %p107 = scmp.eq.s32.totalorder %s34, 0
      %p108 = por %p106, %p107
      %s110 = sadd.s32 %s109, 1
      %p113 = scmp.eq.s32.totalorder %s28, 1
      %p114 = scmp.ne.s32.totalorder %s109, %s111
      %p115 = scmp.eq.s32.totalorder %s28, 0
      %p116 = por %p114, %p115
      %p117 = scmp.ne.s32.totalorder %s109, %s111
      %p118 = scmp.eq.s32.totalorder %s33, 1
      %p119 = por %p117, %p118
      %p120 = scmp.ne.s32.totalorder %s111, %s112
      %p121 = scmp.eq.s32.totalorder %s33, 0
      %p122 = por %p120, %p121
      %p123 = scmp.ne.s32.totalorder %s111, %s112
      %p124 = scmp.eq.s32.totalorder %s34, 1
      %p125 = por %p123, %p124
      %p127 = scmp.ne.s32.totalorder %s112, %s126
      %p128 = scmp.eq.s32.totalorder %s34, 0
      %p129 = por %p127, %p128
      %s131 = sadd.s32 %s130, 1
      %p134 = scmp.eq.s32.totalorder %s28, 1
      %p135 = scmp.ne.s32.totalorder %s130, %s132
      %p136 = scmp.eq.s32.totalorder %s28, 0
      %p137 = por %p135, %p136
      %p138 = scmp.ne.s32.totalorder %s130, %s132
      %p139 = scmp.eq.s32.totalorder %s33, 1
      %p140 = por %p138, %p139
      %p141 = scmp.ne.s32.totalorder %s132, %s133
      %p142 = scmp.eq.s32.totalorder %s33, 0
      %p143 = por %p141, %p142
      %p144 = scmp.ne.s32.totalorder %s132, %s133
      %p145 = scmp.eq.s32.totalorder %s34, 1
      %p146 = por %p144, %p145
      %p148 = scmp.ne.s32.totalorder %s133, %s147
      %p149 = scmp.eq.s32.totalorder %s34, 0
      %p150 = por %p148, %p149
      %s152 = sadd.s32 %s151, 1
      %p155 = scmp.eq.s32.totalorder %s28, 1
      %p156 = scmp.ne.s32.totalorder %s151, %s153
      %p157 = scmp.eq.s32.totalorder %s28, 0
      %p158 = por %p156, %p157
      %p159 = scmp.ne.s32.totalorder %s151, %s153
      %p160 = scmp.eq.s32.totalorder %s33, 1
      %p161 = por %p159, %p160
      %p162 = scmp.ne.s32.totalorder %s153, %s154
      %p163 = scmp.eq.s32.totalorder %s33, 0
      %p164 = por %p162, %p163
      %p165 = scmp.ne.s32.totalorder %s153, %s154
      %p166 = scmp.eq.s32.totalorder %s34, 1
      %p167 = por %p165, %p166
      %p169 = scmp.ne.s32.totalorder %s154, %s168
      %p170 = scmp.eq.s32.totalorder %s34, 0
      %p171 = por %p169, %p170
      %s173 = sadd.s32 %s172, 1
      %p176 = scmp.eq.s32.totalorder %s28, 1
      %p177 = scmp.ne.s32.totalorder %s172, %s174
      %p178 = scmp.eq.s32.totalorder %s28, 0
      %p179 = por %p177, %p178
      %p180 = scmp.ne.s32.totalorder %s172, %s174
      %p181 = scmp.eq.s32.totalorder %s33, 1
      %p182 = por %p180, %p181
      %p183 = scmp.ne.s32.totalorder %s174, %s175
      %p184 = scmp.eq.s32.totalorder %s33, 0
      %p185 = por %p183, %p184
      %p186 = scmp.ne.s32.totalorder %s174, %s175
      %p187 = scmp.eq.s32.totalorder %s34, 1
      %p188 = por %p186, %p187
      %p190 = scmp.ne.s32.totalorder %s175, %s189
      %p191 = scmp.eq.s32.totalorder %s34, 0
      %p192 = por %p190, %p191
      %s194 = sadd.s32 %s193, 1
      %p197 = scmp.eq.s32.totalorder %s28, 1
      %p198 = scmp.ne.s32.totalorder %s193, %s195
      %p199 = scmp.eq.s32.totalorder %s28, 0
      %p200 = por %p198, %p199
      %p201 = scmp.ne.s32.totalorder %s193, %s195
      %p202 = scmp.eq.s32.totalorder %s33, 1
      %p203 = por %p201, %p202
      %p204 = scmp.ne.s32.totalorder %s195, %s196
      %p205 = scmp.eq.s32.totalorder %s33, 0
      %p206 = por %p204, %p205
      %p207 = scmp.ne.s32.totalorder %s195, %s196
      %p208 = scmp.eq.s32.totalorder %s34, 1
      %p209 = por %p207, %p208
      %p211 = scmp.ne.s32.totalorder %s196, %s210
      %p212 = scmp.eq.s32.totalorder %s34, 0
      %p213 = por %p211, %p212
      %s215 = sadd.s32 %s214, 1
      %p218 = scmp.eq.s32.totalorder %s28, 1
      %p219 = scmp.ne.s32.totalorder %s214, %s216
      %p220 = scmp.eq.s32.totalorder %s28, 0
      %p221 = por %p219, %p220
      %p222 = scmp.ne.s32.totalorder %s214, %s216
      %p223 = scmp.eq.s32.totalorder %s33, 1
      %p224 = por %p222, %p223
      %p225 = scmp.ne.s32.totalorder %s216, %s217
      %p226 = scmp.eq.s32.totalorder %s33, 0
      %p227 = por %p225, %p226
      %p228 = scmp.ne.s32.totalorder %s216, %s217
      %p229 = scmp.eq.s32.totalorder %s34, 1
      %p230 = por %p228, %p229
      %p232 = scmp.ne.s32.totalorder %s217, %s231
      %p233 = scmp.eq.s32.totalorder %s34, 0
      %p234 = por %p232, %p233
      %s236 = sadd.s32 %s235, 1
      %p239 = scmp.eq.s32.totalorder %s28, 1
      %p240 = scmp.ne.s32.totalorder %s235, %s237
      %p241 = scmp.eq.s32.totalorder %s28, 0
      %p242 = por %p240, %p241
      %p243 = scmp.ne.s32.totalorder %s235, %s237
      %p244 = scmp.eq.s32.totalorder %s33, 1
      %p245 = por %p243, %p244
      %p246 = scmp.ne.s32.totalorder %s237, %s238
      %p247 = scmp.eq.s32.totalorder %s33, 0
      %p248 = por %p246, %p247
      %p249 = scmp.ne.s32.totalorder %s237, %s238
      %p250 = scmp.eq.s32.totalorder %s34, 1
      %p251 = por %p249, %p250
      %p253 = scmp.ne.s32.totalorder %s238, %s252
      %p254 = scmp.eq.s32.totalorder %s34, 0
      %p255 = por %p253, %p254
      %s257 = sadd.s32 %s256, 1
      %p260 = scmp.eq.s32.totalorder %s28, 1
      %p261 = scmp.ne.s32.totalorder %s256, %s258
      %p262 = scmp.eq.s32.totalorder %s28, 0
      %p263 = por %p261, %p262
      %p264 = scmp.ne.s32.totalorder %s256, %s258
      %p265 = scmp.eq.s32.totalorder %s33, 1
      %p266 = por %p264, %p265
      %p267 = scmp.ne.s32.totalorder %s258, %s259
      %p268 = scmp.eq.s32.totalorder %s33, 0
      %p269 = por %p267, %p268
      %p270 = scmp.ne.s32.totalorder %s258, %s259
      %p271 = scmp.eq.s32.totalorder %s34, 1
      %p272 = por %p270, %p271
      %p274 = scmp.ne.s32.totalorder %s259, %s273
      %p275 = scmp.eq.s32.totalorder %s34, 0
      %p276 = por %p274, %p275
      %s278 = sadd.s32 %s277, 1
      %p281 = scmp.eq.s32.totalorder %s28, 1
      %p282 = scmp.ne.s32.totalorder %s277, %s279
      %p283 = scmp.eq.s32.totalorder %s28, 0
      %p284 = por %p282, %p283
      %p285 = scmp.ne.s32.totalorder %s277, %s279
      %p286 = scmp.eq.s32.totalorder %s33, 1
      %p287 = por %p285, %p286
      %p288 = scmp.ne.s32.totalorder %s279, %s280
      %p289 = scmp.eq.s32.totalorder %s33, 0
      %p290 = por %p288, %p289
      %p291 = scmp.ne.s32.totalorder %s279, %s280
      %p292 = scmp.eq.s32.totalorder %s34, 1
      %p293 = por %p291, %p292
      %p295 = scmp.ne.s32.totalorder %s280, %s294
      %p296 = scmp.eq.s32.totalorder %s34, 0
      %p297 = por %p295, %p296
      %s299 = sadd.s32 %s298, 1
      %p302 = scmp.eq.s32.totalorder %s28, 1
      %p303 = scmp.ne.s32.totalorder %s298, %s300
      %p304 = scmp.eq.s32.totalorder %s28, 0
      %p305 = por %p303, %p304
      %p306 = scmp.ne.s32.totalorder %s298, %s300
      %p307 = scmp.eq.s32.totalorder %s33, 1
      %p308 = por %p306, %p307
      %p309 = scmp.ne.s32.totalorder %s300, %s301
      %p310 = scmp.eq.s32.totalorder %s33, 0
      %p311 = por %p309, %p310
      %p312 = scmp.ne.s32.totalorder %s300, %s301
      %p313 = scmp.eq.s32.totalorder %s34, 1
      %p314 = por %p312, %p313
      %p316 = scmp.ne.s32.totalorder %s301, %s315
      %p317 = scmp.eq.s32.totalorder %s34, 0
      %p318 = por %p316, %p317
      %s320 = sadd.s32 %s319, 1
      %p323 = scmp.eq.s32.totalorder %s28, 1
      %p324 = scmp.ne.s32.totalorder %s319, %s321
      %p325 = scmp.eq.s32.totalorder %s28, 0
      %p326 = por %p324, %p325
      %p327 = scmp.ne.s32.totalorder %s319, %s321
      %p328 = scmp.eq.s32.totalorder %s33, 1
      %p329 = por %p327, %p328
      %p330 = scmp.ne.s32.totalorder %s321, %s322
      %p331 = scmp.eq.s32.totalorder %s33, 0
      %p332 = por %p330, %p331
      %p333 = scmp.ne.s32.totalorder %s321, %s322
      %p334 = scmp.eq.s32.totalorder %s34, 1
      %p335 = por %p333, %p334
      %p337 = scmp.ne.s32.totalorder %s322, %s336
      %p338 = scmp.eq.s32.totalorder %s34, 0
      %p339 = por %p337, %p338
      %s341 = sadd.s32 %s340, 1
      %p344 = scmp.eq.s32.totalorder %s28, 1
      %p345 = scmp.ne.s32.totalorder %s340, %s342
      %p346 = scmp.eq.s32.totalorder %s28, 0
      %p347 = por %p345, %p346
      %p348 = scmp.ne.s32.totalorder %s340, %s342
      %p349 = scmp.eq.s32.totalorder %s33, 1
      %p350 = por %p348, %p349
      %p351 = scmp.ne.s32.totalorder %s342, %s343
      %p352 = scmp.eq.s32.totalorder %s33, 0
      %p353 = por %p351, %p352
      %p354 = scmp.ne.s32.totalorder %s342, %s343
      %p355 = scmp.eq.s32.totalorder %s34, 1
      %p356 = por %p354, %p355
      %p358 = scmp.ne.s32.totalorder %s343, %s357
      %p359 = scmp.eq.s32.totalorder %s34, 0
      %p360 = por %p358, %p359
      %s362 = sadd.s32 %s361, 1
      %p365 = scmp.eq.s32.totalorder %s28, 1
      %p366 = scmp.ne.s32.totalorder %s361, %s363
      %p367 = scmp.eq.s32.totalorder %s28, 0
      %p368 = por %p366, %p367
      %p369 = scmp.ne.s32.totalorder %s361, %s363
      %p370 = scmp.eq.s32.totalorder %s33, 1
      %p371 = por %p369, %p370
      %p372 = scmp.ne.s32.totalorder %s363, %s364
      %p373 = scmp.eq.s32.totalorder %s33, 0
      %p374 = por %p372, %p373
      %p375 = scmp.ne.s32.totalorder %s363, %s364
      %p376 = scmp.eq.s32.totalorder %s34, 1
      %p377 = por %p375, %p376
      %p379 = scmp.ne.s32.totalorder %s364, %s378
      %p380 = scmp.eq.s32.totalorder %s34, 0
      %p381 = por %p379, %p380
      %s383 = sadd.s32 %s382, 1
      %p386 = scmp.eq.s32.totalorder %s28, 1
      %p387 = scmp.ne.s32.totalorder %s382, %s384
      %p388 = scmp.eq.s32.totalorder %s28, 0
      %p389 = por %p387, %p388
      %p390 = scmp.ne.s32.totalorder %s382, %s384
      %p391 = scmp.eq.s32.totalorder %s33, 1
      %p392 = por %p390, %p391
      %p393 = scmp.ne.s32.totalorder %s384, %s385
      %p394 = scmp.eq.s32.totalorder %s33, 0
      %p395 = por %p393, %p394
      %p396 = scmp.ne.s32.totalorder %s384, %s385
      %p397 = scmp.eq.s32.totalorder %s34, 1
      %p398 = por %p396, %p397
      %p400 = scmp.ne.s32.totalorder %s385, %s399
      %p401 = scmp.eq.s32.totalorder %s34, 0
      %p402 = por %p400, %p401
      %s404 = sadd.s32 %s403, 1
      %p407 = scmp.eq.s32.totalorder %s28, 1
      %p408 = scmp.ne.s32.totalorder %s403, %s405
      %p409 = scmp.eq.s32.totalorder %s28, 0
      %p410 = por %p408, %p409
      %p411 = scmp.ne.s32.totalorder %s403, %s405
      %p412 = scmp.eq.s32.totalorder %s33, 1
      %p413 = por %p411, %p412
      %p414 = scmp.ne.s32.totalorder %s405, %s406
      %p415 = scmp.eq.s32.totalorder %s33, 0
      %p416 = por %p414, %p415
      %p417 = scmp.ne.s32.totalorder %s405, %s406
      %p418 = scmp.eq.s32.totalorder %s34, 1
      %p419 = por %p417, %p418
      %p421 = scmp.ne.s32.totalorder %s406, %s420
      %p422 = scmp.eq.s32.totalorder %s34, 0
      %p423 = por %p421, %p422
      %s424 = ssub.s32 %s28, %s35
      %p425 = scmp.eq.s32.totalorder %s424, 0
      %s427 = sadd.s32 %s426, 1
      %s428 = scalar_select %p425, %s426, %s427
      %p431 = pneg %p425
      %p432 = scmp.eq.s32.totalorder %s28, 1
      %p433 = por %p431, %p432
      %p434 = scmp.ne.s32.totalorder %s426, %s429
      %p435 = scmp.eq.s32.totalorder %s28, 0
      %p436 = por %p434, %p435
      %p437 = scmp.ne.s32.totalorder %s426, %s429
      %p438 = scmp.eq.s32.totalorder %s33, 1
      %p439 = por %p437, %p438
      %p440 = scmp.ne.s32.totalorder %s429, %s430
      %p441 = scmp.eq.s32.totalorder %s33, 0
      %p442 = por %p440, %p441
      %p443 = scmp.ne.s32.totalorder %s429, %s430
      %p444 = scmp.eq.s32.totalorder %s34, 1
      %p445 = por %p443, %p444
      %p447 = scmp.ne.s32.totalorder %s430, %s446
      %p448 = scmp.eq.s32.totalorder %s34, 0
      %p449 = por %p447, %p448
      %p450 = scmp.le.s32.totalorder 1, %s28
      %p451 = scmp.lt.s32.totalorder %s28, 3
      %p452 = pnand %p450, %p451
      %p453 = pneg %p452
      // Predicated region
      $region9: #{tpu_custom_call.1} parent=5 // pred_check
        _
      $region10: #{tpu_custom_call.1} parent=5 // pred_check_branch
        %455 = sbr.rel (%p452) target = $region12
      $region11: #{tpu_custom_call.1} parent=5 // pred_region
        %s456 = ssub.s32 %s28, 1
        // Predicated region
        $region13: #{tpu_custom_call.1} parent=11 // pred_check
          %p457 = pneg %p101
        $region14: #{tpu_custom_call.1} parent=11 // pred_check_branch
          %459 = sbr.rel (%p457) target = $region16
        $region15: #{tpu_custom_call.1} parent=11 // pred_region
          _
        $region16: #{tpu_custom_call.1} parent=11 // pred_fallthru
          _
        // Predicated region
        $region17: #{tpu_custom_call.1} parent=11 // pred_check
          %p460 = pneg %p122
        $region18: #{tpu_custom_call.1} parent=11 // pred_check_branch
          %462 = sbr.rel (%p460) target = $region20
        $region19: #{tpu_custom_call.1} parent=11 // pred_region
          _
        $region20: #{tpu_custom_call.1} parent=11 // pred_fallthru
          _
        // Predicated region
        $region21: #{tpu_custom_call.1} parent=11 // pred_check
          %p463 = pneg %p143
        $region22: #{tpu_custom_call.1} parent=11 // pred_check_branch
          %465 = sbr.rel (%p463) target = $region24
        $region23: #{tpu_custom_call.1} parent=11 // pred_region
          _
        $region24: #{tpu_custom_call.1} parent=11 // pred_fallthru
          _
        // Predicated region
        $region25: #{tpu_custom_call.1} parent=11 // pred_check
          %p466 = pneg %p164
        $region26: #{tpu_custom_call.1} parent=11 // pred_check_branch
          %468 = sbr.rel (%p466) target = $region28
        $region27: #{tpu_custom_call.1} parent=11 // pred_region
          _
        $region28: #{tpu_custom_call.1} parent=11 // pred_fallthru
          _
        // Predicated region
        $region29: #{tpu_custom_call.1} parent=11 // pred_check
          %p469 = pneg %p185
        $region30: #{tpu_custom_call.1} parent=11 // pred_check_branch
          %471 = sbr.rel (%p469) target = $region32
        $region31: #{tpu_custom_call.1} parent=11 // pred_region
          _
        $region32: #{tpu_custom_call.1} parent=11 // pred_fallthru
          _
        // Predicated region
        $region33: #{tpu_custom_call.1} parent=11 // pred_check
          %p472 = pneg %p206
        $region34: #{tpu_custom_call.1} parent=11 // pred_check_branch
          %474 = sbr.rel (%p472) target = $region36
        $region35: #{tpu_custom_call.1} parent=11 // pred_region
          _
        $region36: #{tpu_custom_call.1} parent=11 // pred_fallthru
          _
        // Predicated region
        $region37: #{tpu_custom_call.1} parent=11 // pred_check
          %p475 = pneg %p227
        $region38: #{tpu_custom_call.1} parent=11 // pred_check_branch
          %477 = sbr.rel (%p475) target = $region40
        $region39: #{tpu_custom_call.1} parent=11 // pred_region
          _
        $region40: #{tpu_custom_call.1} parent=11 // pred_fallthru
          _
        // Predicated region
        $region41: #{tpu_custom_call.1} parent=11 // pred_check
          %p478 = pneg %p248
        $region42: #{tpu_custom_call.1} parent=11 // pred_check_branch
          %480 = sbr.rel (%p478) target = $region44
        $region43: #{tpu_custom_call.1} parent=11 // pred_region
          _
        $region44: #{tpu_custom_call.1} parent=11 // pred_fallthru
          _
        // Predicated region
        $region45: #{tpu_custom_call.1} parent=11 // pred_check
          %p481 = pneg %p269
        $region46: #{tpu_custom_call.1} parent=11 // pred_check_branch
          %483 = sbr.rel (%p481) target = $region48
        $region47: #{tpu_custom_call.1} parent=11 // pred_region
          _
        $region48: #{tpu_custom_call.1} parent=11 // pred_fallthru
          _
        // Predicated region
        $region49: #{tpu_custom_call.1} parent=11 // pred_check
          %p484 = pneg %p290
        $region50: #{tpu_custom_call.1} parent=11 // pred_check_branch
          %486 = sbr.rel (%p484) target = $region52
        $region51: #{tpu_custom_call.1} parent=11 // pred_region
          _
        $region52: #{tpu_custom_call.1} parent=11 // pred_fallthru
          _
        // Predicated region
        $region53: #{tpu_custom_call.1} parent=11 // pred_check
          %p487 = pneg %p311
        $region54: #{tpu_custom_call.1} parent=11 // pred_check_branch
          %489 = sbr.rel (%p487) target = $region56
        $region55: #{tpu_custom_call.1} parent=11 // pred_region
          _
        $region56: #{tpu_custom_call.1} parent=11 // pred_fallthru
          _
        // Predicated region
        $region57: #{tpu_custom_call.1} parent=11 // pred_check
          %p490 = pneg %p332
        $region58: #{tpu_custom_call.1} parent=11 // pred_check_branch
          %492 = sbr.rel (%p490) target = $region60
        $region59: #{tpu_custom_call.1} parent=11 // pred_region
          %s494 = ssub.s32 4096, 4096
          %495 = vsyncadd [#allocation3], %s494
          %s496 = sshll.u32 [#allocation2], 4
          %s497 = int_to_ptr.vmem [resolvable:$true] %s496
          %502 = dma.hbm_to_vmem [thread:$0]  %s13, 4096, %s497, [#allocation3], 64, 64, 4
        $region60: #{tpu_custom_call.1} parent=11 // pred_fallthru
          _
        // Predicated region
        $region61: #{tpu_custom_call.1} parent=11 // pred_check
          %p503 = pneg %p353
        $region62: #{tpu_custom_call.1} parent=11 // pred_check_branch
          %505 = sbr.rel (%p503) target = $region64
        $region63: #{tpu_custom_call.1} parent=11 // pred_region
          _
        $region64: #{tpu_custom_call.1} parent=11 // pred_fallthru
          _
        // Predicated region
        $region65: #{tpu_custom_call.1} parent=11 // pred_check
          %p506 = pneg %p374
        $region66: #{tpu_custom_call.1} parent=11 // pred_check_branch
          %508 = sbr.rel (%p506) target = $region68
        $region67: #{tpu_custom_call.1} parent=11 // pred_region
          _
        $region68: #{tpu_custom_call.1} parent=11 // pred_fallthru
          _
        // Predicated region
        $region69: #{tpu_custom_call.1} parent=11 // pred_check
          %p509 = pneg %p395
        $region70: #{tpu_custom_call.1} parent=11 // pred_check_branch
          %511 = sbr.rel (%p509) target = $region72
        $region71: #{tpu_custom_call.1} parent=11 // pred_region
          _
        $region72: #{tpu_custom_call.1} parent=11 // pred_fallthru
          _
        // Predicated region
        $region73: #{tpu_custom_call.1} parent=11 // pred_check
          %p512 = pneg %p416
        $region74: #{tpu_custom_call.1} parent=11 // pred_check_branch
          %514 = sbr.rel (%p512) target = $region76
        $region75: #{tpu_custom_call.1} parent=11 // pred_region
          _
        $region76: #{tpu_custom_call.1} parent=11 // pred_fallthru
          _
      $region12: #{tpu_custom_call.1} parent=5 // pred_fallthru
        _
      %p515 = scmp.lt.s32.totalorder %s28, 2
      // Predicated region
      $region77: #{tpu_custom_call.1} parent=5 // pred_check
        %p516 = pneg %p515
      $region78: #{tpu_custom_call.1} parent=5 // pred_check_branch
        %518 = sbr.rel (%p516) target = $region80
      $region79: #{tpu_custom_call.1} parent=5 // pred_region
        // Predicated region
        $region81: #{tpu_custom_call.1} parent=79 // pred_check
          %p519 = pneg %p48
        $region82: #{tpu_custom_call.1} parent=79 // pred_check_branch
          %521 = sbr.rel (%p519) target = $region84
        $region83: #{tpu_custom_call.1} parent=79 // pred_region
          %p522 = scmp.lt.s32.totalorder %s28, 1
          %s523 = scalar_select %p522, %s28, 1
          %s524 = smul.addr %s523, 8
          %s525 = scalar_lea.vmem %s0, %s524
        $region84: #{tpu_custom_call.1} parent=79 // pred_fallthru
          _
        // Predicated region
        $region85: #{tpu_custom_call.1} parent=79 // pred_check
          %p526 = pneg %p74
        $region86: #{tpu_custom_call.1} parent=79 // pred_check_branch
          %528 = sbr.rel (%p526) target = $region88
        $region87: #{tpu_custom_call.1} parent=79 // pred_region
          %p529 = scmp.lt.s32.totalorder %s28, 1
          %s530 = scalar_select %p529, %s28, 1
          %s531 = scalar_lea.vmem %s1, %s530
        $region88: #{tpu_custom_call.1} parent=79 // pred_fallthru
          _
      $region80: #{tpu_custom_call.1} parent=5 // pred_fallthru
        _
      %p532 = scmp.le.s32.totalorder 1, %s28
      %p533 = scmp.lt.s32.totalorder %s28, 3
      %p534 = pnand %p532, %p533
      %p535 = pneg %p534
      // Predicated region
      $region89: #{tpu_custom_call.1} parent=5 // pred_check
        _
      $region90: #{tpu_custom_call.1} parent=5 // pred_check_branch
        %537 = sbr.rel (%p534) target = $region92
      $region91: #{tpu_custom_call.1} parent=5 // pred_region
        %s538 = ssub.s32 %s28, 1
        // Predicated region
        $region93: #{tpu_custom_call.1} parent=91 // pred_check
          %p539 = pneg %p332
        $region94: #{tpu_custom_call.1} parent=91 // pred_check_branch
          %541 = sbr.rel (%p539) target = $region96
        $region95: #{tpu_custom_call.1} parent=91 // pred_region
          %542 = dma.done [#allocation3], 4096
        $region96: #{tpu_custom_call.1} parent=91 // pred_fallthru
          _
        %p543 = scmp.lt.s32.totalorder %s33, 1
        %s544 = scalar_select %p543, %s33, 1
        %s545 = smul.addr %s544, 8
        %s546 = scalar_lea.vmem %s0, %s545
        %p547 = pneg %p54
        %p548 = pneg %p51
        %p549 = scmp.lt.s32.totalorder %s33, 1
        %s550 = scalar_select %p549, %s33, 1
        %s551 = scalar_lea.vmem %s1, %s550
        %p552 = pneg %p80
        %p553 = pneg %p77
        %p554 = pneg %p101
        %p555 = pneg %p98
        %p556 = pneg %p122
        %p557 = pneg %p119
        %p558 = pneg %p143
        %p559 = pneg %p140
        %p560 = pneg %p164
        %p561 = pneg %p161
        %p562 = pneg %p185
        %p563 = pneg %p182
        %p564 = pneg %p206
        %p565 = pneg %p203
        %p566 = pneg %p227
        %p567 = pneg %p224
        %p568 = pneg %p248
        %p569 = pneg %p245
        %p570 = pneg %p269
        %p571 = pneg %p266
        %p572 = pneg %p290
        %p573 = pneg %p287
        %p574 = pneg %p311
        %p575 = pneg %p308
        %p576 = pneg %p332
        %p577 = pneg %p329
        %p578 = pneg %p353
        %p579 = pneg %p350
        %p580 = pneg %p374
        %p581 = pneg %p371
        %p582 = pneg %p395
        %p583 = pneg %p392
        %p584 = pneg %p416
        %p585 = pneg %p413
        %p586 = pneg %p442
        %p587 = pneg %p439
        %s588 = sand.u32 %s429, 1
        %s589 = scalar_lea.sflag [#allocation4], %s588
        %s590 = sand.u32 %s429, 1
        %s591 = scalar_lea.vmem [#allocation5], %s590
        %p592 = scmp.lt.s32.totalorder %s33, 1
        %s593 = scalar_select %p592, %s33, 1
        %s594 = smul.addr %s593, 8
        %s595 = scalar_lea.vmem %s0, %s594
        %p596 = scmp.lt.s32.totalorder %s33, 1
        %s597 = scalar_select %p596, %s33, 1
        %s598 = scalar_lea.vmem %s1, %s597
        %v600 = vlaneseq
        %v601 = vand.u32 %v600, 127
        %vm602 = vcmp.lt.s32.totalorder %v601, 48
        %v603 = vsel %vm602, 1, 0
        %v604 = vcvt.s32.f32 %v603
        %v605 = vld [vmem:[%s598] sm:$0x1]
        %v606 = vld [vmem:[%s595] sm:$0xff]
        %v607 = vpack.c.bf16 %v606, %v606
        %v608 = vld [vmem:[%s2] sm:$0xf]
        %v609 = vld [vmem:[%s2 + $0x4] sm:$0xf]
        %v610 = vld [vmem:[%s2 + $0x8] sm:$0xf]
        %v611 = vld [vmem:[%s2 + $0xc] sm:$0xf]
        %v612 = vld [vmem:[%s2 + $0x10] sm:$0xf]
        %v613 = vld [vmem:[%s2 + $0x14] sm:$0xf]
        %v614 = vld [vmem:[%s2 + $0x18] sm:$0xf]
        %v615 = vld [vmem:[%s2 + $0x1c] sm:$0xf]
        %v616 = vld [vmem:[%s2 + $0x20] sm:$0xf]
        %v617 = vld [vmem:[%s2 + $0x24] sm:$0xf]
        %v618 = vld [vmem:[%s2 + $0x28] sm:$0xf]
        %v619 = vld [vmem:[%s2 + $0x2c] sm:$0xf]
        %v620 = vld [vmem:[%s2 + $0x30] sm:$0xf]
        %v621 = vld [vmem:[%s2 + $0x34] sm:$0xf]
        %v622 = vld [vmem:[%s2 + $0x38] sm:$0xf]
        %v623 = vld [vmem:[%s2 + $0x3c] sm:$0xf]
        %v640 = vunpack.c.l.b16 %v608
        %v641 = vunpack.c.l.b16 %v609
        %v642 = vunpack.c.l.b16 %v610
        %v643 = vunpack.c.l.b16 %v611
        %v644 = vunpack.c.l.b16 %v612
        %v645 = vunpack.c.l.b16 %v613
        %v646 = vunpack.c.l.b16 %v614
        %v647 = vunpack.c.l.b16 %v615
        %v648 = vunpack.c.l.b16 %v616
        %v649 = vunpack.c.l.b16 %v617
        %v650 = vunpack.c.l.b16 %v618
        %v651 = vunpack.c.l.b16 %v619
        %v652 = vunpack.c.l.b16 %v620
        %v653 = vunpack.c.l.b16 %v621
        %v654 = vunpack.c.l.b16 %v622
        %v655 = vunpack.c.l.b16 %v623
        %v656 = vpack.c.b16 %v641, %v640
        %v657 = vpack.c.b16 %v643, %v642
        %v658 = vpack.c.b16 %v645, %v644
        %v659 = vpack.c.b16 %v647, %v646
        %v660 = vpack.c.b16 %v649, %v648
        %v661 = vpack.c.b16 %v651, %v650
        %v662 = vpack.c.b16 %v653, %v652
        %v663 = vpack.c.b16 %v655, %v654
        %672 = vmatprep.subr.bf16.mxu0 0
        %673 = vmatpush1.bf16.msra.mxu0 %v656
        %674 = vmatprep.subr.bf16.mxu0 0
        %675 = vmatpush1.bf16.msra.mxu0 %v657
        %676 = vmatprep.subr.bf16.mxu0 0
        %677 = vmatpush1.bf16.msra.mxu0 %v658
        %678 = vmatprep.subr.bf16.mxu0 0
        %679 = vmatpush1.bf16.msra.mxu0 %v659
        %680 = vmatprep.subr.bf16.mxu0 0
        %681 = vmatpush1.bf16.msra.mxu0 %v660
        %682 = vmatprep.subr.bf16.mxu0 0
        %683 = vmatpush1.bf16.msra.mxu0 %v661
        %684 = vmatprep.subr.bf16.mxu0 0
        %685 = vmatpush1.bf16.msra.mxu0 %v662
        %686 = vmatprep.subr.bf16.mxu0 0
        %687 = vmatpush1.bf16.msra.mxu0 %v663
        %688 = vmatprep.subr.bf16.mxu0 0
        %689 = vmatpush1.bf16.msra.mxu0 0
        %690 = vmatprep.subr.bf16.mxu0 0
        %691 = vmatpush1.bf16.msra.mxu0 0
        %692 = vmatprep.subr.bf16.mxu0 0
        %693 = vmatpush1.bf16.msra.mxu0 0
        %694 = vmatprep.subr.bf16.mxu0 0
        %695 = vmatpush1.bf16.msra.mxu0 0
        %696 = vmatprep.subr.bf16.mxu0 0
        %697 = vmatpush1.bf16.msra.mxu0 0
        %698 = vmatprep.subr.bf16.mxu0 0
        %699 = vmatpush1.bf16.msra.mxu0 0
        %700 = vmatprep.subr.bf16.mxu0 0
        %701 = vmatpush1.bf16.msra.mxu0 0
        %702 = vmatprep.subr.bf16.mxu0 0
        %703 = vmatpush1.bf16.msra.mxu0 0
        %704 = vmatprep.mubr.bf16.mxu0 0
        %705 = vmatmul.mubr.bf16.gmra.mrb[0].mxu0 %v607
        %v706 = vpop.f32.mrb[0].mxu0
        %v707 = vadd.f32 0.0, %v706
        %v708 = vpop.f32.mrb[0].mxu0
        %v709 = vpop.f32.mrb[0].mxu0
        %v710 = vpop.f32.mrb[0].mxu0
        %711 = vdwg.mxu0
        %v712 = vld [vmem:[%s3] sm:$0x1]
        %v714 = vlaneseq
        %v715 = vshrl.u32 %v714, 7
        %v716 = vsub.s32 0, %v715
        %v717 = vrot.slane %v712, %v716
        %v719 = vmul.f32 %v707, %v717
        %v720 = vld [vmem:[%s4] sm:$0xff]
        %v721 = vadd.f32 %v719, %v720
        %v722 = vpack.c.bf16 %v721, %v721
        %v723 = vld [vmem:[%s5] sm:$0xff]
        %v724 = vld [vmem:[%s5 + $0x8] sm:$0xff]
        %v725 = vld [vmem:[%s5 + $0x10] sm:$0xff]
        %v726 = vld [vmem:[%s5 + $0x18] sm:$0xff]
        %v727 = vld [vmem:[%s5 + $0x20] sm:$0xff]
        %v728 = vld [vmem:[%s5 + $0x28] sm:$0xff]
        %v729 = vld [vmem:[%s5 + $0x30] sm:$0xff]
        %v730 = vld [vmem:[%s5 + $0x38] sm:$0xff]
        %v731 = vld [vmem:[%s5 + $0x40] sm:$0xff]
        %v732 = vld [vmem:[%s5 + $0x48] sm:$0xff]
        %v733 = vld [vmem:[%s5 + $0x50] sm:$0xff]
        %v734 = vld [vmem:[%s5 + $0x58] sm:$0xff]
        %v735 = vld [vmem:[%s5 + $0x60] sm:$0xff]
        %v736 = vld [vmem:[%s5 + $0x68] sm:$0xff]
        %v737 = vld [vmem:[%s5 + $0x70] sm:$0xff]
        %v738 = vld [vmem:[%s5 + $0x78] sm:$0xff]
        %v739 = vld [vmem:[%s6] sm:$0x3]
        %v741 = vlaneseq
        %v742 = vshrl.u32 %v741, 7
        %v743 = vsub.s32 0, %v742
        %v744 = vrot.slane %v739, %v743
        %v745 = vlaneseq
        %v746 = vshrl.u32 %v745, 7
        %v747 = vsub.s32 1, %v746
        %v748 = vrot.slane %v739, %v747
        %v767 = vunpack.c.l.b16 %v723
        %v768 = vunpack.c.h.b16 %v723
        %v769 = vunpack.c.l.b16 %v724
        %v770 = vunpack.c.h.b16 %v724
        %v771 = vunpack.c.l.b16 %v725
        %v772 = vunpack.c.h.b16 %v725
        %v773 = vunpack.c.l.b16 %v726
        %v774 = vunpack.c.h.b16 %v726
        %v775 = vunpack.c.l.b16 %v727
        %v776 = vunpack.c.h.b16 %v727
        %v777 = vunpack.c.l.b16 %v728
        %v778 = vunpack.c.h.b16 %v728
        %v779 = vunpack.c.l.b16 %v729
        %v780 = vunpack.c.h.b16 %v729
        %v781 = vunpack.c.l.b16 %v730
        %v782 = vunpack.c.h.b16 %v730
        %v783 = vunpack.c.l.b16 %v731
        %v784 = vunpack.c.h.b16 %v731
        %v785 = vunpack.c.l.b16 %v732
        %v786 = vunpack.c.h.b16 %v732
        %v787 = vunpack.c.l.b16 %v733
        %v788 = vunpack.c.h.b16 %v733
        %v789 = vunpack.c.l.b16 %v734
        %v790 = vunpack.c.h.b16 %v734
        %v791 = vunpack.c.l.b16 %v735
        %v792 = vunpack.c.h.b16 %v735
        %v793 = vunpack.c.l.b16 %v736
        %v794 = vunpack.c.h.b16 %v736
        %v795 = vunpack.c.l.b16 %v737
        %v796 = vunpack.c.h.b16 %v737
        %v797 = vunpack.c.l.b16 %v738
        %v798 = vunpack.c.h.b16 %v738
        %v799 = vpack.c.b16 %v769, %v767
        %v800 = vpack.c.b16 %v770, %v768
        %v801 = vpack.c.b16 %v773, %v771
        %v802 = vpack.c.b16 %v774, %v772
        %v803 = vpack.c.b16 %v777, %v775
        %v804 = vpack.c.b16 %v778, %v776
        %v805 = vpack.c.b16 %v781, %v779
        %v806 = vpack.c.b16 %v782, %v780
        %v807 = vpack.c.b16 %v785, %v783
        %v808 = vpack.c.b16 %v786, %v784
        %v809 = vpack.c.b16 %v789, %v787
        %v810 = vpack.c.b16 %v790, %v788
        %v811 = vpack.c.b16 %v793, %v791
        %v812 = vpack.c.b16 %v794, %v792
        %v813 = vpack.c.b16 %v797, %v795
        %v814 = vpack.c.b16 %v798, %v796
        %831 = vmatprep.subr.bf16.mxu0 %v800
        %832 = vmatpush1.bf16.msra.mxu0 %v799
        %833 = vmatprep.subr.bf16.mxu0 %v802
        %834 = vmatpush1.bf16.msra.mxu0 %v801
        %835 = vmatprep.subr.bf16.mxu0 %v804
        %836 = vmatpush1.bf16.msra.mxu0 %v803
        %837 = vmatprep.subr.bf16.mxu0 %v806
        %838 = vmatpush1.bf16.msra.mxu0 %v805
        %839 = vmatprep.subr.bf16.mxu0 %v808
        %840 = vmatpush1.bf16.msra.mxu0 %v807
        %841 = vmatprep.subr.bf16.mxu0 %v810
        %842 = vmatpush1.bf16.msra.mxu0 %v809
        %843 = vmatprep.subr.bf16.mxu0 %v812
        %844 = vmatpush1.bf16.msra.mxu0 %v811
        %845 = vmatprep.subr.bf16.mxu0 %v814
        %846 = vmatpush1.bf16.msra.mxu0 %v813
        %847 = vmatprep.subr.bf16.mxu0 0
        %848 = vmatpush1.bf16.msra.mxu0 0
        %849 = vmatprep.subr.bf16.mxu0 0
        %850 = vmatpush1.bf16.msra.mxu0 0
        %851 = vmatprep.subr.bf16.mxu0 0
        %852 = vmatpush1.bf16.msra.mxu0 0
        %853 = vmatprep.subr.bf16.mxu0 0
        %854 = vmatpush1.bf16.msra.mxu0 0
        %855 = vmatprep.subr.bf16.mxu0 0
        %856 = vmatpush1.bf16.msra.mxu0 0
        %857 = vmatprep.subr.bf16.mxu0 0
        %858 = vmatpush1.bf16.msra.mxu0 0
        %859 = vmatprep.subr.bf16.mxu0 0
        %860 = vmatpush1.bf16.msra.mxu0 0
        %861 = vmatprep.subr.bf16.mxu0 0
        %862 = vmatpush1.bf16.msra.mxu0 0
        %863 = vmatprep.mubr.bf16.mxu0 0
        %864 = vmatmul.mubr.bf16.gmra.mrb[0].mxu0 %v722
        %v865 = vpop.f32.mrb[0].mxu0
        %v866 = vadd.f32 %v744, %v865
        %v867 = vpop.f32.mrb[0].mxu0
        %v868 = vadd.f32 %v748, %v867
        %v869 = vpop.f32.mrb[0].mxu0
        %v870 = vpop.f32.mrb[0].mxu0
        %871 = vdwg.mxu0
        %v872 = vpack.c.bf16 %v866, %v866
        %874 = vrot.lane.b32.xlu0 %v872, 80
        %v875 = vpop.permute.xlu0 %874
        %vm876 = vcmask 130048
        %v878 = vsel %vm876, %v872, 0
        %v881 = vsel %vm876, %v875, 0
        %883 = vmatprep.subr.bf16.mxu0 0
        %884 = vmatpush1.bf16.xpose.msra.mxu0 %v881
        %885 = vmatprep.subr.bf16.mxu0 0
        %886 = vmatpush1.bf16.xpose.msra.mxu0 0
        %887 = vmatprep.subr.bf16.mxu0 0
        %888 = vmatpush1.bf16.xpose.msra.mxu0 0
        %889 = vmatprep.subr.bf16.mxu0 0
        %890 = vmatpush1.bf16.xpose.msra.mxu0 0
        %891 = vmatprep.subr.bf16.mxu0 0
        %892 = vmatpush1.bf16.xpose.msra.mxu0 0
        %893 = vmatprep.subr.bf16.mxu0 0
        %894 = vmatpush1.bf16.xpose.msra.mxu0 0
        %895 = vmatprep.subr.bf16.mxu0 0
        %896 = vmatpush1.bf16.xpose.msra.mxu0 0
        %897 = vmatprep.subr.bf16.mxu0 0
        %898 = vmatpush1.bf16.xpose.msra.mxu0 0
        %899 = vmatprep.subr.bf16.mxu0 0
        %900 = vmatpush1.bf16.xpose.msra.mxu0 0
        %901 = vmatprep.subr.bf16.mxu0 0
        %902 = vmatpush1.bf16.xpose.msra.mxu0 0
        %903 = vmatprep.subr.bf16.mxu0 0
        %904 = vmatpush1.bf16.xpose.msra.mxu0 0
        %905 = vmatprep.subr.bf16.mxu0 0
        %906 = vmatpush1.bf16.xpose.msra.mxu0 0
        %907 = vmatprep.subr.bf16.mxu0 0
        %908 = vmatpush1.bf16.xpose.msra.mxu0 0
        %909 = vmatprep.subr.bf16.mxu0 0
        %910 = vmatpush1.bf16.xpose.msra.mxu0 0
        %911 = vmatprep.subr.bf16.mxu0 0
        %912 = vmatpush1.bf16.xpose.msra.mxu0 0
        %913 = vmatprep.subr.bf16.mxu0 0
        %914 = vmatpush1.bf16.xpose.msra.mxu0 0
        %915 = vmatprep.mubr.bf16.mxu0 0
        %916 = vmatmul.mubr.bf16.gmra.mrb[0].mxu0 %v878
        %v917 = vpop.f32.mrb[0].mxu0
        %v918 = vadd.f32 0.0, %v917
        %v919 = vpop.f32.mrb[0].mxu0
        %v920 = vpop.f32.mrb[0].mxu0
        %v921 = vpop.f32.mrb[0].mxu0
        %922 = vdwg.mxu0
        %v923 = vmul.f32 %v918, 0.25
        %v925 = vlaneseq
        %v926 = vshrl.u32 %v925, 7
        %v927 = vsub.s32 0, %v926
        %v928 = vrot.slane %v605, %v927
        %v930 = vadd.f32 %v923, %v928
        %vm931 = vcmask 64512
        %v932 = vsel %vm931, %v930, -inf
        %933 = vmax.xlane.f32.xlu0 %v932
        %v934 = vpop.xlane.xlu0 %933
        %v935 = vsub.f32 %v930, %v934
        %v936 = vmul.f32 %v935, 1.442695
        %v937 = vpow.pop %v936
        %v938 = vsel %vm931, %v937, 0.0
        %939 = vadd.xlane.f32.xlu0 %v938
        %v940 = vpop.xlane.xlu0 %939
        %v941 = vrcp.pop %v940
        %v942 = vmul.f32 %v937, %v941
        %v943 = vpack.c.bf16 %v942, %v942
        %944 = vrot.lane.b32.xlu0 %v872, 32
        %v945 = vpop.permute.xlu0 %944
        %v947 = vsel %vm931, %v943, 0
        %vm949 = vcmask 1043456
        %v951 = vsel %vm949, %v945, 0
        %953 = vmatprep.subr.bf16.mxu0 0
        %954 = vmatpush1.bf16.msra.mxu0 %v951
        %955 = vmatprep.subr.bf16.mxu0 0
        %956 = vmatpush1.bf16.msra.mxu0 0
        %957 = vmatprep.subr.bf16.mxu0 0
        %958 = vmatpush1.bf16.msra.mxu0 0
        %959 = vmatprep.subr.bf16.mxu0 0
        %960 = vmatpush1.bf16.msra.mxu0 0
        %961 = vmatprep.subr.bf16.mxu0 0
        %962 = vmatpush1.bf16.msra.mxu0 0
        %963 = vmatprep.subr.bf16.mxu0 0
        %964 = vmatpush1.bf16.msra.mxu0 0
        %965 = vmatprep.subr.bf16.mxu0 0
        %966 = vmatpush1.bf16.msra.mxu0 0
        %967 = vmatprep.subr.bf16.mxu0 0
        %968 = vmatpush1.bf16.msra.mxu0 0
        %969 = vmatprep.subr.bf16.mxu0 0
        %970 = vmatpush1.bf16.msra.mxu0 0
        %971 = vmatprep.subr.bf16.mxu0 0
        %972 = vmatpush1.bf16.msra.mxu0 0
        %973 = vmatprep.subr.bf16.mxu0 0
        %974 = vmatpush1.bf16.msra.mxu0 0
        %975 = vmatprep.subr.bf16.mxu0 0
        %976 = vmatpush1.bf16.msra.mxu0 0
        %977 = vmatprep.subr.bf16.mxu0 0
        %978 = vmatpush1.bf16.msra.mxu0 0
        %979 = vmatprep.subr.bf16.mxu0 0
        %980 = vmatpush1.bf16.msra.mxu0 0
        %981 = vmatprep.subr.bf16.mxu0 0
        %982 = vmatpush1.bf16.msra.mxu0 0
        %983 = vmatprep.subr.bf16.mxu0 0
        %984 = vmatpush1.bf16.msra.mxu0 0
        %985 = vmatprep.mubr.bf16.mxu0 0
        %986 = vmatmul.mubr.bf16.gmra.mrb[0].mxu0 %v947
        %v987 = vpop.f32.mrb[0].mxu0
        %v988 = vadd.f32 0.0, %v987
        %v989 = vpop.f32.mrb[0].mxu0
        %v990 = vpop.f32.mrb[0].mxu0
        %v991 = vpop.f32.mrb[0].mxu0
        %992 = vdwg.mxu0
        %993 = vrot.lane.b32.xlu0 %v872, 112
        %v994 = vpop.permute.xlu0 %993
        %995 = vrot.lane.b32.xlu0 %v872, 64
        %v996 = vpop.permute.xlu0 %995
        %v998 = vsel %vm876, %v994, 0
        %v1001 = vsel %vm876, %v996, 0
        %1003 = vmatprep.subr.bf16.mxu0 0
        %1004 = vmatpush1.bf16.xpose.msra.mxu0 %v1001
        %1005 = vmatprep.subr.bf16.mxu0 0
        %1006 = vmatpush1.bf16.xpose.msra.mxu0 0
        %1007 = vmatprep.subr.bf16.mxu0 0
        %1008 = vmatpush1.bf16.xpose.msra.mxu0 0
        %1009 = vmatprep.subr.bf16.mxu0 0
        %1010 = vmatpush1.bf16.xpose.msra.mxu0 0
        %1011 = vmatprep.subr.bf16.mxu0 0
        %1012 = vmatpush1.bf16.xpose.msra.mxu0 0
        %1013 = vmatprep.subr.bf16.mxu0 0
        %1014 = vmatpush1.bf16.xpose.msra.mxu0 0
        %1015 = vmatprep.subr.bf16.mxu0 0
        %1016 = vmatpush1.bf16.xpose.msra.mxu0 0
        %1017 = vmatprep.subr.bf16.mxu0 0
        %1018 = vmatpush1.bf16.xpose.msra.mxu0 0
        %1019 = vmatprep.subr.bf16.mxu0 0
        %1020 = vmatpush1.bf16.xpose.msra.mxu0 0
        %1021 = vmatprep.subr.bf16.mxu0 0
        %1022 = vmatpush1.bf16.xpose.msra.mxu0 0
        %1023 = vmatprep.subr.bf16.mxu0 0
        %1024 = vmatpush1.bf16.xpose.msra.mxu0 0
        %1025 = vmatprep.subr.bf16.mxu0 0
        %1026 = vmatpush1.bf16.xpose.msra.mxu0 0
        %1027 = vmatprep.subr.bf16.mxu0 0
        %1028 = vmatpush1.bf16.xpose.msra.mxu0 0
        %1029 = vmatprep.subr.bf16.mxu0 0
        %1030 = vmatpush1.bf16.xpose.msra.mxu0 0
        %1031 = vmatprep.subr.bf16.mxu0 0
        %1032 = vmatpush1.bf16.xpose.msra.mxu0 0
        %1033 = vmatprep.subr.bf16.mxu0 0
        %1034 = vmatpush1.bf16.xpose.msra.mxu0 0
        %1035 = vmatprep.mubr.bf16.mxu0 0
        %1036 = vmatmul.mubr.bf16.gmra.mrb[0].mxu0 %v998
        %v1037 = vpop.f32.mrb[0].mxu0
        %v1038 = vadd.f32 0.0, %v1037
        %v1039 = vpop.f32.mrb[0].mxu0
        %v1040 = vpop.f32.mrb[0].mxu0
        %v1041 = vpop.f32.mrb[0].mxu0
        %1042 = vdwg.mxu0
        %v1043 = vmul.f32 %v1038, 0.25
        %v1044 = vadd.f32 %v1043, %v928
        %v1045 = vsel %vm931, %v1044, -inf
        %1046 = vmax.xlane.f32.xlu0 %v1045
        %v1047 = vpop.xlane.xlu0 %1046
        %v1048 = vsub.f32 %v1044, %v1047
        %v1049 = vmul.f32 %v1048, 1.442695
        %v1050 = vpow.pop %v1049
        %v1051 = vsel %vm931, %v1050, 0.0
        %1052 = vadd.xlane.f32.xlu0 %v1051
        %v1053 = vpop.xlane.xlu0 %1052
        %v1054 = vrcp.pop %v1053
        %v1055 = vmul.f32 %v1050, %v1054
        %v1056 = vpack.c.bf16 %v1055, %v1055
        %1057 = vrot.lane.b32.xlu0 %v872, 16
        %v1058 = vpop.permute.xlu0 %1057
        %v1060 = vsel %vm931, %v1056, 0
        %v1063 = vsel %vm949, %v1058, 0
        %1065 = vmatprep.subr.bf16.mxu0 0
        %1066 = vmatpush1.bf16.msra.mxu0 %v1063
        %1067 = vmatprep.subr.bf16.mxu0 0
        %1068 = vmatpush1.bf16.msra.mxu0 0
        %1069 = vmatprep.subr.bf16.mxu0 0
        %1070 = vmatpush1.bf16.msra.mxu0 0
        %1071 = vmatprep.subr.bf16.mxu0 0
        %1072 = vmatpush1.bf16.msra.mxu0 0
        %1073 = vmatprep.subr.bf16.mxu0 0
        %1074 = vmatpush1.bf16.msra.mxu0 0
        %1075 = vmatprep.subr.bf16.mxu0 0
        %1076 = vmatpush1.bf16.msra.mxu0 0
        %1077 = vmatprep.subr.bf16.mxu0 0
        %1078 = vmatpush1.bf16.msra.mxu0 0
        %1079 = vmatprep.subr.bf16.mxu0 0
        %1080 = vmatpush1.bf16.msra.mxu0 0
        %1081 = vmatprep.subr.bf16.mxu0 0
        %1082 = vmatpush1.bf16.msra.mxu0 0
        %1083 = vmatprep.subr.bf16.mxu0 0
        %1084 = vmatpush1.bf16.msra.mxu0 0
        %1085 = vmatprep.subr.bf16.mxu0 0
        %1086 = vmatpush1.bf16.msra.mxu0 0
        %1087 = vmatprep.subr.bf16.mxu0 0
        %1088 = vmatpush1.bf16.msra.mxu0 0
        %1089 = vmatprep.subr.bf16.mxu0 0
        %1090 = vmatpush1.bf16.msra.mxu0 0
        %1091 = vmatprep.subr.bf16.mxu0 0
        %1092 = vmatpush1.bf16.msra.mxu0 0
        %1093 = vmatprep.subr.bf16.mxu0 0
        %1094 = vmatpush1.bf16.msra.mxu0 0
        %1095 = vmatprep.subr.bf16.mxu0 0
        %1096 = vmatpush1.bf16.msra.mxu0 0
        %1097 = vmatprep.mubr.bf16.mxu0 0
        %1098 = vmatmul.mubr.bf16.gmra.mrb[0].mxu0 %v1060
        %v1099 = vpop.f32.mrb[0].mxu0
        %v1100 = vadd.f32 0.0, %v1099
        %v1101 = vpop.f32.mrb[0].mxu0
        %v1102 = vpop.f32.mrb[0].mxu0
        %v1103 = vpop.f32.mrb[0].mxu0
        %1104 = vdwg.mxu0
        %v1105 = vpack.c.bf16 %v868, %v868
        %1106 = vrot.lane.b32.xlu0 %v872, 96
        %v1107 = vpop.permute.xlu0 %1106
        %1108 = vrot.lane.b32.xlu0 %v872, 48
        %v1109 = vpop.permute.xlu0 %1108
        %v1111 = vsel %vm876, %v1107, 0
        %v1114 = vsel %vm876, %v1109, 0
        %1116 = vmatprep.subr.bf16.mxu0 0
        %1117 = vmatpush1.bf16.xpose.msra.mxu0 %v1114
        %1118 = vmatprep.subr.bf16.mxu0 0
        %1119 = vmatpush1.bf16.xpose.msra.mxu0 0
        %1120 = vmatprep.subr.bf16.mxu0 0
        %1121 = vmatpush1.bf16.xpose.msra.mxu0 0
        %1122 = vmatprep.subr.bf16.mxu0 0
        %1123 = vmatpush1.bf16.xpose.msra.mxu0 0
        %1124 = vmatprep.subr.bf16.mxu0 0
        %1125 = vmatpush1.bf16.xpose.msra.mxu0 0
        %1126 = vmatprep.subr.bf16.mxu0 0
        %1127 = vmatpush1.bf16.xpose.msra.mxu0 0
        %1128 = vmatprep.subr.bf16.mxu0 0
        %1129 = vmatpush1.bf16.xpose.msra.mxu0 0
        %1130 = vmatprep.subr.bf16.mxu0 0
        %1131 = vmatpush1.bf16.xpose.msra.mxu0 0
        %1132 = vmatprep.subr.bf16.mxu0 0
        %1133 = vmatpush1.bf16.xpose.msra.mxu0 0
        %1134 = vmatprep.subr.bf16.mxu0 0
        %1135 = vmatpush1.bf16.xpose.msra.mxu0 0
        %1136 = vmatprep.subr.bf16.mxu0 0
        %1137 = vmatpush1.bf16.xpose.msra.mxu0 0
        %1138 = vmatprep.subr.bf16.mxu0 0
        %1139 = vmatpush1.bf16.xpose.msra.mxu0 0
        %1140 = vmatprep.subr.bf16.mxu0 0
        %1141 = vmatpush1.bf16.xpose.msra.mxu0 0
        %1142 = vmatprep.subr.bf16.mxu0 0
        %1143 = vmatpush1.bf16.xpose.msra.mxu0 0
        %1144 = vmatprep.subr.bf16.mxu0 0
        %1145 = vmatpush1.bf16.xpose.msra.mxu0 0
        %1146 = vmatprep.subr.bf16.mxu0 0
        %1147 = vmatpush1.bf16.xpose.msra.mxu0 0
        %1148 = vmatprep.mubr.bf16.mxu0 0
        %1149 = vmatmul.mubr.bf16.gmra.mrb[0].mxu0 %v1111
        %v1150 = vpop.f32.mrb[0].mxu0
        %v1151 = vadd.f32 0.0, %v1150
        %v1152 = vpop.f32.mrb[0].mxu0
        %v1153 = vpop.f32.mrb[0].mxu0
        %v1154 = vpop.f32.mrb[0].mxu0
        %1155 = vdwg.mxu0
        %v1156 = vmul.f32 %v1151, 0.25
        %v1157 = vadd.f32 %v1156, %v928
        %v1158 = vsel %vm931, %v1157, -inf
        %1159 = vmax.xlane.f32.xlu0 %v1158
        %v1160 = vpop.xlane.xlu0 %1159
        %v1161 = vsub.f32 %v1157, %v1160
        %v1162 = vmul.f32 %v1161, 1.442695
        %v1163 = vpow.pop %v1162
        %v1164 = vsel %vm931, %v1163, 0.0
        %1165 = vadd.xlane.f32.xlu0 %v1164
        %v1166 = vpop.xlane.xlu0 %1165
        %v1167 = vrcp.pop %v1166
        %v1168 = vmul.f32 %v1163, %v1167
        %v1169 = vpack.c.bf16 %v1168, %v1168
        %v1171 = vsel %vm931, %v1169, 0
        %v1174 = vsel %vm949, %v1105, 0
        %1176 = vmatprep.subr.bf16.mxu0 0
        %1177 = vmatpush1.bf16.msra.mxu0 %v1174
        %1178 = vmatprep.subr.bf16.mxu0 0
        %1179 = vmatpush1.bf16.msra.mxu0 0
        %1180 = vmatprep.subr.bf16.mxu0 0
        %1181 = vmatpush1.bf16.msra.mxu0 0
        %1182 = vmatprep.subr.bf16.mxu0 0
        %1183 = vmatpush1.bf16.msra.mxu0 0
        %1184 = vmatprep.subr.bf16.mxu0 0
        %1185 = vmatpush1.bf16.msra.mxu0 0
        %1186 = vmatprep.subr.bf16.mxu0 0
        %1187 = vmatpush1.bf16.msra.mxu0 0
        %1188 = vmatprep.subr.bf16.mxu0 0
        %1189 = vmatpush1.bf16.msra.mxu0 0
        %1190 = vmatprep.subr.bf16.mxu0 0
        %1191 = vmatpush1.bf16.msra.mxu0 0
        %1192 = vmatprep.subr.bf16.mxu0 0
        %1193 = vmatpush1.bf16.msra.mxu0 0
        %1194 = vmatprep.subr.bf16.mxu0 0
        %1195 = vmatpush1.bf16.msra.mxu0 0
        %1196 = vmatprep.subr.bf16.mxu0 0
        %1197 = vmatpush1.bf16.msra.mxu0 0
        %1198 = vmatprep.subr.bf16.mxu0 0
        %1199 = vmatpush1.bf16.msra.mxu0 0
        %1200 = vmatprep.subr.bf16.mxu0 0
        %1201 = vmatpush1.bf16.msra.mxu0 0
        %1202 = vmatprep.subr.bf16.mxu0 0
        %1203 = vmatpush1.bf16.msra.mxu0 0
        %1204 = vmatprep.subr.bf16.mxu0 0
        %1205 = vmatpush1.bf16.msra.mxu0 0
        %1206 = vmatprep.subr.bf16.mxu0 0
        %1207 = vmatpush1.bf16.msra.mxu0 0
        %1208 = vmatprep.mubr.bf16.mxu0 0
        %1209 = vmatmul.mubr.bf16.gmra.mrb[0].mxu0 %v1171
        %v1210 = vpop.f32.mrb[0].mxu0
        %v1211 = vadd.f32 0.0, %v1210
        %v1212 = vpop.f32.mrb[0].mxu0
        %v1213 = vpop.f32.mrb[0].mxu0
        %v1214 = vpop.f32.mrb[0].mxu0
        %1215 = vdwg.mxu0
        %1217 = vrot.lane.b32.xlu0 %v1100, 16
        %v1218 = vpop.permute.xlu0 %1217
        %1221 = vrot.lane.b32.xlu0 %v1211, 32
        %v1222 = vpop.permute.xlu0 %1221
        %v1224 = vsel %vm876, %v988, %v1218
        %vm1225 = vcmask 261120
        %v1226 = vsel %vm1225, %v1224, %v1222
        %v1227 = vpack.c.bf16 %v1226, %v1226
        %v1228 = vld [vmem:[%s7] sm:$0xf]
        %v1229 = vld [vmem:[%s7 + $0x4] sm:$0xf]
        %v1230 = vld [vmem:[%s7 + $0x8] sm:$0xf]
        %v1231 = vld [vmem:[%s7 + $0xc] sm:$0xf]
        %v1232 = vld [vmem:[%s7 + $0x10] sm:$0xf]
        %v1233 = vld [vmem:[%s7 + $0x14] sm:$0xf]
        %v1234 = vld [vmem:[%s8] sm:$0x1]
        %v1236 = vlaneseq
        %v1237 = vshrl.u32 %v1236, 7
        %v1238 = vsub.s32 0, %v1237
        %v1239 = vrot.slane %v1234, %v1238
        %v1247 = vunpack.c.l.b16 %v1228
        %v1248 = vunpack.c.l.b16 %v1229
        %v1249 = vunpack.c.l.b16 %v1230
        %v1250 = vunpack.c.l.b16 %v1231
        %v1251 = vunpack.c.l.b16 %v1232
        %v1252 = vunpack.c.l.b16 %v1233
        %v1253 = vpack.c.b16 %v1248, %v1247
        %v1254 = vpack.c.b16 %v1250, %v1249
        %v1255 = vpack.c.b16 %v1252, %v1251
        %vm1259 = vcmask 392192
        %v1261 = vsel %vm1259, %v1227, 0
        %1263 = vmatprep.subr.bf16.mxu0 0
        %1264 = vmatpush1.bf16.msra.mxu0 %v1253
        %1265 = vmatprep.subr.bf16.mxu0 0
        %1266 = vmatpush1.bf16.msra.mxu0 %v1254
        %1267 = vmatprep.subr.bf16.mxu0 0
        %1268 = vmatpush1.bf16.msra.mxu0 %v1255
        %1269 = vmatprep.subr.bf16.mxu0 0
        %1270 = vmatpush1.bf16.msra.mxu0 0
        %1271 = vmatprep.subr.bf16.mxu0 0
        %1272 = vmatpush1.bf16.msra.mxu0 0
        %1273 = vmatprep.subr.bf16.mxu0 0
        %1274 = vmatpush1.bf16.msra.mxu0 0
        %1275 = vmatprep.subr.bf16.mxu0 0
        %1276 = vmatpush1.bf16.msra.mxu0 0
        %1277 = vmatprep.subr.bf16.mxu0 0
        %1278 = vmatpush1.bf16.msra.mxu0 0
        %1279 = vmatprep.subr.bf16.mxu0 0
        %1280 = vmatpush1.bf16.msra.mxu0 0
        %1281 = vmatprep.subr.bf16.mxu0 0
        %1282 = vmatpush1.bf16.msra.mxu0 0
        %1283 = vmatprep.subr.bf16.mxu0 0
        %1284 = vmatpush1.bf16.msra.mxu0 0
        %1285 = vmatprep.subr.bf16.mxu0 0
        %1286 = vmatpush1.bf16.msra.mxu0 0
        %1287 = vmatprep.subr.bf16.mxu0 0
        %1288 = vmatpush1.bf16.msra.mxu0 0
        %1289 = vmatprep.subr.bf16.mxu0 0
        %1290 = vmatpush1.bf16.msra.mxu0 0
        %1291 = vmatprep.subr.bf16.mxu0 0
        %1292 = vmatpush1.bf16.msra.mxu0 0
        %1293 = vmatprep.subr.bf16.mxu0 0
        %1294 = vmatpush1.bf16.msra.mxu0 0
        %1295 = vmatprep.mubr.bf16.mxu0 0
        %1296 = vmatmul.mubr.bf16.gmra.mrb[0].mxu0 %v1261
        %v1297 = vpop.f32.mrb[0].mxu0
        %v1298 = vadd.f32 %v1239, %v1297
        %v1299 = vpop.f32.mrb[0].mxu0
        %v1300 = vpop.f32.mrb[0].mxu0
        %v1301 = vpop.f32.mrb[0].mxu0
        %1302 = vdwg.mxu0
        %v1303 = vadd.f32 %v721, %v1298
        %v1304 = vld [vmem:[%s9] sm:$0x1]
        %v1305 = vld [vmem:[%s10] sm:$0x1]
        %1306 = vadd.xlane.f32.xlu0 %v1303
        %v1307 = vpop.xlane.xlu0 %1306
        %v1308 = vmul.f32 %v1307, 0.020833334
        %v1309 = vsub.f32 %v1303, %v1308
        %v1310 = vmul.f32 %v1309, %v604
        %v1311 = vmul.f32 %v1310, %v1310
        %1312 = vadd.xlane.f32.xlu0 %v1311
        %v1313 = vpop.xlane.xlu0 %1312
        %v1314 = vmul.f32 %v1313, 0.020833334
        %v1315 = vadd.f32 %v1314, 1e-05
        %v1316 = vrsqrt.pop %v1315
        %v1317 = vmul.f32 %v1310, %v1316
        %v1319 = vlaneseq
        %v1320 = vshrl.u32 %v1319, 7
        %v1321 = vsub.s32 0, %v1320
        %v1322 = vrot.slane %v1304, %v1321
        %v1324 = vmul.f32 %v1317, %v1322
        %v1326 = vlaneseq
        %v1327 = vshrl.u32 %v1326, 7
        %v1328 = vsub.s32 0, %v1327
        %v1329 = vrot.slane %v1305, %v1328
        %v1331 = vadd.f32 %v1324, %v1329
        %v1332 = vpack.c.bf16 %v1331, %v1331
        %v1333 = vld [vmem:[%s11] sm:$0xff]
        %v1334 = vld [vmem:[%s11 + $0x8] sm:$0xff]
        %v1335 = vld [vmem:[%s11 + $0x10] sm:$0xff]
        %v1336 = vld [vmem:[%s11 + $0x18] sm:$0xff]
        %v1337 = vld [vmem:[%s11 + $0x20] sm:$0xff]
        %v1338 = vld [vmem:[%s11 + $0x28] sm:$0xff]
        %v1339 = vld [vmem:[%s11 + $0x30] sm:$0xff]
        %v1340 = vld [vmem:[%s11 + $0x38] sm:$0xff]
        %v1341 = vld [vmem:[%s11 + $0x40] sm:$0xff]
        %v1342 = vld [vmem:[%s11 + $0x48] sm:$0xff]
        %v1343 = vld [vmem:[%s11 + $0x50] sm:$0xff]
        %v1344 = vld [vmem:[%s11 + $0x58] sm:$0xff]
        %v1345 = vld [vmem:[%s11 + $0x60] sm:$0xff]
        %v1346 = vld [vmem:[%s11 + $0x68] sm:$0xff]
        %v1347 = vld [vmem:[%s11 + $0x70] sm:$0xff]
        %v1348 = vld [vmem:[%s11 + $0x78] sm:$0xff]
        %v1349 = vld [vmem:[%s12] sm:$0x3]
        %v1351 = vlaneseq
        %v1352 = vshrl.u32 %v1351, 7
        %v1353 = vsub.s32 0, %v1352
        %v1354 = vrot.slane %v1349, %v1353
        %v1355 = vlaneseq
        %v1356 = vshrl.u32 %v1355, 7
        %v1357 = vsub.s32 1, %v1356
        %v1358 = vrot.slane %v1349, %v1357
        %v1377 = vunpack.c.l.b16 %v1333
        %v1378 = vunpack.c.h.b16 %v1333
        %v1379 = vunpack.c.l.b16 %v1334
        %v1380 = vunpack.c.h.b16 %v1334
        %v1381 = vunpack.c.l.b16 %v1335
        %v1382 = vunpack.c.h.b16 %v1335
        %v1383 = vunpack.c.l.b16 %v1336
        %v1384 = vunpack.c.h.b16 %v1336
        %v1385 = vunpack.c.l.b16 %v1337
        %v1386 = vunpack.c.h.b16 %v1337
        %v1387 = vunpack.c.l.b16 %v1338
        %v1388 = vunpack.c.h.b16 %v1338
        %v1389 = vunpack.c.l.b16 %v1339
        %v1390 = vunpack.c.h.b16 %v1339
        %v1391 = vunpack.c.l.b16 %v1340
        %v1392 = vunpack.c.h.b16 %v1340
        %v1393 = vunpack.c.l.b16 %v1341
        %v1394 = vunpack.c.h.b16 %v1341
        %v1395 = vunpack.c.l.b16 %v1342
        %v1396 = vunpack.c.h.b16 %v1342
        %v1397 = vunpack.c.l.b16 %v1343
        %v1398 = vunpack.c.h.b16 %v1343
        %v1399 = vunpack.c.l.b16 %v1344
        %v1400 = vunpack.c.h.b16 %v1344
        %v1401 = vunpack.c.l.b16 %v1345
        %v1402 = vunpack.c.h.b16 %v1345
        %v1403 = vunpack.c.l.b16 %v1346
        %v1404 = vunpack.c.h.b16 %v1346
        %v1405 = vunpack.c.l.b16 %v1347
        %v1406 = vunpack.c.h.b16 %v1347
        %v1407 = vunpack.c.l.b16 %v1348
        %v1408 = vunpack.c.h.b16 %v1348
        %v1409 = vpack.c.b16 %v1379, %v1377
        %v1410 = vpack.c.b16 %v1380, %v1378
        %v1411 = vpack.c.b16 %v1383, %v1381
        %v1412 = vpack.c.b16 %v1384, %v1382
        %v1413 = vpack.c.b16 %v1387, %v1385
        %v1414 = vpack.c.b16 %v1388, %v1386
        %v1415 = vpack.c.b16 %v1391, %v1389
        %v1416 = vpack.c.b16 %v1392, %v1390
        %v1417 = vpack.c.b16 %v1395, %v1393
        %v1418 = vpack.c.b16 %v1396, %v1394
        %v1419 = vpack.c.b16 %v1399, %v1397
        %v1420 = vpack.c.b16 %v1400, %v1398
        %v1421 = vpack.c.b16 %v1403, %v1401
        %v1422 = vpack.c.b16 %v1404, %v1402
        %v1423 = vpack.c.b16 %v1407, %v1405
        %v1424 = vpack.c.b16 %v1408, %v1406
        %1441 = vmatprep.subr.bf16.mxu0 %v1410
        %1442 = vmatpush1.bf16.msra.mxu0 %v1409
        %1443 = vmatprep.subr.bf16.mxu0 %v1412
        %1444 = vmatpush1.bf16.msra.mxu0 %v1411
        %1445 = vmatprep.subr.bf16.mxu0 %v1414
        %1446 = vmatpush1.bf16.msra.mxu0 %v1413
        %1447 = vmatprep.subr.bf16.mxu0 %v1416
        %1448 = vmatpush1.bf16.msra.mxu0 %v1415
        %1449 = vmatprep.subr.bf16.mxu0 %v1418
        %1450 = vmatpush1.bf16.msra.mxu0 %v1417
        %1451 = vmatprep.subr.bf16.mxu0 %v1420
        %1452 = vmatpush1.bf16.msra.mxu0 %v1419
        %1453 = vmatprep.subr.bf16.mxu0 %v1422
        %1454 = vmatpush1.bf16.msra.mxu0 %v1421
        %1455 = vmatprep.subr.bf16.mxu0 %v1424
        %1456 = vmatpush1.bf16.msra.mxu0 %v1423
        %1457 = vmatprep.subr.bf16.mxu0 0
        %1458 = vmatpush1.bf16.msra.mxu0 0
        %1459 = vmatprep.subr.bf16.mxu0 0
        %1460 = vmatpush1.bf16.msra.mxu0 0
        %1461 = vmatprep.subr.bf16.mxu0 0
        %1462 = vmatpush1.bf16.msra.mxu0 0
        %1463 = vmatprep.subr.bf16.mxu0 0
        %1464 = vmatpush1.bf16.msra.mxu0 0
        %1465 = vmatprep.subr.bf16.mxu0 0
        %1466 = vmatpush1.bf16.msra.mxu0 0
        %1467 = vmatprep.subr.bf16.mxu0 0
        %1468 = vmatpush1.bf16.msra.mxu0 0
        %1469 = vmatprep.subr.bf16.mxu0 0
        %1470 = vmatpush1.bf16.msra.mxu0 0
        %1471 = vmatprep.subr.bf16.mxu0 0
        %1472 = vmatpush1.bf16.msra.mxu0 0
        %1473 = vmatprep.mubr.bf16.mxu0 0
        %1474 = vmatmul.mubr.bf16.gmra.mrb[0].mxu0 %v1332
        %v1475 = vpop.f32.mrb[0].mxu0
        %v1476 = vadd.f32 %v1354, %v1475
        %v1477 = vpop.f32.mrb[0].mxu0
        %v1478 = vadd.f32 %v1358, %v1477
        %v1479 = vpop.f32.mrb[0].mxu0
        %v1480 = vpop.f32.mrb[0].mxu0
        %1481 = vdwg.mxu0
        %v1482 = vmax.f32 %v1476, 0.0
        %v1483 = vmax.f32 %v1478, 0.0
        %v1484 = vpack.c.bf16 %v1482, %v1482
        %v1485 = vpack.c.bf16 %v1483, %v1483
        %v1486 = vld [vmem:[#allocation2] sm:$0xf]
        %v1487 = vld [vmem:[#allocation2 + $0x4] sm:$0xf]
        %v1488 = vld [vmem:[#allocation2 + $0x8] sm:$0xf]
        %v1489 = vld [vmem:[#allocation2 + $0xc] sm:$0xf]
        %v1490 = vld [vmem:[#allocation2 + $0x10] sm:$0xf]
        %v1491 = vld [vmem:[#allocation2 + $0x14] sm:$0xf]
        %v1492 = vld [vmem:[#allocation2 + $0x18] sm:$0xf]
        %v1493 = vld [vmem:[#allocation2 + $0x1c] sm:$0xf]
        %v1494 = vld [vmem:[#allocation2 + $0x20] sm:$0xf]
        %v1495 = vld [vmem:[#allocation2 + $0x24] sm:$0xf]
        %v1496 = vld [vmem:[#allocation2 + $0x28] sm:$0xf]
        %v1497 = vld [vmem:[#allocation2 + $0x2c] sm:$0xf]
        %v1498 = vld [vmem:[#allocation2 + $0x30] sm:$0xf]
        %v1499 = vld [vmem:[#allocation2 + $0x34] sm:$0xf]
        %v1500 = vld [vmem:[#allocation2 + $0x38] sm:$0xf]
        %v1501 = vld [vmem:[#allocation2 + $0x3c] sm:$0xf]
        %v1502 = vld [vmem:[#allocation2 + $0x40] sm:$0xf]
        %v1503 = vld [vmem:[#allocation2 + $0x44] sm:$0xf]
        %v1504 = vld [vmem:[#allocation2 + $0x48] sm:$0xf]
        %v1505 = vld [vmem:[#allocation2 + $0x4c] sm:$0xf]
        %v1506 = vld [vmem:[#allocation2 + $0x50] sm:$0xf]
        %v1507 = vld [vmem:[#allocation2 + $0x54] sm:$0xf]
        %v1508 = vld [vmem:[#allocation2 + $0x58] sm:$0xf]
        %v1509 = vld [vmem:[#allocation2 + $0x5c] sm:$0xf]
        %v1510 = vld [vmem:[#allocation2 + $0x60] sm:$0xf]
        %v1511 = vld [vmem:[#allocation2 + $0x64] sm:$0xf]
        %v1512 = vld [vmem:[#allocation2 + $0x68] sm:$0xf]
        %v1513 = vld [vmem:[#allocation2 + $0x6c] sm:$0xf]
        %v1514 = vld [vmem:[#allocation2 + $0x70] sm:$0xf]
        %v1515 = vld [vmem:[#allocation2 + $0x74] sm:$0xf]
        %v1516 = vld [vmem:[#allocation2 + $0x78] sm:$0xf]
        %v1517 = vld [vmem:[#allocation2 + $0x7c] sm:$0xf]
        %v1518 = vld [vmem:[%s14] sm:$0x1]
        %v1520 = vlaneseq
        %v1521 = vshrl.u32 %v1520, 7
        %v1522 = vsub.s32 0, %v1521
        %v1523 = vrot.slane %v1518, %v1522
        %v1557 = vunpack.c.l.b16 %v1486
        %v1558 = vunpack.c.l.b16 %v1487
        %v1559 = vunpack.c.l.b16 %v1488
        %v1560 = vunpack.c.l.b16 %v1489
        %v1561 = vunpack.c.l.b16 %v1490
        %v1562 = vunpack.c.l.b16 %v1491
        %v1563 = vunpack.c.l.b16 %v1492
        %v1564 = vunpack.c.l.b16 %v1493
        %v1565 = vunpack.c.l.b16 %v1494
        %v1566 = vunpack.c.l.b16 %v1495
        %v1567 = vunpack.c.l.b16 %v1496
        %v1568 = vunpack.c.l.b16 %v1497
        %v1569 = vunpack.c.l.b16 %v1498
        %v1570 = vunpack.c.l.b16 %v1499
        %v1571 = vunpack.c.l.b16 %v1500
        %v1572 = vunpack.c.l.b16 %v1501
        %v1573 = vunpack.c.l.b16 %v1502
        %v1574 = vunpack.c.l.b16 %v1503
        %v1575 = vunpack.c.l.b16 %v1504
        %v1576 = vunpack.c.l.b16 %v1505
        %v1577 = vunpack.c.l.b16 %v1506
        %v1578 = vunpack.c.l.b16 %v1507
        %v1579 = vunpack.c.l.b16 %v1508
        %v1580 = vunpack.c.l.b16 %v1509
        %v1581 = vunpack.c.l.b16 %v1510
        %v1582 = vunpack.c.l.b16 %v1511
        %v1583 = vunpack.c.l.b16 %v1512
        %v1584 = vunpack.c.l.b16 %v1513
        %v1585 = vunpack.c.l.b16 %v1514
        %v1586 = vunpack.c.l.b16 %v1515
        %v1587 = vunpack.c.l.b16 %v1516
        %v1588 = vunpack.c.l.b16 %v1517
        %v1589 = vpack.c.b16 %v1558, %v1557
        %v1590 = vpack.c.b16 %v1560, %v1559
        %v1591 = vpack.c.b16 %v1562, %v1561
        %v1592 = vpack.c.b16 %v1564, %v1563
        %v1593 = vpack.c.b16 %v1566, %v1565
        %v1594 = vpack.c.b16 %v1568, %v1567
        %v1595 = vpack.c.b16 %v1570, %v1569
        %v1596 = vpack.c.b16 %v1572, %v1571
        %v1597 = vpack.c.b16 %v1574, %v1573
        %v1598 = vpack.c.b16 %v1576, %v1575
        %v1599 = vpack.c.b16 %v1578, %v1577
        %v1600 = vpack.c.b16 %v1580, %v1579
        %v1601 = vpack.c.b16 %v1582, %v1581
        %v1602 = vpack.c.b16 %v1584, %v1583
        %v1603 = vpack.c.b16 %v1586, %v1585
        %v1604 = vpack.c.b16 %v1588, %v1587
        %1621 = vmatprep.subr.bf16.mxu0 0
        %1622 = vmatpush1.bf16.msra.mxu0 %v1589
        %1623 = vmatprep.subr.bf16.mxu0 0
        %1624 = vmatpush1.bf16.msra.mxu0 %v1590
        %1625 = vmatprep.subr.bf16.mxu0 0
        %1626 = vmatpush1.bf16.msra.mxu0 %v1591
        %1627 = vmatprep.subr.bf16.mxu0 0
        %1628 = vmatpush1.bf16.msra.mxu0 %v1592
        %1629 = vmatprep.subr.bf16.mxu0 0
        %1630 = vmatpush1.bf16.msra.mxu0 %v1593
        %1631 = vmatprep.subr.bf16.mxu0 0
        %1632 = vmatpush1.bf16.msra.mxu0 %v1594
        %1633 = vmatprep.subr.bf16.mxu0 0
        %1634 = vmatpush1.bf16.msra.mxu0 %v1595
        %1635 = vmatprep.subr.bf16.mxu0 0
        %1636 = vmatpush1.bf16.msra.mxu0 %v1596
        %1637 = vmatprep.subr.bf16.mxu0 0
        %1638 = vmatpush1.bf16.msra.mxu0 %v1597
        %1639 = vmatprep.subr.bf16.mxu0 0
        %1640 = vmatpush1.bf16.msra.mxu0 %v1598
        %1641 = vmatprep.subr.bf16.mxu0 0
        %1642 = vmatpush1.bf16.msra.mxu0 %v1599
        %1643 = vmatprep.subr.bf16.mxu0 0
        %1644 = vmatpush1.bf16.msra.mxu0 %v1600
        %1645 = vmatprep.subr.bf16.mxu0 0
        %1646 = vmatpush1.bf16.msra.mxu0 %v1601
        %1647 = vmatprep.subr.bf16.mxu0 0
        %1648 = vmatpush1.bf16.msra.mxu0 %v1602
        %1649 = vmatprep.subr.bf16.mxu0 0
        %1650 = vmatpush1.bf16.msra.mxu0 %v1603
        %1651 = vmatprep.subr.bf16.mxu0 0
        %1652 = vmatpush1.bf16.msra.mxu0 %v1604
        %1653 = vmatprep.mubr.bf16.mxu0 %v1485
        %1654 = vmatmul.mubr.bf16.gmra.mrb[0].mxu0 %v1484
        %v1655 = vpop.f32.mrb[0].mxu0
        %v1656 = vadd.f32 %v1523, %v1655
        %v1657 = vpop.f32.mrb[0].mxu0
        %v1658 = vpop.f32.mrb[0].mxu0
        %v1659 = vpop.f32.mrb[0].mxu0
        %1660 = vdwg.mxu0
        %v1661 = vadd.f32 %v1331, %v1656
        %v1662 = vld [vmem:[%s15] sm:$0x1]
        %v1663 = vld [vmem:[%s16] sm:$0x1]
        %1664 = vadd.xlane.f32.xlu0 %v1661
        %v1665 = vpop.xlane.xlu0 %1664
        %v1666 = vmul.f32 %v1665, 0.020833334
        %v1667 = vsub.f32 %v1661, %v1666
        %v1668 = vmul.f32 %v1667, %v604
        %v1669 = vmul.f32 %v1668, %v1668
        %1670 = vadd.xlane.f32.xlu0 %v1669
        %v1671 = vpop.xlane.xlu0 %1670
        %v1672 = vmul.f32 %v1671, 0.020833334
        %v1673 = vadd.f32 %v1672, 1e-05
        %v1674 = vrsqrt.pop %v1673
        %v1675 = vmul.f32 %v1668, %v1674
        %v1677 = vlaneseq
        %v1678 = vshrl.u32 %v1677, 7
        %v1679 = vsub.s32 0, %v1678
        %v1680 = vrot.slane %v1662, %v1679
        %v1682 = vmul.f32 %v1675, %v1680
        %v1684 = vlaneseq
        %v1685 = vshrl.u32 %v1684, 7
        %v1686 = vsub.s32 0, %v1685
        %v1687 = vrot.slane %v1663, %v1686
        %v1689 = vadd.f32 %v1682, %v1687
        %v1690 = vpack.c.bf16 %v1689, %v1689
        %s1691 = scalar_lea.vmem %s5, 128
        %v1692 = vld [vmem:[%s1691] sm:$0xff]
        %v1693 = vld [vmem:[%s1691 + $0x8] sm:$0xff]
        %v1694 = vld [vmem:[%s1691 + $0x10] sm:$0xff]
        %v1695 = vld [vmem:[%s1691 + $0x18] sm:$0xff]
        %v1696 = vld [vmem:[%s1691 + $0x20] sm:$0xff]
        %v1697 = vld [vmem:[%s1691 + $0x28] sm:$0xff]
        %v1698 = vld [vmem:[%s1691 + $0x30] sm:$0xff]
        %v1699 = vld [vmem:[%s1691 + $0x38] sm:$0xff]
        %v1700 = vld [vmem:[%s1691 + $0x40] sm:$0xff]
        %v1701 = vld [vmem:[%s1691 + $0x48] sm:$0xff]
        %v1702 = vld [vmem:[%s1691 + $0x50] sm:$0xff]
        %v1703 = vld [vmem:[%s1691 + $0x58] sm:$0xff]
        %v1704 = vld [vmem:[%s1691 + $0x60] sm:$0xff]
        %v1705 = vld [vmem:[%s1691 + $0x68] sm:$0xff]
        %v1706 = vld [vmem:[%s1691 + $0x70] sm:$0xff]
        %v1707 = vld [vmem:[%s1691 + $0x78] sm:$0xff]
        %s1708 = scalar_lea.vmem %s6, 2
        %v1709 = vld [vmem:[%s1708] sm:$0x3]
        %v1711 = vlaneseq
        %v1712 = vshrl.u32 %v1711, 7
        %v1713 = vsub.s32 0, %v1712
        %v1714 = vrot.slane %v1709, %v1713
        %v1715 = vlaneseq
        %v1716 = vshrl.u32 %v1715, 7
        %v1717 = vsub.s32 1, %v1716
        %v1718 = vrot.slane %v1709, %v1717
        %v1737 = vunpack.c.l.b16 %v1692
        %v1738 = vunpack.c.h.b16 %v1692
        %v1739 = vunpack.c.l.b16 %v1693
        %v1740 = vunpack.c.h.b16 %v1693
        %v1741 = vunpack.c.l.b16 %v1694
        %v1742 = vunpack.c.h.b16 %v1694
        %v1743 = vunpack.c.l.b16 %v1695
        %v1744 = vunpack.c.h.b16 %v1695
        %v1745 = vunpack.c.l.b16 %v1696
        %v1746 = vunpack.c.h.b16 %v1696
        %v1747 = vunpack.c.l.b16 %v1697
        %v1748 = vunpack.c.h.b16 %v1697
        %v1749 = vunpack.c.l.b16 %v1698
        %v1750 = vunpack.c.h.b16 %v1698
        %v1751 = vunpack.c.l.b16 %v1699
        %v1752 = vunpack.c.h.b16 %v1699
        %v1753 = vunpack.c.l.b16 %v1700
        %v1754 = vunpack.c.h.b16 %v1700
        %v1755 = vunpack.c.l.b16 %v1701
        %v1756 = vunpack.c.h.b16 %v1701
        %v1757 = vunpack.c.l.b16 %v1702
        %v1758 = vunpack.c.h.b16 %v1702
        %v1759 = vunpack.c.l.b16 %v1703
        %v1760 = vunpack.c.h.b16 %v1703
        %v1761 = vunpack.c.l.b16 %v1704
        %v1762 = vunpack.c.h.b16 %v1704
        %v1763 = vunpack.c.l.b16 %v1705
        %v1764 = vunpack.c.h.b16 %v1705
        %v1765 = vunpack.c.l.b16 %v1706
        %v1766 = vunpack.c.h.b16 %v1706
        %v1767 = vunpack.c.l.b16 %v1707
        %v1768 = vunpack.c.h.b16 %v1707
        %v1769 = vpack.c.b16 %v1739, %v1737
        %v1770 = vpack.c.b16 %v1740, %v1738
        %v1771 = vpack.c.b16 %v1743, %v1741
        %v1772 = vpack.c.b16 %v1744, %v1742
        %v1773 = vpack.c.b16 %v1747, %v1745
        %v1774 = vpack.c.b16 %v1748, %v1746
        %v1775 = vpack.c.b16 %v1751, %v1749
        %v1776 = vpack.c.b16 %v1752, %v1750
        %v1777 = vpack.c.b16 %v1755, %v1753
        %v1778 = vpack.c.b16 %v1756, %v1754
        %v1779 = vpack.c.b16 %v1759, %v1757
        %v1780 = vpack.c.b16 %v1760, %v1758
        %v1781 = vpack.c.b16 %v1763, %v1761
        %v1782 = vpack.c.b16 %v1764, %v1762
        %v1783 = vpack.c.b16 %v1767, %v1765
        %v1784 = vpack.c.b16 %v1768, %v1766
        %1801 = vmatprep.subr.bf16.mxu0 %v1770
        %1802 = vmatpush1.bf16.msra.mxu0 %v1769
        %1803 = vmatprep.subr.bf16.mxu0 %v1772
        %1804 = vmatpush1.bf16.msra.mxu0 %v1771
        %1805 = vmatprep.subr.bf16.mxu0 %v1774
        %1806 = vmatpush1.bf16.msra.mxu0 %v1773
        %1807 = vmatprep.subr.bf16.mxu0 %v1776
        %1808 = vmatpush1.bf16.msra.mxu0 %v1775
        %1809 = vmatprep.subr.bf16.mxu0 %v1778
        %1810 = vmatpush1.bf16.msra.mxu0 %v1777
        %1811 = vmatprep.subr.bf16.mxu0 %v1780
        %1812 = vmatpush1.bf16.msra.mxu0 %v1779
        %1813 = vmatprep.subr.bf16.mxu0 %v1782
        %1814 = vmatpush1.bf16.msra.mxu0 %v1781
        %1815 = vmatprep.subr.bf16.mxu0 %v1784
        %1816 = vmatpush1.bf16.msra.mxu0 %v1783
        %1817 = vmatprep.subr.bf16.mxu0 0
        %1818 = vmatpush1.bf16.msra.mxu0 0
        %1819 = vmatprep.subr.bf16.mxu0 0
        %1820 = vmatpush1.bf16.msra.mxu0 0
        %1821 = vmatprep.subr.bf16.mxu0 0
        %1822 = vmatpush1.bf16.msra.mxu0 0
        %1823 = vmatprep.subr.bf16.mxu0 0
        %1824 = vmatpush1.bf16.msra.mxu0 0
        %1825 = vmatprep.subr.bf16.mxu0 0
        %1826 = vmatpush1.bf16.msra.mxu0 0
        %1827 = vmatprep.subr.bf16.mxu0 0
        %1828 = vmatpush1.bf16.msra.mxu0 0
        %1829 = vmatprep.subr.bf16.mxu0 0
        %1830 = vmatpush1.bf16.msra.mxu0 0
        %1831 = vmatprep.subr.bf16.mxu0 0
        %1832 = vmatpush1.bf16.msra.mxu0 0
        %1833 = vmatprep.mubr.bf16.mxu0 0
        %1834 = vmatmul.mubr.bf16.gmra.mrb[0].mxu0 %v1690
        %v1835 = vpop.f32.mrb[0].mxu0
        %v1836 = vadd.f32 %v1714, %v1835
        %v1837 = vpop.f32.mrb[0].mxu0
        %v1838 = vadd.f32 %v1718, %v1837
        %v1839 = vpop.f32.mrb[0].mxu0
        %v1840 = vpop.f32.mrb[0].mxu0
        %1841 = vdwg.mxu0
        %v1842 = vpack.c.bf16 %v1836, %v1836
        %1844 = vrot.lane.b32.xlu0 %v1842, 80
        %v1845 = vpop.permute.xlu0 %1844
        %v1847 = vsel %vm876, %v1842, 0
        %v1850 = vsel %vm876, %v1845, 0
        %1852 = vmatprep.subr.bf16.mxu0 0
        %1853 = vmatpush1.bf16.xpose.msra.mxu0 %v1850
        %1854 = vmatprep.subr.bf16.mxu0 0
        %1855 = vmatpush1.bf16.xpose.msra.mxu0 0
        %1856 = vmatprep.subr.bf16.mxu0 0
        %1857 = vmatpush1.bf16.xpose.msra.mxu0 0
        %1858 = vmatprep.subr.bf16.mxu0 0
        %1859 = vmatpush1.bf16.xpose.msra.mxu0 0
        %1860 = vmatprep.subr.bf16.mxu0 0
        %1861 = vmatpush1.bf16.xpose.msra.mxu0 0
        %1862 = vmatprep.subr.bf16.mxu0 0
        %1863 = vmatpush1.bf16.xpose.msra.mxu0 0
        %1864 = vmatprep.subr.bf16.mxu0 0
        %1865 = vmatpush1.bf16.xpose.msra.mxu0 0
        %1866 = vmatprep.subr.bf16.mxu0 0
        %1867 = vmatpush1.bf16.xpose.msra.mxu0 0
        %1868 = vmatprep.subr.bf16.mxu0 0
        %1869 = vmatpush1.bf16.xpose.msra.mxu0 0
        %1870 = vmatprep.subr.bf16.mxu0 0
        %1871 = vmatpush1.bf16.xpose.msra.mxu0 0
        %1872 = vmatprep.subr.bf16.mxu0 0
        %1873 = vmatpush1.bf16.xpose.msra.mxu0 0
        %1874 = vmatprep.subr.bf16.mxu0 0
        %1875 = vmatpush1.bf16.xpose.msra.mxu0 0
        %1876 = vmatprep.subr.bf16.mxu0 0
        %1877 = vmatpush1.bf16.xpose.msra.mxu0 0
        %1878 = vmatprep.subr.bf16.mxu0 0
        %1879 = vmatpush1.bf16.xpose.msra.mxu0 0
        %1880 = vmatprep.subr.bf16.mxu0 0
        %1881 = vmatpush1.bf16.xpose.msra.mxu0 0
        %1882 = vmatprep.subr.bf16.mxu0 0
        %1883 = vmatpush1.bf16.xpose.msra.mxu0 0
        %1884 = vmatprep.mubr.bf16.mxu0 0
        %1885 = vmatmul.mubr.bf16.gmra.mrb[0].mxu0 %v1847
        %v1886 = vpop.f32.mrb[0].mxu0
        %v1887 = vadd.f32 0.0, %v1886
        %v1888 = vpop.f32.mrb[0].mxu0
        %v1889 = vpop.f32.mrb[0].mxu0
        %v1890 = vpop.f32.mrb[0].mxu0
        %1891 = vdwg.mxu0
        %v1892 = vmul.f32 %v1887, 0.25
        %v1893 = vadd.f32 %v1892, %v928
        %v1894 = vsel %vm931, %v1893, -inf
        %1895 = vmax.xlane.f32.xlu0 %v1894
        %v1896 = vpop.xlane.xlu0 %1895
        %v1897 = vsub.f32 %v1893, %v1896
        %v1898 = vmul.f32 %v1897, 1.442695
        %v1899 = vpow.pop %v1898
        %v1900 = vsel %vm931, %v1899, 0.0
        %1901 = vadd.xlane.f32.xlu0 %v1900
        %v1902 = vpop.xlane.xlu0 %1901
        %v1903 = vrcp.pop %v1902
        %v1904 = vmul.f32 %v1899, %v1903
        %v1905 = vpack.c.bf16 %v1904, %v1904
        %1906 = vrot.lane.b32.xlu0 %v1842, 32
        %v1907 = vpop.permute.xlu0 %1906
        %v1909 = vsel %vm931, %v1905, 0
        %v1912 = vsel %vm949, %v1907, 0
        %1914 = vmatprep.subr.bf16.mxu0 0
        %1915 = vmatpush1.bf16.msra.mxu0 %v1912
        %1916 = vmatprep.subr.bf16.mxu0 0
        %1917 = vmatpush1.bf16.msra.mxu0 0
        %1918 = vmatprep.subr.bf16.mxu0 0
        %1919 = vmatpush1.bf16.msra.mxu0 0
        %1920 = vmatprep.subr.bf16.mxu0 0
        %1921 = vmatpush1.bf16.msra.mxu0 0
        %1922 = vmatprep.subr.bf16.mxu0 0
        %1923 = vmatpush1.bf16.msra.mxu0 0
        %1924 = vmatprep.subr.bf16.mxu0 0
        %1925 = vmatpush1.bf16.msra.mxu0 0
        %1926 = vmatprep.subr.bf16.mxu0 0
        %1927 = vmatpush1.bf16.msra.mxu0 0
        %1928 = vmatprep.subr.bf16.mxu0 0
        %1929 = vmatpush1.bf16.msra.mxu0 0
        %1930 = vmatprep.subr.bf16.mxu0 0
        %1931 = vmatpush1.bf16.msra.mxu0 0
        %1932 = vmatprep.subr.bf16.mxu0 0
        %1933 = vmatpush1.bf16.msra.mxu0 0
        %1934 = vmatprep.subr.bf16.mxu0 0
        %1935 = vmatpush1.bf16.msra.mxu0 0
        %1936 = vmatprep.subr.bf16.mxu0 0
        %1937 = vmatpush1.bf16.msra.mxu0 0
        %1938 = vmatprep.subr.bf16.mxu0 0
        %1939 = vmatpush1.bf16.msra.mxu0 0
        %1940 = vmatprep.subr.bf16.mxu0 0
        %1941 = vmatpush1.bf16.msra.mxu0 0
        %1942 = vmatprep.subr.bf16.mxu0 0
        %1943 = vmatpush1.bf16.msra.mxu0 0
        %1944 = vmatprep.subr.bf16.mxu0 0
        %1945 = vmatpush1.bf16.msra.mxu0 0
        %1946 = vmatprep.mubr.bf16.mxu0 0
        %1947 = vmatmul.mubr.bf16.gmra.mrb[0].mxu0 %v1909
        %v1948 = vpop.f32.mrb[0].mxu0
        %v1949 = vadd.f32 0.0, %v1948
        %v1950 = vpop.f32.mrb[0].mxu0
        %v1951 = vpop.f32.mrb[0].mxu0
        %v1952 = vpop.f32.mrb[0].mxu0
        %1953 = vdwg.mxu0
        %1954 = vrot.lane.b32.xlu0 %v1842, 112
        %v1955 = vpop.permute.xlu0 %1954
        %1956 = vrot.lane.b32.xlu0 %v1842, 64
        %v1957 = vpop.permute.xlu0 %1956
        %v1959 = vsel %vm876, %v1955, 0
        %v1962 = vsel %vm876, %v1957, 0
        %1964 = vmatprep.subr.bf16.mxu0 0
        %1965 = vmatpush1.bf16.xpose.msra.mxu0 %v1962
        %1966 = vmatprep.subr.bf16.mxu0 0
        %1967 = vmatpush1.bf16.xpose.msra.mxu0 0
        %1968 = vmatprep.subr.bf16.mxu0 0
        %1969 = vmatpush1.bf16.xpose.msra.mxu0 0
        %1970 = vmatprep.subr.bf16.mxu0 0
        %1971 = vmatpush1.bf16.xpose.msra.mxu0 0
        %1972 = vmatprep.subr.bf16.mxu0 0
        %1973 = vmatpush1.bf16.xpose.msra.mxu0 0
        %1974 = vmatprep.subr.bf16.mxu0 0
        %1975 = vmatpush1.bf16.xpose.msra.mxu0 0
        %1976 = vmatprep.subr.bf16.mxu0 0
        %1977 = vmatpush1.bf16.xpose.msra.mxu0 0
        %1978 = vmatprep.subr.bf16.mxu0 0
        %1979 = vmatpush1.bf16.xpose.msra.mxu0 0
        %1980 = vmatprep.subr.bf16.mxu0 0
        %1981 = vmatpush1.bf16.xpose.msra.mxu0 0
        %1982 = vmatprep.subr.bf16.mxu0 0
        %1983 = vmatpush1.bf16.xpose.msra.mxu0 0
        %1984 = vmatprep.subr.bf16.mxu0 0
        %1985 = vmatpush1.bf16.xpose.msra.mxu0 0
        %1986 = vmatprep.subr.bf16.mxu0 0
        %1987 = vmatpush1.bf16.xpose.msra.mxu0 0
        %1988 = vmatprep.subr.bf16.mxu0 0
        %1989 = vmatpush1.bf16.xpose.msra.mxu0 0
        %1990 = vmatprep.subr.bf16.mxu0 0
        %1991 = vmatpush1.bf16.xpose.msra.mxu0 0
        %1992 = vmatprep.subr.bf16.mxu0 0
        %1993 = vmatpush1.bf16.xpose.msra.mxu0 0
        %1994 = vmatprep.subr.bf16.mxu0 0
        %1995 = vmatpush1.bf16.xpose.msra.mxu0 0
        %1996 = vmatprep.mubr.bf16.mxu0 0
        %1997 = vmatmul.mubr.bf16.gmra.mrb[0].mxu0 %v1959
        %v1998 = vpop.f32.mrb[0].mxu0
        %v1999 = vadd.f32 0.0, %v1998
        %v2000 = vpop.f32.mrb[0].mxu0
        %v2001 = vpop.f32.mrb[0].mxu0
        %v2002 = vpop.f32.mrb[0].mxu0
        %2003 = vdwg.mxu0
        %v2004 = vmul.f32 %v1999, 0.25
        %v2005 = vadd.f32 %v2004, %v928
        %v2006 = vsel %vm931, %v2005, -inf
        %2007 = vmax.xlane.f32.xlu0 %v2006
        %v2008 = vpop.xlane.xlu0 %2007
        %v2009 = vsub.f32 %v2005, %v2008
        %v2010 = vmul.f32 %v2009, 1.442695
        %v2011 = vpow.pop %v2010
        %v2012 = vsel %vm931, %v2011, 0.0
        %2013 = vadd.xlane.f32.xlu0 %v2012
        %v2014 = vpop.xlane.xlu0 %2013
        %v2015 = vrcp.pop %v2014
        %v2016 = vmul.f32 %v2011, %v2015
        %v2017 = vpack.c.bf16 %v2016, %v2016
        %2018 = vrot.lane.b32.xlu0 %v1842, 16
        %v2019 = vpop.permute.xlu0 %2018
        %v2021 = vsel %vm931, %v2017, 0
        %v2024 = vsel %vm949, %v2019, 0
        %2026 = vmatprep.subr.bf16.mxu0 0
        %2027 = vmatpush1.bf16.msra.mxu0 %v2024
        %2028 = vmatprep.subr.bf16.mxu0 0
        %2029 = vmatpush1.bf16.msra.mxu0 0
        %2030 = vmatprep.subr.bf16.mxu0 0
        %2031 = vmatpush1.bf16.msra.mxu0 0
        %2032 = vmatprep.subr.bf16.mxu0 0
        %2033 = vmatpush1.bf16.msra.mxu0 0
        %2034 = vmatprep.subr.bf16.mxu0 0
        %2035 = vmatpush1.bf16.msra.mxu0 0
        %2036 = vmatprep.subr.bf16.mxu0 0
        %2037 = vmatpush1.bf16.msra.mxu0 0
        %2038 = vmatprep.subr.bf16.mxu0 0
        %2039 = vmatpush1.bf16.msra.mxu0 0
        %2040 = vmatprep.subr.bf16.mxu0 0
        %2041 = vmatpush1.bf16.msra.mxu0 0
        %2042 = vmatprep.subr.bf16.mxu0 0
        %2043 = vmatpush1.bf16.msra.mxu0 0
        %2044 = vmatprep.subr.bf16.mxu0 0
        %2045 = vmatpush1.bf16.msra.mxu0 0
        %2046 = vmatprep.subr.bf16.mxu0 0
        %2047 = vmatpush1.bf16.msra.mxu0 0
        %2048 = vmatprep.subr.bf16.mxu0 0
        %2049 = vmatpush1.bf16.msra.mxu0 0
        %2050 = vmatprep.subr.bf16.mxu0 0
        %2051 = vmatpush1.bf16.msra.mxu0 0
        %2052 = vmatprep.subr.bf16.mxu0 0
        %2053 = vmatpush1.bf16.msra.mxu0 0
        %2054 = vmatprep.subr.bf16.mxu0 0
        %2055 = vmatpush1.bf16.msra.mxu0 0
        %2056 = vmatprep.subr.bf16.mxu0 0
        %2057 = vmatpush1.bf16.msra.mxu0 0
        %2058 = vmatprep.mubr.bf16.mxu0 0
        %2059 = vmatmul.mubr.bf16.gmra.mrb[0].mxu0 %v2021
        %v2060 = vpop.f32.mrb[0].mxu0
        %v2061 = vadd.f32 0.0, %v2060
        %v2062 = vpop.f32.mrb[0].mxu0
        %v2063 = vpop.f32.mrb[0].mxu0
        %v2064 = vpop.f32.mrb[0].mxu0
        %2065 = vdwg.mxu0
        %v2066 = vpack.c.bf16 %v1838, %v1838
        %2067 = vrot.lane.b32.xlu0 %v1842, 96
        %v2068 = vpop.permute.xlu0 %2067
        %2069 = vrot.lane.b32.xlu0 %v1842, 48
        %v2070 = vpop.permute.xlu0 %2069
        %v2072 = vsel %vm876, %v2068, 0
        %v2075 = vsel %vm876, %v2070, 0
        %2077 = vmatprep.subr.bf16.mxu0 0
        %2078 = vmatpush1.bf16.xpose.msra.mxu0 %v2075
        %2079 = vmatprep.subr.bf16.mxu0 0
        %2080 = vmatpush1.bf16.xpose.msra.mxu0 0
        %2081 = vmatprep.subr.bf16.mxu0 0
        %2082 = vmatpush1.bf16.xpose.msra.mxu0 0
        %2083 = vmatprep.subr.bf16.mxu0 0
        %2084 = vmatpush1.bf16.xpose.msra.mxu0 0
        %2085 = vmatprep.subr.bf16.mxu0 0
        %2086 = vmatpush1.bf16.xpose.msra.mxu0 0
        %2087 = vmatprep.subr.bf16.mxu0 0
        %2088 = vmatpush1.bf16.xpose.msra.mxu0 0
        %2089 = vmatprep.subr.bf16.mxu0 0
        %2090 = vmatpush1.bf16.xpose.msra.mxu0 0
        %2091 = vmatprep.subr.bf16.mxu0 0
        %2092 = vmatpush1.bf16.xpose.msra.mxu0 0
        %2093 = vmatprep.subr.bf16.mxu0 0
        %2094 = vmatpush1.bf16.xpose.msra.mxu0 0
        %2095 = vmatprep.subr.bf16.mxu0 0
        %2096 = vmatpush1.bf16.xpose.msra.mxu0 0
        %2097 = vmatprep.subr.bf16.mxu0 0
        %2098 = vmatpush1.bf16.xpose.msra.mxu0 0
        %2099 = vmatprep.subr.bf16.mxu0 0
        %2100 = vmatpush1.bf16.xpose.msra.mxu0 0
        %2101 = vmatprep.subr.bf16.mxu0 0
        %2102 = vmatpush1.bf16.xpose.msra.mxu0 0
        %2103 = vmatprep.subr.bf16.mxu0 0
        %2104 = vmatpush1.bf16.xpose.msra.mxu0 0
        %2105 = vmatprep.subr.bf16.mxu0 0
        %2106 = vmatpush1.bf16.xpose.msra.mxu0 0
        %2107 = vmatprep.subr.bf16.mxu0 0
        %2108 = vmatpush1.bf16.xpose.msra.mxu0 0
        %2109 = vmatprep.mubr.bf16.mxu0 0
        %2110 = vmatmul.mubr.bf16.gmra.mrb[0].mxu0 %v2072
        %v2111 = vpop.f32.mrb[0].mxu0
        %v2112 = vadd.f32 0.0, %v2111
        %v2113 = vpop.f32.mrb[0].mxu0
        %v2114 = vpop.f32.mrb[0].mxu0
        %v2115 = vpop.f32.mrb[0].mxu0
        %2116 = vdwg.mxu0
        %v2117 = vmul.f32 %v2112, 0.25
        %v2118 = vadd.f32 %v2117, %v928
        %v2119 = vsel %vm931, %v2118, -inf
        %2120 = vmax.xlane.f32.xlu0 %v2119
        %v2121 = vpop.xlane.xlu0 %2120
        %v2122 = vsub.f32 %v2118, %v2121
        %v2123 = vmul.f32 %v2122, 1.442695
        %v2124 = vpow.pop %v2123
        %v2125 = vsel %vm931, %v2124, 0.0
        %2126 = vadd.xlane.f32.xlu0 %v2125
        %v2127 = vpop.xlane.xlu0 %2126
        %v2128 = vrcp.pop %v2127
        %v2129 = vmul.f32 %v2124, %v2128
        %v2130 = vpack.c.bf16 %v2129, %v2129
        %v2132 = vsel %vm931, %v2130, 0
        %v2135 = vsel %vm949, %v2066, 0
        %2137 = vmatprep.subr.bf16.mxu0 0
        %2138 = vmatpush1.bf16.msra.mxu0 %v2135
        %2139 = vmatprep.subr.bf16.mxu0 0
        %2140 = vmatpush1.bf16.msra.mxu0 0
        %2141 = vmatprep.subr.bf16.mxu0 0
        %2142 = vmatpush1.bf16.msra.mxu0 0
        %2143 = vmatprep.subr.bf16.mxu0 0
        %2144 = vmatpush1.bf16.msra.mxu0 0
        %2145 = vmatprep.subr.bf16.mxu0 0
        %2146 = vmatpush1.bf16.msra.mxu0 0
        %2147 = vmatprep.subr.bf16.mxu0 0
        %2148 = vmatpush1.bf16.msra.mxu0 0
        %2149 = vmatprep.subr.bf16.mxu0 0
        %2150 = vmatpush1.bf16.msra.mxu0 0
        %2151 = vmatprep.subr.bf16.mxu0 0
        %2152 = vmatpush1.bf16.msra.mxu0 0
        %2153 = vmatprep.subr.bf16.mxu0 0
        %2154 = vmatpush1.bf16.msra.mxu0 0
        %2155 = vmatprep.subr.bf16.mxu0 0
        %2156 = vmatpush1.bf16.msra.mxu0 0
        %2157 = vmatprep.subr.bf16.mxu0 0
        %2158 = vmatpush1.bf16.msra.mxu0 0
        %2159 = vmatprep.subr.bf16.mxu0 0
        %2160 = vmatpush1.bf16.msra.mxu0 0
        %2161 = vmatprep.subr.bf16.mxu0 0
        %2162 = vmatpush1.bf16.msra.mxu0 0
        %2163 = vmatprep.subr.bf16.mxu0 0
        %2164 = vmatpush1.bf16.msra.mxu0 0
        %2165 = vmatprep.subr.bf16.mxu0 0
        %2166 = vmatpush1.bf16.msra.mxu0 0
        %2167 = vmatprep.subr.bf16.mxu0 0
        %2168 = vmatpush1.bf16.msra.mxu0 0
        %2169 = vmatprep.mubr.bf16.mxu0 0
        %2170 = vmatmul.mubr.bf16.gmra.mrb[0].mxu0 %v2132
        %v2171 = vpop.f32.mrb[0].mxu0
        %v2172 = vadd.f32 0.0, %v2171
        %v2173 = vpop.f32.mrb[0].mxu0
        %v2174 = vpop.f32.mrb[0].mxu0
        %v2175 = vpop.f32.mrb[0].mxu0
        %2176 = vdwg.mxu0
        %2178 = vrot.lane.b32.xlu0 %v2061, 16
        %v2179 = vpop.permute.xlu0 %2178
        %2182 = vrot.lane.b32.xlu0 %v2172, 32
        %v2183 = vpop.permute.xlu0 %2182
        %v2185 = vsel %vm876, %v1949, %v2179
        %v2186 = vsel %vm1225, %v2185, %v2183
        %v2187 = vpack.c.bf16 %v2186, %v2186
        %s2188 = scalar_lea.vmem %s7, 24
        %v2189 = vld [vmem:[%s2188] sm:$0xf]
        %v2190 = vld [vmem:[%s2188 + $0x4] sm:$0xf]
        %v2191 = vld [vmem:[%s2188 + $0x8] sm:$0xf]
        %v2192 = vld [vmem:[%s2188 + $0xc] sm:$0xf]
        %v2193 = vld [vmem:[%s2188 + $0x10] sm:$0xf]
        %v2194 = vld [vmem:[%s2188 + $0x14] sm:$0xf]
        %s2195 = scalar_lea.vmem %s8, 1
        %v2196 = vld [vmem:[%s2195] sm:$0x1]
        %v2198 = vlaneseq
        %v2199 = vshrl.u32 %v2198, 7
        %v2200 = vsub.s32 0, %v2199
        %v2201 = vrot.slane %v2196, %v2200
        %v2209 = vunpack.c.l.b16 %v2189
        %v2210 = vunpack.c.l.b16 %v2190
        %v2211 = vunpack.c.l.b16 %v2191
        %v2212 = vunpack.c.l.b16 %v2192
        %v2213 = vunpack.c.l.b16 %v2193
        %v2214 = vunpack.c.l.b16 %v2194
        %v2215 = vpack.c.b16 %v2210, %v2209
        %v2216 = vpack.c.b16 %v2212, %v2211
        %v2217 = vpack.c.b16 %v2214, %v2213
        %v2222 = vsel %vm1259, %v2187, 0
        %2224 = vmatprep.subr.bf16.mxu0 0
        %2225 = vmatpush1.bf16.msra.mxu0 %v2215
        %2226 = vmatprep.subr.bf16.mxu0 0
        %2227 = vmatpush1.bf16.msra.mxu0 %v2216
        %2228 = vmatprep.subr.bf16.mxu0 0
        %2229 = vmatpush1.bf16.msra.mxu0 %v2217
        %2230 = vmatprep.subr.bf16.mxu0 0
        %2231 = vmatpush1.bf16.msra.mxu0 0
        %2232 = vmatprep.subr.bf16.mxu0 0
        %2233 = vmatpush1.bf16.msra.mxu0 0
        %2234 = vmatprep.subr.bf16.mxu0 0
        %2235 = vmatpush1.bf16.msra.mxu0 0
        %2236 = vmatprep.subr.bf16.mxu0 0
        %2237 = vmatpush1.bf16.msra.mxu0 0
        %2238 = vmatprep.subr.bf16.mxu0 0
        %2239 = vmatpush1.bf16.msra.mxu0 0
        %2240 = vmatprep.subr.bf16.mxu0 0
        %2241 = vmatpush1.bf16.msra.mxu0 0
        %2242 = vmatprep.subr.bf16.mxu0 0
        %2243 = vmatpush1.bf16.msra.mxu0 0
        %2244 = vmatprep.subr.bf16.mxu0 0
        %2245 = vmatpush1.bf16.msra.mxu0 0
        %2246 = vmatprep.subr.bf16.mxu0 0
        %2247 = vmatpush1.bf16.msra.mxu0 0
        %2248 = vmatprep.subr.bf16.mxu0 0
        %2249 = vmatpush1.bf16.msra.mxu0 0
        %2250 = vmatprep.subr.bf16.mxu0 0
        %2251 = vmatpush1.bf16.msra.mxu0 0
        %2252 = vmatprep.subr.bf16.mxu0 0
        %2253 = vmatpush1.bf16.msra.mxu0 0
        %2254 = vmatprep.subr.bf16.mxu0 0
        %2255 = vmatpush1.bf16.msra.mxu0 0
        %2256 = vmatprep.mubr.bf16.mxu0 0
        %2257 = vmatmul.mubr.bf16.gmra.mrb[0].mxu0 %v2222
        %v2258 = vpop.f32.mrb[0].mxu0
        %v2259 = vadd.f32 %v2201, %v2258
        %v2260 = vpop.f32.mrb[0].mxu0
        %v2261 = vpop.f32.mrb[0].mxu0
        %v2262 = vpop.f32.mrb[0].mxu0
        %2263 = vdwg.mxu0
        %v2264 = vadd.f32 %v1689, %v2259
        %s2265 = scalar_lea.vmem %s9, 1
        %v2266 = vld [vmem:[%s2265] sm:$0x1]
        %s2267 = scalar_lea.vmem %s10, 1
        %v2268 = vld [vmem:[%s2267] sm:$0x1]
        %2269 = vadd.xlane.f32.xlu0 %v2264
        %v2270 = vpop.xlane.xlu0 %2269
        %v2271 = vmul.f32 %v2270, 0.020833334
        %v2272 = vsub.f32 %v2264, %v2271
        %v2273 = vmul.f32 %v2272, %v604
        %v2274 = vmul.f32 %v2273, %v2273
        %2275 = vadd.xlane.f32.xlu0 %v2274
        %v2276 = vpop.xlane.xlu0 %2275
        %v2277 = vmul.f32 %v2276, 0.020833334
        %v2278 = vadd.f32 %v2277, 1e-05
        %v2279 = vrsqrt.pop %v2278
        %v2280 = vmul.f32 %v2273, %v2279
        %v2282 = vlaneseq
        %v2283 = vshrl.u32 %v2282, 7
        %v2284 = vsub.s32 0, %v2283
        %v2285 = vrot.slane %v2266, %v2284
        %v2287 = vmul.f32 %v2280, %v2285
        %v2289 = vlaneseq
        %v2290 = vshrl.u32 %v2289, 7
        %v2291 = vsub.s32 0, %v2290
        %v2292 = vrot.slane %v2268, %v2291
        %v2294 = vadd.f32 %v2287, %v2292
        %v2295 = vpack.c.bf16 %v2294, %v2294
        %s2296 = scalar_lea.vmem %s11, 128
        %v2297 = vld [vmem:[%s2296] sm:$0xff]
        %v2298 = vld [vmem:[%s2296 + $0x8] sm:$0xff]
        %v2299 = vld [vmem:[%s2296 + $0x10] sm:$0xff]
        %v2300 = vld [vmem:[%s2296 + $0x18] sm:$0xff]
        %v2301 = vld [vmem:[%s2296 + $0x20] sm:$0xff]
        %v2302 = vld [vmem:[%s2296 + $0x28] sm:$0xff]
        %v2303 = vld [vmem:[%s2296 + $0x30] sm:$0xff]
        %v2304 = vld [vmem:[%s2296 + $0x38] sm:$0xff]
        %v2305 = vld [vmem:[%s2296 + $0x40] sm:$0xff]
        %v2306 = vld [vmem:[%s2296 + $0x48] sm:$0xff]
        %v2307 = vld [vmem:[%s2296 + $0x50] sm:$0xff]
        %v2308 = vld [vmem:[%s2296 + $0x58] sm:$0xff]
        %v2309 = vld [vmem:[%s2296 + $0x60] sm:$0xff]
        %v2310 = vld [vmem:[%s2296 + $0x68] sm:$0xff]
        %v2311 = vld [vmem:[%s2296 + $0x70] sm:$0xff]
        %v2312 = vld [vmem:[%s2296 + $0x78] sm:$0xff]
        %s2313 = scalar_lea.vmem %s12, 2
        %v2314 = vld [vmem:[%s2313] sm:$0x3]
        %v2316 = vlaneseq
        %v2317 = vshrl.u32 %v2316, 7
        %v2318 = vsub.s32 0, %v2317
        %v2319 = vrot.slane %v2314, %v2318
        %v2320 = vlaneseq
        %v2321 = vshrl.u32 %v2320, 7
        %v2322 = vsub.s32 1, %v2321
        %v2323 = vrot.slane %v2314, %v2322
        %v2342 = vunpack.c.l.b16 %v2297
        %v2343 = vunpack.c.h.b16 %v2297
        %v2344 = vunpack.c.l.b16 %v2298
        %v2345 = vunpack.c.h.b16 %v2298
        %v2346 = vunpack.c.l.b16 %v2299
        %v2347 = vunpack.c.h.b16 %v2299
        %v2348 = vunpack.c.l.b16 %v2300
        %v2349 = vunpack.c.h.b16 %v2300
        %v2350 = vunpack.c.l.b16 %v2301
        %v2351 = vunpack.c.h.b16 %v2301
        %v2352 = vunpack.c.l.b16 %v2302
        %v2353 = vunpack.c.h.b16 %v2302
        %v2354 = vunpack.c.l.b16 %v2303
        %v2355 = vunpack.c.h.b16 %v2303
        %v2356 = vunpack.c.l.b16 %v2304
        %v2357 = vunpack.c.h.b16 %v2304
        %v2358 = vunpack.c.l.b16 %v2305
        %v2359 = vunpack.c.h.b16 %v2305
        %v2360 = vunpack.c.l.b16 %v2306
        %v2361 = vunpack.c.h.b16 %v2306
        %v2362 = vunpack.c.l.b16 %v2307
        %v2363 = vunpack.c.h.b16 %v2307
        %v2364 = vunpack.c.l.b16 %v2308
        %v2365 = vunpack.c.h.b16 %v2308
        %v2366 = vunpack.c.l.b16 %v2309
        %v2367 = vunpack.c.h.b16 %v2309
        %v2368 = vunpack.c.l.b16 %v2310
        %v2369 = vunpack.c.h.b16 %v2310
        %v2370 = vunpack.c.l.b16 %v2311
        %v2371 = vunpack.c.h.b16 %v2311
        %v2372 = vunpack.c.l.b16 %v2312
        %v2373 = vunpack.c.h.b16 %v2312
        %v2374 = vpack.c.b16 %v2344, %v2342
        %v2375 = vpack.c.b16 %v2345, %v2343
        %v2376 = vpack.c.b16 %v2348, %v2346
        %v2377 = vpack.c.b16 %v2349, %v2347
        %v2378 = vpack.c.b16 %v2352, %v2350
        %v2379 = vpack.c.b16 %v2353, %v2351
        %v2380 = vpack.c.b16 %v2356, %v2354
        %v2381 = vpack.c.b16 %v2357, %v2355
        %v2382 = vpack.c.b16 %v2360, %v2358
        %v2383 = vpack.c.b16 %v2361, %v2359
        %v2384 = vpack.c.b16 %v2364, %v2362
        %v2385 = vpack.c.b16 %v2365, %v2363
        %v2386 = vpack.c.b16 %v2368, %v2366
        %v2387 = vpack.c.b16 %v2369, %v2367
        %v2388 = vpack.c.b16 %v2372, %v2370
        %v2389 = vpack.c.b16 %v2373, %v2371
        %2406 = vmatprep.subr.bf16.mxu0 %v2375
        %2407 = vmatpush1.bf16.msra.mxu0 %v2374
        %2408 = vmatprep.subr.bf16.mxu0 %v2377
        %2409 = vmatpush1.bf16.msra.mxu0 %v2376
        %2410 = vmatprep.subr.bf16.mxu0 %v2379
        %2411 = vmatpush1.bf16.msra.mxu0 %v2378
        %2412 = vmatprep.subr.bf16.mxu0 %v2381
        %2413 = vmatpush1.bf16.msra.mxu0 %v2380
        %2414 = vmatprep.subr.bf16.mxu0 %v2383
        %2415 = vmatpush1.bf16.msra.mxu0 %v2382
        %2416 = vmatprep.subr.bf16.mxu0 %v2385
        %2417 = vmatpush1.bf16.msra.mxu0 %v2384
        %2418 = vmatprep.subr.bf16.mxu0 %v2387
        %2419 = vmatpush1.bf16.msra.mxu0 %v2386
        %2420 = vmatprep.subr.bf16.mxu0 %v2389
        %2421 = vmatpush1.bf16.msra.mxu0 %v2388
        %2422 = vmatprep.subr.bf16.mxu0 0
        %2423 = vmatpush1.bf16.msra.mxu0 0
        %2424 = vmatprep.subr.bf16.mxu0 0
        %2425 = vmatpush1.bf16.msra.mxu0 0
        %2426 = vmatprep.subr.bf16.mxu0 0
        %2427 = vmatpush1.bf16.msra.mxu0 0
        %2428 = vmatprep.subr.bf16.mxu0 0
        %2429 = vmatpush1.bf16.msra.mxu0 0
        %2430 = vmatprep.subr.bf16.mxu0 0
        %2431 = vmatpush1.bf16.msra.mxu0 0
        %2432 = vmatprep.subr.bf16.mxu0 0
        %2433 = vmatpush1.bf16.msra.mxu0 0
        %2434 = vmatprep.subr.bf16.mxu0 0
        %2435 = vmatpush1.bf16.msra.mxu0 0
        %2436 = vmatprep.subr.bf16.mxu0 0
        %2437 = vmatpush1.bf16.msra.mxu0 0
        %2438 = vmatprep.mubr.bf16.mxu0 0
        %2439 = vmatmul.mubr.bf16.gmra.mrb[0].mxu0 %v2295
        %v2440 = vpop.f32.mrb[0].mxu0
        %v2441 = vadd.f32 %v2319, %v2440
        %v2442 = vpop.f32.mrb[0].mxu0
        %v2443 = vadd.f32 %v2323, %v2442
        %v2444 = vpop.f32.mrb[0].mxu0
        %v2445 = vpop.f32.mrb[0].mxu0
        %2446 = vdwg.mxu0
        %v2447 = vmax.f32 %v2441, 0.0
        %v2448 = vmax.f32 %v2443, 0.0
        %v2449 = vpack.c.bf16 %v2447, %v2447
        %v2450 = vpack.c.bf16 %v2448, %v2448
        %s2451 = scalar_lea.vmem [#allocation2], 128
        %v2452 = vld [vmem:[%s2451] sm:$0xf]
        %v2453 = vld [vmem:[%s2451 + $0x4] sm:$0xf]
        %v2454 = vld [vmem:[%s2451 + $0x8] sm:$0xf]
        %v2455 = vld [vmem:[%s2451 + $0xc] sm:$0xf]
        %v2456 = vld [vmem:[%s2451 + $0x10] sm:$0xf]
        %v2457 = vld [vmem:[%s2451 + $0x14] sm:$0xf]
        %v2458 = vld [vmem:[%s2451 + $0x18] sm:$0xf]
        %v2459 = vld [vmem:[%s2451 + $0x1c] sm:$0xf]
        %v2460 = vld [vmem:[%s2451 + $0x20] sm:$0xf]
        %v2461 = vld [vmem:[%s2451 + $0x24] sm:$0xf]
        %v2462 = vld [vmem:[%s2451 + $0x28] sm:$0xf]
        %v2463 = vld [vmem:[%s2451 + $0x2c] sm:$0xf]
        %v2464 = vld [vmem:[%s2451 + $0x30] sm:$0xf]
        %v2465 = vld [vmem:[%s2451 + $0x34] sm:$0xf]
        %v2466 = vld [vmem:[%s2451 + $0x38] sm:$0xf]
        %v2467 = vld [vmem:[%s2451 + $0x3c] sm:$0xf]
        %v2468 = vld [vmem:[%s2451 + $0x40] sm:$0xf]
        %v2469 = vld [vmem:[%s2451 + $0x44] sm:$0xf]
        %v2470 = vld [vmem:[%s2451 + $0x48] sm:$0xf]
        %v2471 = vld [vmem:[%s2451 + $0x4c] sm:$0xf]
        %v2472 = vld [vmem:[%s2451 + $0x50] sm:$0xf]
        %v2473 = vld [vmem:[%s2451 + $0x54] sm:$0xf]
        %v2474 = vld [vmem:[%s2451 + $0x58] sm:$0xf]
        %v2475 = vld [vmem:[%s2451 + $0x5c] sm:$0xf]
        %v2476 = vld [vmem:[%s2451 + $0x60] sm:$0xf]
        %v2477 = vld [vmem:[%s2451 + $0x64] sm:$0xf]
        %v2478 = vld [vmem:[%s2451 + $0x68] sm:$0xf]
        %v2479 = vld [vmem:[%s2451 + $0x6c] sm:$0xf]
        %v2480 = vld [vmem:[%s2451 + $0x70] sm:$0xf]
        %v2481 = vld [vmem:[%s2451 + $0x74] sm:$0xf]
        %v2482 = vld [vmem:[%s2451 + $0x78] sm:$0xf]
        %v2483 = vld [vmem:[%s2451 + $0x7c] sm:$0xf]
        %s2484 = scalar_lea.vmem %s14, 1
        %v2485 = vld [vmem:[%s2484] sm:$0x1]
        %v2487 = vlaneseq
        %v2488 = vshrl.u32 %v2487, 7
        %v2489 = vsub.s32 0, %v2488
        %v2490 = vrot.slane %v2485, %v2489
        %v2524 = vunpack.c.l.b16 %v2452
        %v2525 = vunpack.c.l.b16 %v2453
        %v2526 = vunpack.c.l.b16 %v2454
        %v2527 = vunpack.c.l.b16 %v2455
        %v2528 = vunpack.c.l.b16 %v2456
        %v2529 = vunpack.c.l.b16 %v2457
        %v2530 = vunpack.c.l.b16 %v2458
        %v2531 = vunpack.c.l.b16 %v2459
        %v2532 = vunpack.c.l.b16 %v2460
        %v2533 = vunpack.c.l.b16 %v2461
        %v2534 = vunpack.c.l.b16 %v2462
        %v2535 = vunpack.c.l.b16 %v2463
        %v2536 = vunpack.c.l.b16 %v2464
        %v2537 = vunpack.c.l.b16 %v2465
        %v2538 = vunpack.c.l.b16 %v2466
        %v2539 = vunpack.c.l.b16 %v2467
        %v2540 = vunpack.c.l.b16 %v2468
        %v2541 = vunpack.c.l.b16 %v2469
        %v2542 = vunpack.c.l.b16 %v2470
        %v2543 = vunpack.c.l.b16 %v2471
        %v2544 = vunpack.c.l.b16 %v2472
        %v2545 = vunpack.c.l.b16 %v2473
        %v2546 = vunpack.c.l.b16 %v2474
        %v2547 = vunpack.c.l.b16 %v2475
        %v2548 = vunpack.c.l.b16 %v2476
        %v2549 = vunpack.c.l.b16 %v2477
        %v2550 = vunpack.c.l.b16 %v2478
        %v2551 = vunpack.c.l.b16 %v2479
        %v2552 = vunpack.c.l.b16 %v2480
        %v2553 = vunpack.c.l.b16 %v2481
        %v2554 = vunpack.c.l.b16 %v2482
        %v2555 = vunpack.c.l.b16 %v2483
        %v2556 = vpack.c.b16 %v2525, %v2524
        %v2557 = vpack.c.b16 %v2527, %v2526
        %v2558 = vpack.c.b16 %v2529, %v2528
        %v2559 = vpack.c.b16 %v2531, %v2530
        %v2560 = vpack.c.b16 %v2533, %v2532
        %v2561 = vpack.c.b16 %v2535, %v2534
        %v2562 = vpack.c.b16 %v2537, %v2536
        %v2563 = vpack.c.b16 %v2539, %v2538
        %v2564 = vpack.c.b16 %v2541, %v2540
        %v2565 = vpack.c.b16 %v2543, %v2542
        %v2566 = vpack.c.b16 %v2545, %v2544
        %v2567 = vpack.c.b16 %v2547, %v2546
        %v2568 = vpack.c.b16 %v2549, %v2548
        %v2569 = vpack.c.b16 %v2551, %v2550
        %v2570 = vpack.c.b16 %v2553, %v2552
        %v2571 = vpack.c.b16 %v2555, %v2554
        %2588 = vmatprep.subr.bf16.mxu0 0
        %2589 = vmatpush1.bf16.msra.mxu0 %v2556
        %2590 = vmatprep.subr.bf16.mxu0 0
        %2591 = vmatpush1.bf16.msra.mxu0 %v2557
        %2592 = vmatprep.subr.bf16.mxu0 0
        %2593 = vmatpush1.bf16.msra.mxu0 %v2558
        %2594 = vmatprep.subr.bf16.mxu0 0
        %2595 = vmatpush1.bf16.msra.mxu0 %v2559
        %2596 = vmatprep.subr.bf16.mxu0 0
        %2597 = vmatpush1.bf16.msra.mxu0 %v2560
        %2598 = vmatprep.subr.bf16.mxu0 0
        %2599 = vmatpush1.bf16.msra.mxu0 %v2561
        %2600 = vmatprep.subr.bf16.mxu0 0
        %2601 = vmatpush1.bf16.msra.mxu0 %v2562
        %2602 = vmatprep.subr.bf16.mxu0 0
        %2603 = vmatpush1.bf16.msra.mxu0 %v2563
        %2604 = vmatprep.subr.bf16.mxu0 0
        %2605 = vmatpush1.bf16.msra.mxu0 %v2564
        %2606 = vmatprep.subr.bf16.mxu0 0
        %2607 = vmatpush1.bf16.msra.mxu0 %v2565
        %2608 = vmatprep.subr.bf16.mxu0 0
        %2609 = vmatpush1.bf16.msra.mxu0 %v2566
        %2610 = vmatprep.subr.bf16.mxu0 0
        %2611 = vmatpush1.bf16.msra.mxu0 %v2567
        %2612 = vmatprep.subr.bf16.mxu0 0
        %2613 = vmatpush1.bf16.msra.mxu0 %v2568
        %2614 = vmatprep.subr.bf16.mxu0 0
        %2615 = vmatpush1.bf16.msra.mxu0 %v2569
        %2616 = vmatprep.subr.bf16.mxu0 0
        %2617 = vmatpush1.bf16.msra.mxu0 %v2570
        %2618 = vmatprep.subr.bf16.mxu0 0
        %2619 = vmatpush1.bf16.msra.mxu0 %v2571
        %2620 = vmatprep.mubr.bf16.mxu0 %v2450
        %2621 = vmatmul.mubr.bf16.gmra.mrb[0].mxu0 %v2449
        %v2622 = vpop.f32.mrb[0].mxu0
        %v2623 = vadd.f32 %v2490, %v2622
        %v2624 = vpop.f32.mrb[0].mxu0
        %v2625 = vpop.f32.mrb[0].mxu0
        %v2626 = vpop.f32.mrb[0].mxu0
        %2627 = vdwg.mxu0
        %v2628 = vadd.f32 %v2294, %v2623
        %s2629 = scalar_lea.vmem %s15, 1
        %v2630 = vld [vmem:[%s2629] sm:$0x1]
        %s2631 = scalar_lea.vmem %s16, 1
        %v2632 = vld [vmem:[%s2631] sm:$0x1]
        %2633 = vadd.xlane.f32.xlu0 %v2628
        %v2634 = vpop.xlane.xlu0 %2633
        %v2635 = vmul.f32 %v2634, 0.020833334
        %v2636 = vsub.f32 %v2628, %v2635
        %v2637 = vmul.f32 %v2636, %v604
        %v2638 = vmul.f32 %v2637, %v2637
        %2639 = vadd.xlane.f32.xlu0 %v2638
        %v2640 = vpop.xlane.xlu0 %2639
        %v2641 = vmul.f32 %v2640, 0.020833334
        %v2642 = vadd.f32 %v2641, 1e-05
        %v2643 = vrsqrt.pop %v2642
        %v2644 = vmul.f32 %v2637, %v2643
        %v2646 = vlaneseq
        %v2647 = vshrl.u32 %v2646, 7
        %v2648 = vsub.s32 0, %v2647
        %v2649 = vrot.slane %v2630, %v2648
        %v2651 = vmul.f32 %v2644, %v2649
        %v2653 = vlaneseq
        %v2654 = vshrl.u32 %v2653, 7
        %v2655 = vsub.s32 0, %v2654
        %v2656 = vrot.slane %v2632, %v2655
        %v2658 = vadd.f32 %v2651, %v2656
        %v2659 = vld [vmem:[%s17] sm:$0x1]
        %v2661 = vlaneseq
        %v2662 = vshrl.u32 %v2661, 7
        %v2663 = vsub.s32 0, %v2662
        %v2664 = vrot.slane %v2659, %v2663
        %v2666 = vmul.f32 %v2658, %v2664
        %2667 = vadd.xlane.f32.xlu0 %v2666
        %v2668 = vpop.xlane.xlu0 %2667
        %v2669 = vrot.slane %v2668, 4
        %v2670 = vmax.f32 %v2668, %v2669
        %v2671 = vrot.slane %v2670, 2
        %v2672 = vmax.f32 %v2670, %v2671
        %v2673 = vrot.slane %v2672, 1
        %v2674 = vmax.f32 %v2672, %v2673
        %v2675 = vsub.f32 %v2668, %v2674
        %v2676 = vmul.f32 %v2675, 1.442695
        %v2677 = vpow.pop %v2676
        %v2678 = vrot.slane %v2677, 4
        %v2679 = vadd.f32 %v2677, %v2678
        %v2680 = vrot.slane %v2679, 2
        %v2681 = vadd.f32 %v2679, %v2680
        %v2682 = vrot.slane %v2681, 1
        %v2683 = vadd.f32 %v2681, %v2682
        %v2684 = vrcp.pop %v2683
        %v2685 = vmul.f32 %v2677, %v2684
        %v2686 = vmul.f32 %v2658, %v2685
        %v2687 = vrot.slane %v2686, 4
        %v2688 = vadd.f32 %v2686, %v2687
        %v2689 = vrot.slane %v2688, 2
        %v2690 = vadd.f32 %v2688, %v2689
        %v2691 = vrot.slane %v2690, 1
        %v2692 = vadd.f32 %v2690, %v2691
        %2693 = vst [vmem:[%s591] sm:$0x1] %v2692
        %s2694 = sand.u32 %s429, 1
        %s2695 = scalar_lea.sflag [#allocation4], %s2694
        %s2696 = sand.u32 %s429, 1
        %s2697 = scalar_lea.vmem [#allocation5], %s2696
        // Predicated region
        $region97: #{tpu_custom_call.1} parent=91 // pred_check
          %p2698 = pneg %p439
        $region98: #{tpu_custom_call.1} parent=91 // pred_check_branch
          %2700 = sbr.rel (%p2698) target = $region100
        $region99: #{tpu_custom_call.1} parent=91 // pred_region
          %s2702 = ssub.s32 16, 16
          %2703 = vsyncadd %s2695, %s2702
          %s2704 = smul.addr %s33, 16
          %s2705 = scalar_lea.hbm %s18, %s2704
          %s2707 = sshll.u32 %s2697, 4
          %s2708 = int_to_ptr.vmem [resolvable:$true] %s2707
          %2710 = dma.vmem_to_hbm [thread:$0]  %s2708, 16, %s2705, %s2695
        $region100: #{tpu_custom_call.1} parent=91 // pred_fallthru
          _
      $region92: #{tpu_custom_call.1} parent=5 // pred_fallthru
        _
      %p2711 = scmp.le.s32.totalorder 2, %s28
      // Predicated region
      $region101: #{tpu_custom_call.1} parent=5 // pred_check
        %p2712 = pneg %p2711
      $region102: #{tpu_custom_call.1} parent=5 // pred_check_branch
        %2714 = sbr.rel (%p2712) target = $region104
      $region103: #{tpu_custom_call.1} parent=5 // pred_region
        %s2715 = ssub.s32 %s28, 2
        // Predicated region
        $region105: #{tpu_custom_call.1} parent=103 // pred_check
          %p2716 = pneg %p445
        $region106: #{tpu_custom_call.1} parent=103 // pred_check_branch
          %2718 = sbr.rel (%p2716) target = $region108
        $region107: #{tpu_custom_call.1} parent=103 // pred_region
          %s2719 = sand.u32 %s430, 1
          %s2720 = scalar_lea.sflag [#allocation4], %s2719
          %s2721 = sand.u32 %s430, 1
          %s2722 = scalar_lea.vmem [#allocation5], %s2721
          %2723 = dma.done %s2720, 16
        $region108: #{tpu_custom_call.1} parent=103 // pred_fallthru
          _
      $region104: #{tpu_custom_call.1} parent=5 // pred_fallthru
        _
    $region6: #{tpu_custom_call.1} parent=1 // loop_footer
      %s32 = sadd.s32 1, %s28
    $region7: #{tpu_custom_call.1} parent=1 // loop_footer_branch
      %27 = sbr.rel target = $region3
    $region8: #{tpu_custom_call.1} parent=1 // loop_exit
      _
    %2724 = vsyncpa [#allocation3], 1
    %s2725 = scalar_lea.sflag [#allocation3], 1
    %2726 = vsyncpa %s2725, 1
    %2727 = vsyncpa [#allocation4], 1
    %s2728 = scalar_lea.sflag [#allocation4], 1
    %2729 = vsyncpa %s2728, 1

</llo_original>
